<compile_context>
chip_gen: v5e
topology: v5e:2x2
jax: 0.10.0
libtpu: 0.0.40
codegen_flags: <defaults>
</compile_context>

<pallas_src>
import functools

import jax
import jax.numpy as jnp
from jax import lax
from jax.experimental import pallas as pl
from jax.experimental.pallas import tpu as pltpu


def _round_up(v, m):
    return ((v + m - 1) // m) * m


def _spmotif_kernel(a_ref, x_ref, w_emb_ref, b_emb_ref, w_le_ref, b_le_ref,
                    w_m1_ref, b_m1_ref, w_m2_ref, b_m2_ref, probs_ref,
                    *, num_layers, num_nodes, hidden_p, num_classes):
    """One block of gb graphs per grid step: encoder -> pool -> MLP -> prob head."""
    f32 = jnp.float32
    bf16 = jnp.bfloat16

    a_blk = a_ref[...]                               # (GN, GN) bf16 block-diag adjacency
    x = x_ref[...]                                   # (GN, Fp) bf16 stacked node rows
    gn = x.shape[0]
    n = num_nodes
    gb = gn // n
    hp = hidden_p

    # Weighted in-degree = row-sum of the block-diagonal adjacency (f32).
    deg = jnp.sum(a_blk.astype(f32), axis=-1, keepdims=True)          # (GN, 1)
    # Hoisted lane-broadcast: re-used by every layer (broadcast_in_dim is not CSE'd).
    deg_b = jnp.broadcast_to(deg, (gn, hp))                            # (GN, Hp)

    # Node embedding: one MXU matmul over all GN stacked node rows.
    h = (jnp.dot(x, w_emb_ref[...], preferred_element_type=f32)
         + b_emb_ref[...])                                             # (GN, Hp) f32

    # LEConv layers (static unroll).
    for l in range(num_layers):
        # Packed projection: one (GN, Hp) @ (Hp, 3Hp) matmul gives lin1|lin2|lin3.
        proj = (jnp.dot(h.astype(bf16), w_le_ref[l],
                        preferred_element_type=f32) + b_le_ref[l])     # (GN, 3Hp)
        h1 = proj[:, 0 * hp:1 * hp]          # lin1(h) + b1
        h2 = proj[:, 1 * hp:2 * hp]          # lin2(h)         (no bias)
        h3 = proj[:, 2 * hp:3 * hp]          # lin3(h) + b3

        # Block-diagonal neighborhood aggregation: single full-width MXU matmul.
        agg = jnp.dot(a_blk, h1.astype(bf16), preferred_element_type=f32)
        h = jnp.maximum(agg - deg_b * h2 + h3, 0.0)                    # (GN, Hp) f32

    # Global mean pool per graph (f32).
    g = jnp.sum(h.reshape(gb, n, hp), axis=1) * (1.0 / n)              # (gb, Hp)

    # MLP head once per block of gb graphs.
    z = jnp.maximum(
        jnp.dot(g.astype(bf16), w_m1_ref[...], preferred_element_type=f32)
        + b_m1_ref[...], 0.0)                                          # (gb, Mp)
    logits = (jnp.dot(z.astype(bf16), w_m2_ref[...], preferred_element_type=f32)
              + b_m2_ref[...])                                         # (gb, Cp)

    cp = logits.shape[-1]
    lane = lax.broadcasted_iota(jnp.int32, (gb, cp), 1)

    if num_classes == 1:
        # sigmoid path: probs = [1 - p, p] in lanes 0/1, zeros in padded lanes.
        p = 1.0 / (1.0 + jnp.exp(-logits[:, 0:1]))                     # (gb, 1)
        probs_ref[...] = jnp.where(lane == 0, 1.0 - p,
                                   jnp.where(lane == 1, p, 0.0))
    else:
        # Masked softmax over the real class lanes only (padded lanes -> prob 0).
        valid = lane < num_classes
        lm = jnp.where(valid, logits, jnp.full_like(logits, -1e30))
        m = jnp.max(lm, axis=-1, keepdims=True)
        e = jnp.where(valid, jnp.exp(lm - m), 0.0)
        denom = jnp.sum(e, axis=-1, keepdims=True)
        probs_ref[...] = e * pl.reciprocal(denom, approx=False)


def spmotif_forward(adj, x, params, *, graphs_per_step=16):
    """adj: [B, N, N] dense weighted adjacency, x: [B, N, F] -> probs [B, C]."""
    B, N, F = x.shape
    assert adj.shape == (B, N, N)
    gb = min(graphs_per_step, B)
    assert B % gb == 0, "batch must be divisible by graphs_per_step"
    assert gb % 8 == 0 or gb == B, "graphs_per_step must be a multiple of 8"
    assert N % 8 == 0, "node count per graph must be a multiple of 8"
    # TODO(synk): variable per-graph node counts (PyG `data.batch`) would need a
    # node-validity mask before the mean pool; here every graph has N nodes.

    H = params["w_emb"].shape[1]
    M = params["w_m1"].shape[1]
    C = params["w_m2"].shape[1]
    L = params["w1"].shape[0]

    LANE = 128
    SUB = 16                          # bf16 sublane tile
    Fp = _round_up(F, SUB)            # tiny pad only (NOT to 128: avoids 32x DMA)
    Hp = _round_up(H, LANE)
    Mp = _round_up(M, LANE)
    Cp = _round_up(max(C, 2), LANE)
    GN = gb * N
    nblk = B // gb

    f32, bf16 = jnp.float32, jnp.bfloat16

    def pad2(arr, r, c, dtype):
        arr = arr.astype(f32)
        return jnp.pad(arr, ((0, r - arr.shape[0]),
                             (0, c - arr.shape[1]))).astype(dtype)

    # ---- inputs -----------------------------------------------------------
    # Stacked node features: (B*N, Fp) bf16; one grid step reads (GN, Fp).
    x_p = jnp.pad(x.astype(f32), ((0, 0), (0, 0), (0, Fp - F)))
    x_p = x_p.reshape(B * N, Fp).astype(bf16)

    # Block-diagonal adjacency per grid step: (nblk*GN, GN) bf16.  One
    # (GN, GN) @ (GN, Hp) dot replaces gb per-graph K=N aggregation matmuls.
    a_grp = adj.astype(f32).reshape(nblk, gb, N, N)
    eye = jnp.eye(gb, dtype=f32).reshape(1, gb, 1, gb, 1)
    a_blk = (a_grp[:, :, :, None, :] * eye).reshape(nblk * GN, GN).astype(bf16)

    # ---- weights (bf16 MXU operands) / biases (f32) -----------------------
    w_emb = pad2(params["w_emb"], Fp, Hp, bf16)
    b_emb = pad2(params["b_emb"][None, :], 1, Hp, f32)
    # Pack W1|W2|W3 -> (L, Hp, 3Hp); biases -> (L, 1, 3Hp) with zero lin2 lanes.
    w_le = jnp.stack([
        jnp.concatenate([pad2(params["w1"][l], Hp, Hp, bf16),
                         pad2(params["w2"][l], Hp, Hp, bf16),
                         pad2(params["w3"][l], Hp, Hp, bf16)], axis=1)
        for l in range(L)])
    b_le = jnp.stack([
        jnp.concatenate([pad2(params["b1"][l][None, :], 1, Hp, f32),
                         jnp.zeros((1, Hp), f32),
                         pad2(params["b3"][l][None, :], 1, Hp, f32)], axis=1)
        for l in range(L)])
    w_m1 = pad2(params["w_m1"], Hp, Mp, bf16)
    b_m1 = pad2(params["b_m1"][None, :], 1, Mp, f32)
    w_m2 = pad2(params["w_m2"], Mp, Cp, bf16)
    b_m2 = pad2(params["b_m2"][None, :], 1, Cp, f32)

    def full_spec(arr):
        nd = arr.ndim
        # Constant block index -> Mosaic keeps the tensor resident across steps.
        return pl.BlockSpec(arr.shape, lambda i, _nd=nd: (0,) * _nd)

    kernel = functools.partial(_spmotif_kernel, num_layers=L, num_nodes=N,
                               hidden_p=Hp, num_classes=C)

    probs_p = pl.pallas_call(
        kernel,
        out_shape=jax.ShapeDtypeStruct((B, Cp), jnp.float32),
        grid_spec=pltpu.PrefetchScalarGridSpec(
            num_scalar_prefetch=0,
            grid=(nblk,),
            in_specs=[
                pl.BlockSpec((GN, GN), lambda i: (i, 0)),   # block-diag adjacency
                pl.BlockSpec((GN, Fp), lambda i: (i, 0)),   # stacked node features
                full_spec(w_emb), full_spec(b_emb),
                full_spec(w_le), full_spec(b_le),
                full_spec(w_m1), full_spec(b_m1),
                full_spec(w_m2), full_spec(b_m2),
            ],
            out_specs=pl.BlockSpec((gb, Cp), lambda i: (i, 0)),
        ),
        compiler_params=pltpu.CompilerParams(
            dimension_semantics=("parallel",)),
    )(a_blk, x_p, w_emb, b_emb, w_le, b_le, w_m1, b_m1, w_m2, b_m2)

    out_dim = 2 if C == 1 else C
    return probs_p[:, :out_dim]


def init_params(key, num_layer, emb_dim, x_dim, num_class, scale=0.2):
    H, M = emb_dim, 2 * emb_dim
    ks = iter(jax.random.split(key, 8 + 5 * num_layer))
    nrm = lambda shape: scale * jax.random.normal(next(ks), shape, jnp.float32)
    return {
        "w_emb": nrm((x_dim, H)), "b_emb": nrm((H,)),
        "w1": nrm((num_layer, H, H)), "b1": nrm((num_layer, H)),
        "w2": nrm((num_layer, H, H)),
        "w3": nrm((num_layer, H, H)), "b3": nrm((num_layer, H)),
        "w_m1": nrm((H, M)), "b_m1": nrm((M,)),
        "w_m2": nrm((M, num_class)), "b_m2": nrm((num_class,)),
    }


def reference_forward(adj, x, params):
    """Pure-JAX f32 reference of the same dense-batched SPMotifNet forward."""
    h = jnp.einsum("bnf,fh->bnh", x, params["w_emb"]) + params["b_emb"]
    deg = jnp.sum(adj, axis=-1, keepdims=True)
    for l in range(params["w1"].shape[0]):
        h1 = jnp.einsum("bnh,hk->bnk", h, params["w1"][l]) + params["b1"][l]
        h2 = jnp.einsum("bnh,hk->bnk", h, params["w2"][l])
        h3 = jnp.einsum("bnh,hk->bnk", h, params["w3"][l]) + params["b3"][l]
        agg = jnp.einsum("bij,bjh->bih", adj, h1)
        h = jnp.maximum(agg - deg * h2 + h3, 0.0)
    g = jnp.mean(h, axis=1)
    z = jnp.maximum(g @ params["w_m1"] + params["b_m1"], 0.0)
    logits = z @ params["w_m2"] + params["b_m2"]
    if logits.shape[1] == 1:
        p = jax.nn.sigmoid(logits)
        return jnp.concatenate([1.0 - p, p], axis=1)
    return jax.nn.softmax(logits, axis=-1)


if __name__ == "__main__":
    B, N, X_DIM = 64, 16, 4            # 64 graphs, 16 nodes each, 4-dim features
    NUM_LAYER, EMB_DIM, NUM_CLASS = 3, 32, 3
    GB = 16                             # 16 graphs/step -> GN=256, grid=(4,)

    key = jax.random.PRNGKey(0)
    k_adj, k_w, k_x, k_p = jax.random.split(key, 4)

    # Dense weighted adjacency (edge_attr plays the LEConv edge_weight role):
    # symmetric sparsity pattern + self loop, uniform weights, row-normalized.
    mask = (jax.random.uniform(k_adj, (B, N, N)) > 0.7).astype(jnp.float32)
    mask = jnp.maximum(mask, jnp.transpose(mask, (0, 2, 1)))
    mask = jnp.maximum(mask, jnp.eye(N, dtype=jnp.float32)[None])
    ew = jax.random.uniform(k_w, (B, N, N), minval=0.5, maxval=1.0)
    adj = mask * ew
    adj = adj / jnp.sum(adj, axis=-1, keepdims=True)

    x = jax.random.normal(k_x, (B, N, X_DIM), jnp.float32)
    params = init_params(k_p, NUM_LAYER, EMB_DIM, X_DIM, NUM_CLASS)

    probs = jax.block_until_ready(
        spmotif_forward(adj, x, params, graphs_per_step=GB))
    ref = reference_forward(adj, x, params)

    assert probs.shape == (B, NUM_CLASS), probs.shape
    # Softmax is normalized in f32 inside the kernel -> sums are tight.
    assert jnp.allclose(jnp.sum(probs, axis=-1), 1.0, atol=1e-5)
    # bf16 MXU operands -> compare against the f32 reference with a loose tolerance.
    err = float(jnp.max(jnp.abs(probs - ref)))
    assert err < 3e-2, err

    print("KERNEL_OK")
</pallas_src>

<mosaic_0001>
module attributes {stable_mosaic.version = 11 : i64} {
  func.func @_spmotif_kernel(%arg0: i32, %arg1: memref<256x256xbf16, #tpu.memory_space<vmem>>, %arg2: memref<256x16xbf16, #tpu.memory_space<vmem>>, %arg3: memref<16x128xbf16, #tpu.memory_space<vmem>>, %arg4: memref<1x128xf32, #tpu.memory_space<vmem>>, %arg5: memref<3x128x384xbf16, #tpu.memory_space<vmem>>, %arg6: memref<3x1x384xf32, #tpu.memory_space<vmem>>, %arg7: memref<128x128xbf16, #tpu.memory_space<vmem>>, %arg8: memref<1x128xf32, #tpu.memory_space<vmem>>, %arg9: memref<128x128xbf16, #tpu.memory_space<vmem>>, %arg10: memref<1x128xf32, #tpu.memory_space<vmem>>, %arg11: memref<16x128xf32, #tpu.memory_space<vmem>>) attributes {dimension_semantics = [#tpu.dimension_semantics<parallel>], iteration_bounds = array<i64: 4>, scalar_prefetch = 0 : i64, scratch_operands = 0 : i64, tpu.core_type = #tpu.core_type<tc>, window_params = [{transform_indices = @transform_0, window_bounds = array<i64: 256, 256>}, {transform_indices = @transform_1, window_bounds = array<i64: 256, 16>}, {pipeline_mode = #tpu.pipeline_mode<synchronous>, transform_indices = @transform_2, window_bounds = array<i64: 16, 128>}, {pipeline_mode = #tpu.pipeline_mode<synchronous>, transform_indices = @transform_3, window_bounds = array<i64: 1, 128>}, {pipeline_mode = #tpu.pipeline_mode<synchronous>, transform_indices = @transform_4, window_bounds = array<i64: 3, 128, 384>}, {pipeline_mode = #tpu.pipeline_mode<synchronous>, transform_indices = @transform_5, window_bounds = array<i64: 3, 1, 384>}, {pipeline_mode = #tpu.pipeline_mode<synchronous>, transform_indices = @transform_6, window_bounds = array<i64: 128, 128>}, {pipeline_mode = #tpu.pipeline_mode<synchronous>, transform_indices = @transform_7, window_bounds = array<i64: 1, 128>}, {pipeline_mode = #tpu.pipeline_mode<synchronous>, transform_indices = @transform_8, window_bounds = array<i64: 128, 128>}, {pipeline_mode = #tpu.pipeline_mode<synchronous>, transform_indices = @transform_9, window_bounds = array<i64: 1, 128>}, {transform_indices = @transform_10, window_bounds = array<i64: 16, 128>}]} {
    %c0 = arith.constant 0 : index
    %c0_0 = arith.constant 0 : index
    %0 = vector.load %arg1[%c0, %c0_0] : memref<256x256xbf16, #tpu.memory_space<vmem>>, vector<256x256xbf16>
    %c0_1 = arith.constant 0 : index
    %c0_2 = arith.constant 0 : index
    %1 = vector.load %arg2[%c0_1, %c0_2] : memref<256x16xbf16, #tpu.memory_space<vmem>>, vector<256x16xbf16>
    %2 = arith.extf %0 : vector<256x256xbf16> to vector<256x256xf32>
    %cst = arith.constant dense<0.000000e+00> : vector<256xf32>
    %3 = vector.multi_reduction <add>, %2, %cst [1] : vector<256x256xf32> to vector<256xf32>
    %4 = vector.shape_cast %3 : vector<256xf32> to vector<256x1xf32>
    %5 = vector.shape_cast %4 : vector<256x1xf32> to vector<256x1xf32>
    %6 = vector.broadcast %5 : vector<256x1xf32> to vector<256x128xf32>
    %c0_3 = arith.constant 0 : index
    %c0_4 = arith.constant 0 : index
    %7 = vector.load %arg3[%c0_3, %c0_4] : memref<16x128xbf16, #tpu.memory_space<vmem>>, vector<16x128xbf16>
    %cst_5 = arith.constant dense<0.000000e+00> : vector<256x128xf32>
    %8 = tpu.matmul %1, %7, %cst_5 {dimension_numbers = #tpu.dot_dimension_numbers<[1], [0], [0], [1], [0, 0, 1, 1], [], []>} : vector<256x16xbf16>, vector<16x128xbf16>, vector<256x128xf32> -> vector<256x128xf32>
    %c0_6 = arith.constant 0 : index
    %c0_7 = arith.constant 0 : index
    %9 = vector.load %arg4[%c0_6, %c0_7] : memref<1x128xf32, #tpu.memory_space<vmem>>, vector<1x128xf32>
    %10 = vector.broadcast %9 : vector<1x128xf32> to vector<256x128xf32>
    %11 = arith.addf %8, %10 : vector<256x128xf32>
    %12 = arith.truncf %11 : vector<256x128xf32> to vector<256x128xbf16>
    %c0_8 = arith.constant 0 : index
    %c0_9 = arith.constant 0 : index
    %c0_10 = arith.constant 0 : index
    %13 = vector.load %arg5[%c0_8, %c0_9, %c0_10] : memref<3x128x384xbf16, #tpu.memory_space<vmem>>, vector<1x128x384xbf16>
    %14 = vector.shape_cast %13 : vector<1x128x384xbf16> to vector<128x384xbf16>
    %cst_11 = arith.constant dense<0.000000e+00> : vector<256x384xf32>
    %15 = tpu.matmul %12, %14, %cst_11 {dimension_numbers = #tpu.dot_dimension_numbers<[1], [0], [0], [1], [0, 0, 1, 1], [], []>} : vector<256x128xbf16>, vector<128x384xbf16>, vector<256x384xf32> -> vector<256x384xf32>
    %c0_12 = arith.constant 0 : index
    %c0_13 = arith.constant 0 : index
    %c0_14 = arith.constant 0 : index
    %16 = vector.load %arg6[%c0_12, %c0_13, %c0_14] : memref<3x1x384xf32, #tpu.memory_space<vmem>>, vector<1x1x384xf32>
    %17 = vector.shape_cast %16 : vector<1x1x384xf32> to vector<1x384xf32>
    %18 = vector.broadcast %17 : vector<1x384xf32> to vector<256x384xf32>
    %19 = arith.addf %15, %18 : vector<256x384xf32>
    %20 = vector.extract_strided_slice %19 {offsets = [0, 0], sizes = [256, 128], strides = [1, 1]} : vector<256x384xf32> to vector<256x128xf32>
    %21 = vector.extract_strided_slice %19 {offsets = [0, 128], sizes = [256, 128], strides = [1, 1]} : vector<256x384xf32> to vector<256x128xf32>
    %22 = vector.extract_strided_slice %19 {offsets = [0, 256], sizes = [256, 128], strides = [1, 1]} : vector<256x384xf32> to vector<256x128xf32>
    %23 = arith.truncf %20 : vector<256x128xf32> to vector<256x128xbf16>
    %cst_15 = arith.constant dense<0.000000e+00> : vector<256x128xf32>
    %24 = tpu.matmul %0, %23, %cst_15 {dimension_numbers = #tpu.dot_dimension_numbers<[1], [0], [0], [1], [0, 0, 1, 1], [], []>} : vector<256x256xbf16>, vector<256x128xbf16>, vector<256x128xf32> -> vector<256x128xf32>
    %25 = arith.mulf %6, %21 : vector<256x128xf32>
    %26 = arith.subf %24, %25 : vector<256x128xf32>
    %27 = arith.addf %26, %22 : vector<256x128xf32>
    %cst_16 = arith.constant 0.000000e+00 : f32
    %28 = vector.broadcast %cst_16 : f32 to vector<256x128xf32>
    %29 = arith.maximumf %27, %28 : vector<256x128xf32>
    %30 = arith.truncf %29 : vector<256x128xf32> to vector<256x128xbf16>
    %c1 = arith.constant 1 : index
    %c0_17 = arith.constant 0 : index
    %c0_18 = arith.constant 0 : index
    %31 = vector.load %arg5[%c1, %c0_17, %c0_18] : memref<3x128x384xbf16, #tpu.memory_space<vmem>>, vector<1x128x384xbf16>
    %32 = vector.shape_cast %31 : vector<1x128x384xbf16> to vector<128x384xbf16>
    %cst_19 = arith.constant dense<0.000000e+00> : vector<256x384xf32>
    %33 = tpu.matmul %30, %32, %cst_19 {dimension_numbers = #tpu.dot_dimension_numbers<[1], [0], [0], [1], [0, 0, 1, 1], [], []>} : vector<256x128xbf16>, vector<128x384xbf16>, vector<256x384xf32> -> vector<256x384xf32>
    %c1_20 = arith.constant 1 : index
    %c0_21 = arith.constant 0 : index
    %c0_22 = arith.constant 0 : index
    %34 = vector.load %arg6[%c1_20, %c0_21, %c0_22] : memref<3x1x384xf32, #tpu.memory_space<vmem>>, vector<1x1x384xf32>
    %35 = vector.shape_cast %34 : vector<1x1x384xf32> to vector<1x384xf32>
    %36 = vector.broadcast %35 : vector<1x384xf32> to vector<256x384xf32>
    %37 = arith.addf %33, %36 : vector<256x384xf32>
    %38 = vector.extract_strided_slice %37 {offsets = [0, 0], sizes = [256, 128], strides = [1, 1]} : vector<256x384xf32> to vector<256x128xf32>
    %39 = vector.extract_strided_slice %37 {offsets = [0, 128], sizes = [256, 128], strides = [1, 1]} : vector<256x384xf32> to vector<256x128xf32>
    %40 = vector.extract_strided_slice %37 {offsets = [0, 256], sizes = [256, 128], strides = [1, 1]} : vector<256x384xf32> to vector<256x128xf32>
    %41 = arith.truncf %38 : vector<256x128xf32> to vector<256x128xbf16>
    %cst_23 = arith.constant dense<0.000000e+00> : vector<256x128xf32>
    %42 = tpu.matmul %0, %41, %cst_23 {dimension_numbers = #tpu.dot_dimension_numbers<[1], [0], [0], [1], [0, 0, 1, 1], [], []>} : vector<256x256xbf16>, vector<256x128xbf16>, vector<256x128xf32> -> vector<256x128xf32>
    %43 = arith.mulf %6, %39 : vector<256x128xf32>
    %44 = arith.subf %42, %43 : vector<256x128xf32>
    %45 = arith.addf %44, %40 : vector<256x128xf32>
    %cst_24 = arith.constant 0.000000e+00 : f32
    %46 = vector.broadcast %cst_24 : f32 to vector<256x128xf32>
    %47 = arith.maximumf %45, %46 : vector<256x128xf32>
    %48 = arith.truncf %47 : vector<256x128xf32> to vector<256x128xbf16>
    %c2 = arith.constant 2 : index
    %c0_25 = arith.constant 0 : index
    %c0_26 = arith.constant 0 : index
    %49 = vector.load %arg5[%c2, %c0_25, %c0_26] : memref<3x128x384xbf16, #tpu.memory_space<vmem>>, vector<1x128x384xbf16>
    %50 = vector.shape_cast %49 : vector<1x128x384xbf16> to vector<128x384xbf16>
    %cst_27 = arith.constant dense<0.000000e+00> : vector<256x384xf32>
    %51 = tpu.matmul %48, %50, %cst_27 {dimension_numbers = #tpu.dot_dimension_numbers<[1], [0], [0], [1], [0, 0, 1, 1], [], []>} : vector<256x128xbf16>, vector<128x384xbf16>, vector<256x384xf32> -> vector<256x384xf32>
    %c2_28 = arith.constant 2 : index
    %c0_29 = arith.constant 0 : index
    %c0_30 = arith.constant 0 : index
    %52 = vector.load %arg6[%c2_28, %c0_29, %c0_30] : memref<3x1x384xf32, #tpu.memory_space<vmem>>, vector<1x1x384xf32>
    %53 = vector.shape_cast %52 : vector<1x1x384xf32> to vector<1x384xf32>
    %54 = vector.broadcast %53 : vector<1x384xf32> to vector<256x384xf32>
    %55 = arith.addf %51, %54 : vector<256x384xf32>
    %56 = vector.extract_strided_slice %55 {offsets = [0, 0], sizes = [256, 128], strides = [1, 1]} : vector<256x384xf32> to vector<256x128xf32>
    %57 = vector.extract_strided_slice %55 {offsets = [0, 128], sizes = [256, 128], strides = [1, 1]} : vector<256x384xf32> to vector<256x128xf32>
    %58 = vector.extract_strided_slice %55 {offsets = [0, 256], sizes = [256, 128], strides = [1, 1]} : vector<256x384xf32> to vector<256x128xf32>
    %59 = arith.truncf %56 : vector<256x128xf32> to vector<256x128xbf16>
    %cst_31 = arith.constant dense<0.000000e+00> : vector<256x128xf32>
    %60 = tpu.matmul %0, %59, %cst_31 {dimension_numbers = #tpu.dot_dimension_numbers<[1], [0], [0], [1], [0, 0, 1, 1], [], []>} : vector<256x256xbf16>, vector<256x128xbf16>, vector<256x128xf32> -> vector<256x128xf32>
    %61 = arith.mulf %6, %57 : vector<256x128xf32>
    %62 = arith.subf %60, %61 : vector<256x128xf32>
    %63 = arith.addf %62, %58 : vector<256x128xf32>
    %cst_32 = arith.constant 0.000000e+00 : f32
    %64 = vector.broadcast %cst_32 : f32 to vector<256x128xf32>
    %65 = arith.maximumf %63, %64 : vector<256x128xf32>
    %66 = vector.shape_cast %65 : vector<256x128xf32> to vector<16x16x128xf32>
    %cst_33 = arith.constant dense<0.000000e+00> : vector<16x128xf32>
    %67 = vector.multi_reduction <add>, %66, %cst_33 [1] : vector<16x16x128xf32> to vector<16x128xf32>
    %cst_34 = arith.constant 6.250000e-02 : f32
    %68 = vector.broadcast %cst_34 : f32 to vector<16x128xf32>
    %69 = arith.mulf %67, %68 : vector<16x128xf32>
    %70 = arith.truncf %69 : vector<16x128xf32> to vector<16x128xbf16>
    %c0_35 = arith.constant 0 : index
    %c0_36 = arith.constant 0 : index
    %71 = vector.load %arg7[%c0_35, %c0_36] : memref<128x128xbf16, #tpu.memory_space<vmem>>, vector<128x128xbf16>
    %cst_37 = arith.constant dense<0.000000e+00> : vector<16x128xf32>
    %72 = tpu.matmul %70, %71, %cst_37 {dimension_numbers = #tpu.dot_dimension_numbers<[1], [0], [0], [1], [0, 0, 1, 1], [], []>} : vector<16x128xbf16>, vector<128x128xbf16>, vector<16x128xf32> -> vector<16x128xf32>
    %c0_38 = arith.constant 0 : index
    %c0_39 = arith.constant 0 : index
    %73 = vector.load %arg8[%c0_38, %c0_39] : memref<1x128xf32, #tpu.memory_space<vmem>>, vector<1x128xf32>
    %74 = vector.broadcast %73 : vector<1x128xf32> to vector<16x128xf32>
    %75 = arith.addf %72, %74 : vector<16x128xf32>
    %cst_40 = arith.constant 0.000000e+00 : f32
    %76 = vector.broadcast %cst_40 : f32 to vector<16x128xf32>
    %77 = arith.maximumf %75, %76 : vector<16x128xf32>
    %78 = arith.truncf %77 : vector<16x128xf32> to vector<16x128xbf16>
    %c0_41 = arith.constant 0 : index
    %c0_42 = arith.constant 0 : index
    %79 = vector.load %arg9[%c0_41, %c0_42] : memref<128x128xbf16, #tpu.memory_space<vmem>>, vector<128x128xbf16>
    %cst_43 = arith.constant dense<0.000000e+00> : vector<16x128xf32>
    %80 = tpu.matmul %78, %79, %cst_43 {dimension_numbers = #tpu.dot_dimension_numbers<[1], [0], [0], [1], [0, 0, 1, 1], [], []>} : vector<16x128xbf16>, vector<128x128xbf16>, vector<16x128xf32> -> vector<16x128xf32>
    %c0_44 = arith.constant 0 : index
    %c0_45 = arith.constant 0 : index
    %81 = vector.load %arg10[%c0_44, %c0_45] : memref<1x128xf32, #tpu.memory_space<vmem>>, vector<1x128xf32>
    %82 = vector.broadcast %81 : vector<1x128xf32> to vector<16x128xf32>
    %83 = arith.addf %80, %82 : vector<16x128xf32>
    %84 = tpu.iota {dimensions = array<i32: 1>} : vector<16x128xi32>
    %c3_i32 = arith.constant 3 : i32
    %85 = vector.broadcast %c3_i32 : i32 to vector<16x128xi32>
    %86 = arith.cmpi slt, %84, %85 : vector<16x128xi32>
    %cst_46 = arith.constant -1.000000e+30 : f32
    %87 = vector.broadcast %cst_46 : f32 to vector<16x128xf32>
    %88 = arith.select %86, %83, %87 : vector<16x128xi1>, vector<16x128xf32>
    %cst_47 = arith.constant dense<0xFF800000> : vector<16xf32>
    %89 = vector.multi_reduction <maximumf>, %88, %cst_47 [1] : vector<16x128xf32> to vector<16xf32>
    %90 = vector.shape_cast %89 : vector<16xf32> to vector<16x1xf32>
    %91 = vector.broadcast %90 : vector<16x1xf32> to vector<16x128xf32>
    %92 = arith.subf %88, %91 : vector<16x128xf32>
    %93 = math.exp %92 : vector<16x128xf32>
    %cst_48 = arith.constant 0.000000e+00 : f32
    %94 = vector.broadcast %cst_48 : f32 to vector<16x128xf32>
    %95 = arith.select %86, %93, %94 : vector<16x128xi1>, vector<16x128xf32>
    %cst_49 = arith.constant dense<0.000000e+00> : vector<16xf32>
    %96 = vector.multi_reduction <add>, %95, %cst_49 [1] : vector<16x128xf32> to vector<16xf32>
    %97 = vector.shape_cast %96 : vector<16xf32> to vector<16x1xf32>
    %98 = tpu.reciprocal %97 : vector<16x1xf32> -> vector<16x1xf32>
    %99 = vector.broadcast %98 : vector<16x1xf32> to vector<16x128xf32>
    %100 = arith.mulf %95, %99 : vector<16x128xf32>
    %c0_50 = arith.constant 0 : index
    %c0_51 = arith.constant 0 : index
    %101 = vector.load %arg11[%c0_50, %c0_51] : memref<16x128xf32, #tpu.memory_space<vmem>>, vector<16x128xf32>
    tpu.vector_store %arg11[%c0_50, %c0_51], %100 {strides = array<i32>} : memref<16x128xf32, #tpu.memory_space<vmem>>, vector<16x128xf32>,
    return
  }
  func.func @transform_0(%arg0: i32) -> (i32, i32) {
    %c0_i32 = arith.constant 0 : i32
    %c0_i32_0 = arith.constant 0 : i32
    return %arg0, %c0_i32 : i32, i32
  }
  func.func @transform_1(%arg0: i32) -> (i32, i32) {
    %c0_i32 = arith.constant 0 : i32
    %c0_i32_0 = arith.constant 0 : i32
    return %arg0, %c0_i32 : i32, i32
  }
  func.func @transform_2(%arg0: i32) -> (i32, i32) {
    %c0_i32 = arith.constant 0 : i32
    %c0_i32_0 = arith.constant 0 : i32
    %c0_i32_1 = arith.constant 0 : i32
    return %c0_i32, %c0_i32_0 : i32, i32
  }
  func.func @transform_3(%arg0: i32) -> (i32, i32) {
    %c0_i32 = arith.constant 0 : i32
    %c0_i32_0 = arith.constant 0 : i32
    %c0_i32_1 = arith.constant 0 : i32
    return %c0_i32, %c0_i32_0 : i32, i32
  }
  func.func @transform_4(%arg0: i32) -> (i32, i32, i32) {
    %c0_i32 = arith.constant 0 : i32
    %c0_i32_0 = arith.constant 0 : i32
    %c0_i32_1 = arith.constant 0 : i32
    %c0_i32_2 = arith.constant 0 : i32
    return %c0_i32, %c0_i32_0, %c0_i32_1 : i32, i32, i32
  }
  func.func @transform_5(%arg0: i32) -> (i32, i32, i32) {
    %c0_i32 = arith.constant 0 : i32
    %c0_i32_0 = arith.constant 0 : i32
    %c0_i32_1 = arith.constant 0 : i32
    %c0_i32_2 = arith.constant 0 : i32
    return %c0_i32, %c0_i32_0, %c0_i32_1 : i32, i32, i32
  }
  func.func @transform_6(%arg0: i32) -> (i32, i32) {
    %c0_i32 = arith.constant 0 : i32
    %c0_i32_0 = arith.constant 0 : i32
    %c0_i32_1 = arith.constant 0 : i32
    return %c0_i32, %c0_i32_0 : i32, i32
  }
  func.func @transform_7(%arg0: i32) -> (i32, i32) {
    %c0_i32 = arith.constant 0 : i32
    %c0_i32_0 = arith.constant 0 : i32
    %c0_i32_1 = arith.constant 0 : i32
    return %c0_i32, %c0_i32_0 : i32, i32
  }
  func.func @transform_8(%arg0: i32) -> (i32, i32) {
    %c0_i32 = arith.constant 0 : i32
    %c0_i32_0 = arith.constant 0 : i32
    %c0_i32_1 = arith.constant 0 : i32
    return %c0_i32, %c0_i32_0 : i32, i32
  }
  func.func @transform_9(%arg0: i32) -> (i32, i32) {
    %c0_i32 = arith.constant 0 : i32
    %c0_i32_0 = arith.constant 0 : i32
    %c0_i32_1 = arith.constant 0 : i32
    return %c0_i32, %c0_i32_0 : i32, i32
  }
  func.func @transform_10(%arg0: i32) -> (i32, i32) {
    %c0_i32 = arith.constant 0 : i32
    %c0_i32_0 = arith.constant 0 : i32
    return %arg0, %c0_i32 : i32, i32
  }
}

</mosaic_0001>

<llo_original>
// kernel: tpu_custom_call.1
$region0: #{tpu_custom_call.1}
  #allocation0 [shape = 'u32[]', space=smem, size = 0x4, offset = 0x4, fixed_abs, tag = 'smem constant byte address 0x4 - core index']
  #allocation1 [shape = 'u32[72,128]{1,0:T(1,128)}', space=vmem, size = 0x9000, scoped, tag = 'internal scratch']
  %s0 = inlined_call_operand.hbm [shape: bf16[1024,256], index: 0, kind: input, shape index: {}]
  %s1 = inlined_call_operand.vmem [shape: bf16[1024,16], index: 1, kind: input, shape index: {}]
  %s2 = inlined_call_operand.hbm [shape: bf16[16,128], index: 2, kind: input, shape index: {}]
  %s3 = inlined_call_operand.vmem [shape: f32[1,128], index: 3, kind: input, shape index: {}]
  %s4 = inlined_call_operand.vmem [shape: bf16[3,128,384], index: 4, kind: input, shape index: {}]
  %s5 = inlined_call_operand.hbm [shape: f32[3,1,384], index: 5, kind: input, shape index: {}]
  %s6 = inlined_call_operand.hbm [shape: bf16[128,128], index: 6, kind: input, shape index: {}]
  %s7 = inlined_call_operand.vmem [shape: f32[1,128], index: 7, kind: input, shape index: {}]
  %s8 = inlined_call_operand.hbm [shape: bf16[128,128], index: 8, kind: input, shape index: {}]
  %s9 = inlined_call_operand.vmem [shape: f32[1,128], index: 9, kind: input, shape index: {}]
  %s10 = inlined_call_operand.hbm [shape: f32[64,128], index: 10, kind: output, shape index: {}]
  %s11 = sld [smem:[#allocation0]]
  $region93: #{tpu_custom_call.1} parent=0
    _
  %s13 = ssub.s32 1, %s11
  %s14 = scalar_select 0, %s13, %s11
  $region1: #{tpu_custom_call.1} parent=0
    #allocation2 [shape = 'u8[262144]{0}', space=vmem, size = 0x40000, scoped, tag = 'input window, operand 0']
    #allocation3 [shape = 's32[2]{0}', space=sflag, size = 0x8, scoped, tag = 'scoped memory for tpu_custom_call.1']
    #allocation4 [shape = 's32[2]{0}', space=sflag, size = 0x8, scoped, tag = 'scoped memory for tpu_custom_call.1']
    #allocation5 [shape = 'u8[4096]{0}', space=vmem, size = 0x1000, scoped, tag = 'input window, operand 2, single buffered']
    #allocation6 [shape = 's32[1]{0}', space=sflag, size = 0x4, scoped, tag = 'scoped memory for tpu_custom_call.1']
    #allocation7 [shape = 'u8[4608]{0}', space=vmem, size = 0x1400, scoped, tag = 'input window, operand 5, single buffered']
    #allocation8 [shape = 'u8[32768]{0}', space=vmem, size = 0x8000, scoped, tag = 'input window, operand 6, single buffered']
    #allocation9 [shape = 's32[1]{0}', space=sflag, size = 0x4, scoped, tag = 'scoped memory for tpu_custom_call.1']
    #allocation10 [shape = 'u8[32768]{0}', space=vmem, size = 0x8000, scoped, tag = 'input window, operand 8, single buffered']
    #allocation11 [shape = 'u8[16384]{0}', space=vmem, size = 0x4000, scoped, tag = 'output window, operand 0']
    %15 = vsyncpa [#allocation3], 0
    %s16 = scalar_lea.sflag [#allocation3], 1
    %17 = vsyncpa %s16, 0
    %18 = vsyncpa [#allocation6], 0
    %19 = vsyncpa [#allocation9], 0
    %20 = vsyncpa [#allocation4], 0
    %s21 = scalar_lea.sflag [#allocation4], 1
    %22 = vsyncpa %s21, 0
    loop: start=0, step=1, limit=6
    $region2: #{tpu_custom_call.1} parent=1 // loop_pre_header
      _
    $region3: #{tpu_custom_call.1} parent=1 // loop_header
      %s24 = sphi 0, %s28
      %p25 = scmp.ge.s32.totalorder %s24, 6
      %s34 = sphi 0, %s36
      %s37 = sphi 0, %s34
      %s38 = sphi 0, %s37
      %s54 = sphi 0, %s38
      %s60 = sphi 0, %s62
      %s63 = sphi 0, %s60
      %s64 = sphi 0, %s63
      %s80 = sphi 0, %s64
      %s84 = sphi 0, %s84
      %s86 = sphi 0, %s84
      %s87 = sphi 0, %s86
      %s101 = sphi 0, %s87
      %s105 = sphi 0, %s105
      %s107 = sphi 0, %s105
      %s108 = sphi 0, %s107
      %s122 = sphi 0, %s108
      %s126 = sphi 0, %s126
      %s128 = sphi 0, %s126
      %s129 = sphi 0, %s128
      %s143 = sphi 0, %s129
      %s147 = sphi 0, %s147
      %s149 = sphi 0, %s147
      %s150 = sphi 0, %s149
      %s164 = sphi 0, %s150
      %s168 = sphi 0, %s168
      %s170 = sphi 0, %s168
      %s171 = sphi 0, %s170
      %s185 = sphi 0, %s171
      %s189 = sphi 0, %s189
      %s191 = sphi 0, %s189
      %s192 = sphi 0, %s191
      %s206 = sphi 0, %s192
      %s210 = sphi 0, %s210
      %s212 = sphi 0, %s210
      %s213 = sphi 0, %s212
      %s227 = sphi 0, %s213
      %s231 = sphi 0, %s231
      %s233 = sphi 0, %s231
      %s234 = sphi 0, %s233
      %s248 = sphi 0, %s234
      %s254 = sphi 0, %s256
      %s257 = sphi 0, %s254
      %s258 = sphi 0, %s257
      %s274 = sphi 0, %s258
    $region4: #{tpu_custom_call.1} parent=1 // loop_header_branch
      %27 = sbr.rel (%p25) target = $region8
    $region5: #{tpu_custom_call.1} parent=1 // loop_body
      %s29 = ssub.s32 %s24, 1
      %s30 = ssub.s32 %s24, 2
      %s31 = sadd.s32 %s24, 1
      %s32 = ssub.s32 %s24, %s31
      %p33 = scmp.eq.s32.totalorder %s32, 0
      %s35 = sadd.s32 %s34, 1
      %s36 = scalar_select %p33, %s34, %s35
      %p39 = pneg %p33
      %p40 = scmp.eq.s32.totalorder %s24, 3
      %p41 = por %p39, %p40
      %p42 = scmp.ne.s32.totalorder %s34, %s37
      %p43 = scmp.eq.s32.totalorder %s24, 0
      %p44 = por %p42, %p43
      %p45 = scmp.ne.s32.totalorder %s34, %s37
      %p46 = scmp.eq.s32.totalorder %s29, 3
      %p47 = por %p45, %p46
      %p48 = scmp.ne.s32.totalorder %s37, %s38
      %p49 = scmp.eq.s32.totalorder %s29, 0
      %p50 = por %p48, %p49
      %p51 = scmp.ne.s32.totalorder %s37, %s38
      %p52 = scmp.eq.s32.totalorder %s30, 3
      %p53 = por %p51, %p52
      %p55 = scmp.ne.s32.totalorder %s38, %s54
      %p56 = scmp.eq.s32.totalorder %s30, 0
      %p57 = por %p55, %p56
      %s58 = ssub.s32 %s24, %s31
      %p59 = scmp.eq.s32.totalorder %s58, 0
      %s61 = sadd.s32 %s60, 1
      %s62 = scalar_select %p59, %s60, %s61
      %p65 = pneg %p59
      %p66 = scmp.eq.s32.totalorder %s24, 3
      %p67 = por %p65, %p66
      %p68 = scmp.ne.s32.totalorder %s60, %s63
      %p69 = scmp.eq.s32.totalorder %s24, 0
      %p70 = por %p68, %p69
      %p71 = scmp.ne.s32.totalorder %s60, %s63
      %p72 = scmp.eq.s32.totalorder %s29, 3
      %p73 = por %p71, %p72
      %p74 = scmp.ne.s32.totalorder %s63, %s64
      %p75 = scmp.eq.s32.totalorder %s29, 0
      %p76 = por %p74, %p75
      %p77 = scmp.ne.s32.totalorder %s63, %s64
      %p78 = scmp.eq.s32.totalorder %s30, 3
      %p79 = por %p77, %p78
      %p81 = scmp.ne.s32.totalorder %s64, %s80
      %p82 = scmp.eq.s32.totalorder %s30, 0
      %p83 = por %p81, %p82
      %s85 = sadd.s32 %s84, 1
      %p88 = scmp.eq.s32.totalorder %s24, 3
      %p89 = scmp.ne.s32.totalorder %s84, %s86
      %p90 = scmp.eq.s32.totalorder %s24, 0
      %p91 = por %p89, %p90
      %p92 = scmp.ne.s32.totalorder %s84, %s86
      %p93 = scmp.eq.s32.totalorder %s29, 3
      %p94 = por %p92, %p93
      %p95 = scmp.ne.s32.totalorder %s86, %s87
      %p96 = scmp.eq.s32.totalorder %s29, 0
      %p97 = por %p95, %p96
      %p98 = scmp.ne.s32.totalorder %s86, %s87
      %p99 = scmp.eq.s32.totalorder %s30, 3
      %p100 = por %p98, %p99
      %p102 = scmp.ne.s32.totalorder %s87, %s101
      %p103 = scmp.eq.s32.totalorder %s30, 0
      %p104 = por %p102, %p103
      %s106 = sadd.s32 %s105, 1
      %p109 = scmp.eq.s32.totalorder %s24, 3
      %p110 = scmp.ne.s32.totalorder %s105, %s107
      %p111 = scmp.eq.s32.totalorder %s24, 0
      %p112 = por %p110, %p111
      %p113 = scmp.ne.s32.totalorder %s105, %s107
      %p114 = scmp.eq.s32.totalorder %s29, 3
      %p115 = por %p113, %p114
      %p116 = scmp.ne.s32.totalorder %s107, %s108
      %p117 = scmp.eq.s32.totalorder %s29, 0
      %p118 = por %p116, %p117
      %p119 = scmp.ne.s32.totalorder %s107, %s108
      %p120 = scmp.eq.s32.totalorder %s30, 3
      %p121 = por %p119, %p120
      %p123 = scmp.ne.s32.totalorder %s108, %s122
      %p124 = scmp.eq.s32.totalorder %s30, 0
      %p125 = por %p123, %p124
      %s127 = sadd.s32 %s126, 1
      %p130 = scmp.eq.s32.totalorder %s24, 3
      %p131 = scmp.ne.s32.totalorder %s126, %s128
      %p132 = scmp.eq.s32.totalorder %s24, 0
      %p133 = por %p131, %p132
      %p134 = scmp.ne.s32.totalorder %s126, %s128
      %p135 = scmp.eq.s32.totalorder %s29, 3
      %p136 = por %p134, %p135
      %p137 = scmp.ne.s32.totalorder %s128, %s129
      %p138 = scmp.eq.s32.totalorder %s29, 0
      %p139 = por %p137, %p138
      %p140 = scmp.ne.s32.totalorder %s128, %s129
      %p141 = scmp.eq.s32.totalorder %s30, 3
      %p142 = por %p140, %p141
      %p144 = scmp.ne.s32.totalorder %s129, %s143
      %p145 = scmp.eq.s32.totalorder %s30, 0
      %p146 = por %p144, %p145
      %s148 = sadd.s32 %s147, 1
      %p151 = scmp.eq.s32.totalorder %s24, 3
      %p152 = scmp.ne.s32.totalorder %s147, %s149
      %p153 = scmp.eq.s32.totalorder %s24, 0
      %p154 = por %p152, %p153
      %p155 = scmp.ne.s32.totalorder %s147, %s149
      %p156 = scmp.eq.s32.totalorder %s29, 3
      %p157 = por %p155, %p156
      %p158 = scmp.ne.s32.totalorder %s149, %s150
      %p159 = scmp.eq.s32.totalorder %s29, 0
      %p160 = por %p158, %p159
      %p161 = scmp.ne.s32.totalorder %s149, %s150
      %p162 = scmp.eq.s32.totalorder %s30, 3
      %p163 = por %p161, %p162
      %p165 = scmp.ne.s32.totalorder %s150, %s164
      %p166 = scmp.eq.s32.totalorder %s30, 0
      %p167 = por %p165, %p166
      %s169 = sadd.s32 %s168, 1
      %p172 = scmp.eq.s32.totalorder %s24, 3
      %p173 = scmp.ne.s32.totalorder %s168, %s170
      %p174 = scmp.eq.s32.totalorder %s24, 0
      %p175 = por %p173, %p174
      %p176 = scmp.ne.s32.totalorder %s168, %s170
      %p177 = scmp.eq.s32.totalorder %s29, 3
      %p178 = por %p176, %p177
      %p179 = scmp.ne.s32.totalorder %s170, %s171
      %p180 = scmp.eq.s32.totalorder %s29, 0
      %p181 = por %p179, %p180
      %p182 = scmp.ne.s32.totalorder %s170, %s171
      %p183 = scmp.eq.s32.totalorder %s30, 3
      %p184 = por %p182, %p183
      %p186 = scmp.ne.s32.totalorder %s171, %s185
      %p187 = scmp.eq.s32.totalorder %s30, 0
      %p188 = por %p186, %p187
      %s190 = sadd.s32 %s189, 1
      %p193 = scmp.eq.s32.totalorder %s24, 3
      %p194 = scmp.ne.s32.totalorder %s189, %s191
      %p195 = scmp.eq.s32.totalorder %s24, 0
      %p196 = por %p194, %p195
      %p197 = scmp.ne.s32.totalorder %s189, %s191
      %p198 = scmp.eq.s32.totalorder %s29, 3
      %p199 = por %p197, %p198
      %p200 = scmp.ne.s32.totalorder %s191, %s192
      %p201 = scmp.eq.s32.totalorder %s29, 0
      %p202 = por %p200, %p201
      %p203 = scmp.ne.s32.totalorder %s191, %s192
      %p204 = scmp.eq.s32.totalorder %s30, 3
      %p205 = por %p203, %p204
      %p207 = scmp.ne.s32.totalorder %s192, %s206
      %p208 = scmp.eq.s32.totalorder %s30, 0
      %p209 = por %p207, %p208
      %s211 = sadd.s32 %s210, 1
      %p214 = scmp.eq.s32.totalorder %s24, 3
      %p215 = scmp.ne.s32.totalorder %s210, %s212
      %p216 = scmp.eq.s32.totalorder %s24, 0
      %p217 = por %p215, %p216
      %p218 = scmp.ne.s32.totalorder %s210, %s212
      %p219 = scmp.eq.s32.totalorder %s29, 3
      %p220 = por %p218, %p219
      %p221 = scmp.ne.s32.totalorder %s212, %s213
      %p222 = scmp.eq.s32.totalorder %s29, 0
      %p223 = por %p221, %p222
      %p224 = scmp.ne.s32.totalorder %s212, %s213
      %p225 = scmp.eq.s32.totalorder %s30, 3
      %p226 = por %p224, %p225
      %p228 = scmp.ne.s32.totalorder %s213, %s227
      %p229 = scmp.eq.s32.totalorder %s30, 0
      %p230 = por %p228, %p229
      %s232 = sadd.s32 %s231, 1
      %p235 = scmp.eq.s32.totalorder %s24, 3
      %p236 = scmp.ne.s32.totalorder %s231, %s233
      %p237 = scmp.eq.s32.totalorder %s24, 0
      %p238 = por %p236, %p237
      %p239 = scmp.ne.s32.totalorder %s231, %s233
      %p240 = scmp.eq.s32.totalorder %s29, 3
      %p241 = por %p239, %p240
      %p242 = scmp.ne.s32.totalorder %s233, %s234
      %p243 = scmp.eq.s32.totalorder %s29, 0
      %p244 = por %p242, %p243
      %p245 = scmp.ne.s32.totalorder %s233, %s234
      %p246 = scmp.eq.s32.totalorder %s30, 3
      %p247 = por %p245, %p246
      %p249 = scmp.ne.s32.totalorder %s234, %s248
      %p250 = scmp.eq.s32.totalorder %s30, 0
      %p251 = por %p249, %p250
      %s252 = ssub.s32 %s24, %s31
      %p253 = scmp.eq.s32.totalorder %s252, 0
      %s255 = sadd.s32 %s254, 1
      %s256 = scalar_select %p253, %s254, %s255
      %p259 = pneg %p253
      %p260 = scmp.eq.s32.totalorder %s24, 3
      %p261 = por %p259, %p260
      %p262 = scmp.ne.s32.totalorder %s254, %s257
      %p263 = scmp.eq.s32.totalorder %s24, 0
      %p264 = por %p262, %p263
      %p265 = scmp.ne.s32.totalorder %s254, %s257
      %p266 = scmp.eq.s32.totalorder %s29, 3
      %p267 = por %p265, %p266
      %p268 = scmp.ne.s32.totalorder %s257, %s258
      %p269 = scmp.eq.s32.totalorder %s29, 0
      %p270 = por %p268, %p269
      %p271 = scmp.ne.s32.totalorder %s257, %s258
      %p272 = scmp.eq.s32.totalorder %s30, 3
      %p273 = por %p271, %p272
      %p275 = scmp.ne.s32.totalorder %s258, %s274
      %p276 = scmp.eq.s32.totalorder %s30, 0
      %p277 = por %p275, %p276
      %p278 = scmp.le.s32.totalorder 1, %s24
      %p279 = scmp.lt.s32.totalorder %s24, 5
      %p280 = pnand %p278, %p279
      %p281 = pneg %p280
      // Predicated region
      $region9: #{tpu_custom_call.1} parent=5 // pred_check
        _
      $region10: #{tpu_custom_call.1} parent=5 // pred_check_branch
        %283 = sbr.rel (%p280) target = $region12
      $region11: #{tpu_custom_call.1} parent=5 // pred_region
        %s284 = ssub.s32 %s24, 1
        // Predicated region
        $region13: #{tpu_custom_call.1} parent=11 // pred_check
          %p285 = pneg %p97
        $region14: #{tpu_custom_call.1} parent=11 // pred_check_branch
          %287 = sbr.rel (%p285) target = $region16
        $region15: #{tpu_custom_call.1} parent=11 // pred_region
          %289 = vsyncadd [#allocation6], 0
          %s290 = sshll.u32 %s2, 4
          %s291 = int_to_ptr.hbm [resolvable:$true] %s290
          %s292 = sshll.u32 [#allocation5], 4
          %s293 = int_to_ptr.vmem [resolvable:$true] %s292
          %298 = dma.hbm_to_vmem [thread:$0]  %s291, 128, %s293, [#allocation6], 64, 64, 4
        $region16: #{tpu_custom_call.1} parent=11 // pred_fallthru
          _
        // Predicated region
        $region17: #{tpu_custom_call.1} parent=11 // pred_check
          %p299 = pneg %p118
        $region18: #{tpu_custom_call.1} parent=11 // pred_check_branch
          %301 = sbr.rel (%p299) target = $region20
        $region19: #{tpu_custom_call.1} parent=11 // pred_region
          _
        $region20: #{tpu_custom_call.1} parent=11 // pred_fallthru
          _
        // Predicated region
        $region21: #{tpu_custom_call.1} parent=11 // pred_check
          %p302 = pneg %p139
        $region22: #{tpu_custom_call.1} parent=11 // pred_check_branch
          %304 = sbr.rel (%p302) target = $region24
        $region23: #{tpu_custom_call.1} parent=11 // pred_region
          _
        $region24: #{tpu_custom_call.1} parent=11 // pred_fallthru
          _
        // Predicated region
        $region25: #{tpu_custom_call.1} parent=11 // pred_check
          %p305 = pneg %p160
        $region26: #{tpu_custom_call.1} parent=11 // pred_check_branch
          %307 = sbr.rel (%p305) target = $region28
        $region27: #{tpu_custom_call.1} parent=11 // pred_region
          %309 = vsyncadd [#allocation6], 0
          %s310 = sshll.u32 %s5, 4
          %s311 = int_to_ptr.hbm [resolvable:$true] %s310
          %s312 = sshll.u32 [#allocation7], 4
          %s313 = int_to_ptr.vmem [resolvable:$true] %s312
          %318 = dma.hbm_to_vmem [thread:$0]  %s311, 144, %s313, [#allocation6], 48, 48, 3
        $region28: #{tpu_custom_call.1} parent=11 // pred_fallthru
          _
        // Predicated region
        $region29: #{tpu_custom_call.1} parent=11 // pred_check
          %p319 = pneg %p181
        $region30: #{tpu_custom_call.1} parent=11 // pred_check_branch
          %321 = sbr.rel (%p319) target = $region32
        $region31: #{tpu_custom_call.1} parent=11 // pred_region
          %323 = vsyncadd [#allocation9], 0
          %s324 = sshll.u32 %s6, 4
          %s325 = int_to_ptr.hbm [resolvable:$true] %s324
          %s326 = sshll.u32 [#allocation8], 4
          %s327 = int_to_ptr.vmem [resolvable:$true] %s326
          %332 = dma.hbm_to_vmem [thread:$0]  %s325, 1024, %s327, [#allocation9], 64, 64, 4
        $region32: #{tpu_custom_call.1} parent=11 // pred_fallthru
          _
        // Predicated region
        $region33: #{tpu_custom_call.1} parent=11 // pred_check
          %p333 = pneg %p202
        $region34: #{tpu_custom_call.1} parent=11 // pred_check_branch
          %335 = sbr.rel (%p333) target = $region36
        $region35: #{tpu_custom_call.1} parent=11 // pred_region
          _
        $region36: #{tpu_custom_call.1} parent=11 // pred_fallthru
          _
        // Predicated region
        $region37: #{tpu_custom_call.1} parent=11 // pred_check
          %p336 = pneg %p223
        $region38: #{tpu_custom_call.1} parent=11 // pred_check_branch
          %338 = sbr.rel (%p336) target = $region40
        $region39: #{tpu_custom_call.1} parent=11 // pred_region
          %340 = vsyncadd [#allocation9], 0
          %s341 = sshll.u32 %s8, 4
          %s342 = int_to_ptr.hbm [resolvable:$true] %s341
          %s343 = sshll.u32 [#allocation10], 4
          %s344 = int_to_ptr.vmem [resolvable:$true] %s343
          %349 = dma.hbm_to_vmem [thread:$0]  %s342, 1024, %s344, [#allocation9], 64, 64, 4
        $region40: #{tpu_custom_call.1} parent=11 // pred_fallthru
          _
        // Predicated region
        $region41: #{tpu_custom_call.1} parent=11 // pred_check
          %p350 = pneg %p244
        $region42: #{tpu_custom_call.1} parent=11 // pred_check_branch
          %352 = sbr.rel (%p350) target = $region44
        $region43: #{tpu_custom_call.1} parent=11 // pred_region
          _
        $region44: #{tpu_custom_call.1} parent=11 // pred_fallthru
          _
      $region12: #{tpu_custom_call.1} parent=5 // pred_fallthru
        _
      %p353 = scmp.lt.s32.totalorder %s24, 4
      // Predicated region
      $region45: #{tpu_custom_call.1} parent=5 // pred_check
        %p354 = pneg %p353
      $region46: #{tpu_custom_call.1} parent=5 // pred_check_branch
        %356 = sbr.rel (%p354) target = $region48
      $region47: #{tpu_custom_call.1} parent=5 // pred_region
        // Predicated region
        $region49: #{tpu_custom_call.1} parent=47 // pred_check
          %p357 = pneg %p44
        $region50: #{tpu_custom_call.1} parent=47 // pred_check_branch
          %359 = sbr.rel (%p357) target = $region52
        $region51: #{tpu_custom_call.1} parent=47 // pred_region
          %s360 = sand.u32 %s34, 1
          %s361 = scalar_lea.sflag [#allocation3], %s360
          %s362 = sand.u32 %s34, 1
          %s363 = smul.addr %s362, 256
          %s364 = scalar_lea.vmem [#allocation2], %s363
          %s365 = smul.u32 32, %s24
          %367 = vsyncadd %s361, 0
          %s368 = smul.addr %s365, 2
          %s369 = smul.addr %s368, 4
          %s370 = scalar_lea.hbm %s0, %s369
          %s371 = sshll.u32 %s370, 4
          %s372 = int_to_ptr.hbm [resolvable:$true] %s371
          %s373 = sshll.u32 %s364, 4
          %s374 = int_to_ptr.vmem [resolvable:$true] %s373
          %379 = dma.hbm_to_vmem [thread:$0]  %s372, 4096, %s374, %s361, 128, 128, 8
        $region52: #{tpu_custom_call.1} parent=47 // pred_fallthru
          _
        // Predicated region
        $region53: #{tpu_custom_call.1} parent=47 // pred_check
          %p380 = pneg %p70
        $region54: #{tpu_custom_call.1} parent=47 // pred_check_branch
          %382 = sbr.rel (%p380) target = $region56
        $region55: #{tpu_custom_call.1} parent=47 // pred_region
          %s383 = smul.u32 32, %s24
          %p384 = scmp.lt.s32.totalorder %s383, 127
          %s385 = scalar_select %p384, %s383, 127
          %s386 = smul.addr %s385, 4
          %s387 = scalar_lea.vmem %s1, %s386
          %s388 = smul.u32 32, %s24
        $region56: #{tpu_custom_call.1} parent=47 // pred_fallthru
          _
      $region48: #{tpu_custom_call.1} parent=5 // pred_fallthru
        _
      %p389 = scmp.le.s32.totalorder 1, %s24
      %p390 = scmp.lt.s32.totalorder %s24, 5
      %p391 = pnand %p389, %p390
      %p392 = pneg %p391
      // Predicated region
      $region57: #{tpu_custom_call.1} parent=5 // pred_check
        _
      $region58: #{tpu_custom_call.1} parent=5 // pred_check_branch
        %394 = sbr.rel (%p391) target = $region60
      $region59: #{tpu_custom_call.1} parent=5 // pred_region
        %s395 = ssub.s32 %s24, 1
        %s396 = sand.u32 %s37, 1
        %s397 = scalar_lea.sflag [#allocation3], %s396
        %s398 = sand.u32 %s37, 1
        %s399 = smul.addr %s398, 256
        %s400 = scalar_lea.vmem [#allocation2], %s399
        // Predicated region
        $region61: #{tpu_custom_call.1} parent=59 // pred_check
          %p401 = pneg %p50
        $region62: #{tpu_custom_call.1} parent=59 // pred_check_branch
          %403 = sbr.rel (%p401) target = $region64
        $region63: #{tpu_custom_call.1} parent=59 // pred_region
          %405 = dma.done %s397, 4096
        $region64: #{tpu_custom_call.1} parent=59 // pred_fallthru
          _
        // Predicated region
        $region65: #{tpu_custom_call.1} parent=59 // pred_check
          %p406 = pneg %p97
        $region66: #{tpu_custom_call.1} parent=59 // pred_check_branch
          %408 = sbr.rel (%p406) target = $region68
        $region67: #{tpu_custom_call.1} parent=59 // pred_region
          %410 = dma.done [#allocation6], 128
        $region68: #{tpu_custom_call.1} parent=59 // pred_fallthru
          _
        // Predicated region
        $region69: #{tpu_custom_call.1} parent=59 // pred_check
          %p411 = pneg %p160
        $region70: #{tpu_custom_call.1} parent=59 // pred_check_branch
          %413 = sbr.rel (%p411) target = $region72
        $region71: #{tpu_custom_call.1} parent=59 // pred_region
          %415 = dma.done [#allocation6], 144
        $region72: #{tpu_custom_call.1} parent=59 // pred_fallthru
          _
        // Predicated region
        $region73: #{tpu_custom_call.1} parent=59 // pred_check
          %p416 = pneg %p181
        $region74: #{tpu_custom_call.1} parent=59 // pred_check_branch
          %418 = sbr.rel (%p416) target = $region76
        $region75: #{tpu_custom_call.1} parent=59 // pred_region
          %420 = dma.done [#allocation9], 1024
        $region76: #{tpu_custom_call.1} parent=59 // pred_fallthru
          _
        // Predicated region
        $region77: #{tpu_custom_call.1} parent=59 // pred_check
          %p421 = pneg %p223
        $region78: #{tpu_custom_call.1} parent=59 // pred_check_branch
          %423 = sbr.rel (%p421) target = $region80
        $region79: #{tpu_custom_call.1} parent=59 // pred_region
          %425 = dma.done [#allocation9], 1024
        $region80: #{tpu_custom_call.1} parent=59 // pred_fallthru
          _
        %s426 = sand.u32 %s37, 1
        %s427 = scalar_lea.sflag [#allocation3], %s426
        %s428 = sand.u32 %s37, 1
        %s429 = smul.addr %s428, 256
        %s430 = scalar_lea.vmem [#allocation2], %s429
        %p431 = pneg %p50
        %p432 = pneg %p47
        %s433 = smul.u32 32, %s29
        %p434 = scmp.lt.s32.totalorder %s433, 127
        %s435 = scalar_select %p434, %s433, 127
        %s436 = smul.addr %s435, 4
        %s437 = scalar_lea.vmem %s1, %s436
        %p438 = pneg %p76
        %p439 = pneg %p73
        %p440 = pneg %p97
        %p441 = pneg %p94
        %p442 = pneg %p118
        %p443 = pneg %p115
        %p444 = pneg %p139
        %p445 = pneg %p136
        %p446 = pneg %p160
        %p447 = pneg %p157
        %p448 = pneg %p181
        %p449 = pneg %p178
        %p450 = pneg %p202
        %p451 = pneg %p199
        %p452 = pneg %p223
        %p453 = pneg %p220
        %p454 = pneg %p244
        %p455 = pneg %p241
        %p456 = pneg %p270
        %p457 = pneg %p267
        %s458 = sand.u32 %s257, 1
        %s459 = scalar_lea.sflag [#allocation4], %s458
        %s460 = sand.u32 %s257, 1
        %s461 = smul.addr %s460, 16
        %s462 = scalar_lea.vmem [#allocation11], %s461
        %s463 = smul.u32 32, %s29
        %s464 = smul.u32 32, %s29
        %p465 = scmp.lt.s32.totalorder %s464, 127
        %s466 = scalar_select %p465, %s464, 127
        %s467 = smul.addr %s466, 4
        %s468 = scalar_lea.vmem %s1, %s467
        %s469 = smul.u32 32, %s29
        %s470 = smul.u32 2, %s29
        %v472 = vld [vmem:[%s400] sm:$0xff]
        %v473 = vld [vmem:[%s400 + $0x8] sm:$0xff]
        %v474 = vld [vmem:[%s400 + $0x10] sm:$0xff]
        %v475 = vld [vmem:[%s400 + $0x18] sm:$0xff]
        %v476 = vld [vmem:[%s400 + $0x20] sm:$0xff]
        %v477 = vld [vmem:[%s400 + $0x28] sm:$0xff]
        %v478 = vld [vmem:[%s400 + $0x30] sm:$0xff]
        %v479 = vld [vmem:[%s400 + $0x38] sm:$0xff]
        %v480 = vld [vmem:[%s400 + $0x40] sm:$0xff]
        %v481 = vld [vmem:[%s400 + $0x48] sm:$0xff]
        %v482 = vld [vmem:[%s400 + $0x50] sm:$0xff]
        %v483 = vld [vmem:[%s400 + $0x58] sm:$0xff]
        %v484 = vld [vmem:[%s400 + $0x60] sm:$0xff]
        %v485 = vld [vmem:[%s400 + $0x68] sm:$0xff]
        %v486 = vld [vmem:[%s400 + $0x70] sm:$0xff]
        %v487 = vld [vmem:[%s400 + $0x78] sm:$0xff]
        %v488 = vld [vmem:[%s400 + $0x80] sm:$0xff]
        %v489 = vld [vmem:[%s400 + $0x88] sm:$0xff]
        %v490 = vld [vmem:[%s400 + $0x90] sm:$0xff]
        %v491 = vld [vmem:[%s400 + $0x98] sm:$0xff]
        %v492 = vld [vmem:[%s400 + $0xa0] sm:$0xff]
        %v493 = vld [vmem:[%s400 + $0xa8] sm:$0xff]
        %v494 = vld [vmem:[%s400 + $0xb0] sm:$0xff]
        %v495 = vld [vmem:[%s400 + $0xb8] sm:$0xff]
        %v496 = vld [vmem:[%s400 + $0xc0] sm:$0xff]
        %v497 = vld [vmem:[%s400 + $0xc8] sm:$0xff]
        %v498 = vld [vmem:[%s400 + $0xd0] sm:$0xff]
        %v499 = vld [vmem:[%s400 + $0xd8] sm:$0xff]
        %v500 = vld [vmem:[%s400 + $0xe0] sm:$0xff]
        %v501 = vld [vmem:[%s400 + $0xe8] sm:$0xff]
        %v502 = vld [vmem:[%s400 + $0xf0] sm:$0xff]
        %v503 = vld [vmem:[%s400 + $0xf8] sm:$0xff]
        %v504 = vld [vmem:[%s468] sm:$0xf]
        %v505 = vld [vmem:[%s468 + $0x4] sm:$0xf]
        %v506 = vld [vmem:[%s468 + $0x8] sm:$0xf]
        %v507 = vld [vmem:[%s468 + $0xc] sm:$0xf]
        %v508 = vld [vmem:[%s468 + $0x10] sm:$0xf]
        %v509 = vld [vmem:[%s468 + $0x14] sm:$0xf]
        %v510 = vld [vmem:[%s468 + $0x18] sm:$0xf]
        %v511 = vld [vmem:[%s468 + $0x1c] sm:$0xf]
        %v512 = vld [vmem:[%s468 + $0x20] sm:$0xf]
        %v513 = vld [vmem:[%s468 + $0x24] sm:$0xf]
        %v514 = vld [vmem:[%s468 + $0x28] sm:$0xf]
        %v515 = vld [vmem:[%s468 + $0x2c] sm:$0xf]
        %v516 = vld [vmem:[%s468 + $0x30] sm:$0xf]
        %v517 = vld [vmem:[%s468 + $0x34] sm:$0xf]
        %v518 = vld [vmem:[%s468 + $0x38] sm:$0xf]
        %v519 = vld [vmem:[%s468 + $0x3c] sm:$0xf]
        %v520 = vld [vmem:[%s468 + $0x40] sm:$0xf]
        %v521 = vld [vmem:[%s468 + $0x44] sm:$0xf]
        %v522 = vld [vmem:[%s468 + $0x48] sm:$0xf]
        %v523 = vld [vmem:[%s468 + $0x4c] sm:$0xf]
        %v524 = vld [vmem:[%s468 + $0x50] sm:$0xf]
        %v525 = vld [vmem:[%s468 + $0x54] sm:$0xf]
        %v526 = vld [vmem:[%s468 + $0x58] sm:$0xf]
        %v527 = vld [vmem:[%s468 + $0x5c] sm:$0xf]
        %v528 = vld [vmem:[%s468 + $0x60] sm:$0xf]
        %v529 = vld [vmem:[%s468 + $0x64] sm:$0xf]
        %v530 = vld [vmem:[%s468 + $0x68] sm:$0xf]
        %v531 = vld [vmem:[%s468 + $0x6c] sm:$0xf]
        %v532 = vld [vmem:[%s468 + $0x70] sm:$0xf]
        %v533 = vld [vmem:[%s468 + $0x74] sm:$0xf]
        %v534 = vld [vmem:[%s468 + $0x78] sm:$0xf]
        %v535 = vld [vmem:[%s468 + $0x7c] sm:$0xf]
        %v536 = vunpack.c.l.bf16 %v472
        %v537 = vunpack.c.h.bf16 %v472
        %v538 = vunpack.c.l.bf16 %v473
        %v539 = vunpack.c.h.bf16 %v473
        %v540 = vunpack.c.l.bf16 %v474
        %v541 = vunpack.c.h.bf16 %v474
        %v542 = vunpack.c.l.bf16 %v475
        %v543 = vunpack.c.h.bf16 %v475
        %v544 = vunpack.c.l.bf16 %v476
        %v545 = vunpack.c.h.bf16 %v476
        %v546 = vunpack.c.l.bf16 %v477
        %v547 = vunpack.c.h.bf16 %v477
        %v548 = vunpack.c.l.bf16 %v478
        %v549 = vunpack.c.h.bf16 %v478
        %v550 = vunpack.c.l.bf16 %v479
        %v551 = vunpack.c.h.bf16 %v479
        %v552 = vunpack.c.l.bf16 %v480
        %v553 = vunpack.c.h.bf16 %v480
        %v554 = vunpack.c.l.bf16 %v481
        %v555 = vunpack.c.h.bf16 %v481
        %v556 = vunpack.c.l.bf16 %v482
        %v557 = vunpack.c.h.bf16 %v482
        %v558 = vunpack.c.l.bf16 %v483
        %v559 = vunpack.c.h.bf16 %v483
        %v560 = vunpack.c.l.bf16 %v484
        %v561 = vunpack.c.h.bf16 %v484
        %v562 = vunpack.c.l.bf16 %v485
        %v563 = vunpack.c.h.bf16 %v485
        %v564 = vunpack.c.l.bf16 %v486
        %v565 = vunpack.c.h.bf16 %v486
        %v566 = vunpack.c.l.bf16 %v487
        %v567 = vunpack.c.h.bf16 %v487
        %v568 = vunpack.c.l.bf16 %v488
        %v569 = vunpack.c.h.bf16 %v488
        %v570 = vunpack.c.l.bf16 %v489
        %v571 = vunpack.c.h.bf16 %v489
        %v572 = vunpack.c.l.bf16 %v490
        %v573 = vunpack.c.h.bf16 %v490
        %v574 = vunpack.c.l.bf16 %v491
        %v575 = vunpack.c.h.bf16 %v491
        %v576 = vunpack.c.l.bf16 %v492
        %v577 = vunpack.c.h.bf16 %v492
        %v578 = vunpack.c.l.bf16 %v493
        %v579 = vunpack.c.h.bf16 %v493
        %v580 = vunpack.c.l.bf16 %v494
        %v581 = vunpack.c.h.bf16 %v494
        %v582 = vunpack.c.l.bf16 %v495
        %v583 = vunpack.c.h.bf16 %v495
        %v584 = vunpack.c.l.bf16 %v496
        %v585 = vunpack.c.h.bf16 %v496
        %v586 = vunpack.c.l.bf16 %v497
        %v587 = vunpack.c.h.bf16 %v497
        %v588 = vunpack.c.l.bf16 %v498
        %v589 = vunpack.c.h.bf16 %v498
        %v590 = vunpack.c.l.bf16 %v499
        %v591 = vunpack.c.h.bf16 %v499
        %v592 = vunpack.c.l.bf16 %v500
        %v593 = vunpack.c.h.bf16 %v500
        %v594 = vunpack.c.l.bf16 %v501
        %v595 = vunpack.c.h.bf16 %v501
        %v596 = vunpack.c.l.bf16 %v502
        %v597 = vunpack.c.h.bf16 %v502
        %v598 = vunpack.c.l.bf16 %v503
        %v599 = vunpack.c.h.bf16 %v503
        %v600 = vadd.f32 %v536, %v537
        %601 = vadd.xlane.f32.xlu0 %v600
        %v602 = vpop.xlane.xlu0 %601
        %v603 = vadd.f32 %v538, %v539
        %604 = vadd.xlane.f32.xlu0 %v603
        %v605 = vpop.xlane.xlu0 %604
        %v606 = vadd.f32 %v540, %v541
        %607 = vadd.xlane.f32.xlu0 %v606
        %v608 = vpop.xlane.xlu0 %607
        %v609 = vadd.f32 %v542, %v543
        %610 = vadd.xlane.f32.xlu0 %v609
        %v611 = vpop.xlane.xlu0 %610
        %v612 = vadd.f32 %v544, %v545
        %613 = vadd.xlane.f32.xlu0 %v612
        %v614 = vpop.xlane.xlu0 %613
        %v615 = vadd.f32 %v546, %v547
        %616 = vadd.xlane.f32.xlu0 %v615
        %v617 = vpop.xlane.xlu0 %616
        %v618 = vadd.f32 %v548, %v549
        %619 = vadd.xlane.f32.xlu0 %v618
        %v620 = vpop.xlane.xlu0 %619
        %v621 = vadd.f32 %v550, %v551
        %622 = vadd.xlane.f32.xlu0 %v621
        %v623 = vpop.xlane.xlu0 %622
        %v624 = vadd.f32 %v552, %v553
        %625 = vadd.xlane.f32.xlu0 %v624
        %v626 = vpop.xlane.xlu0 %625
        %v627 = vadd.f32 %v554, %v555
        %628 = vadd.xlane.f32.xlu0 %v627
        %v629 = vpop.xlane.xlu0 %628
        %v630 = vadd.f32 %v556, %v557
        %631 = vadd.xlane.f32.xlu0 %v630
        %v632 = vpop.xlane.xlu0 %631
        %v633 = vadd.f32 %v558, %v559
        %634 = vadd.xlane.f32.xlu0 %v633
        %v635 = vpop.xlane.xlu0 %634
        %v636 = vadd.f32 %v560, %v561
        %637 = vadd.xlane.f32.xlu0 %v636
        %v638 = vpop.xlane.xlu0 %637
        %v639 = vadd.f32 %v562, %v563
        %640 = vadd.xlane.f32.xlu0 %v639
        %v641 = vpop.xlane.xlu0 %640
        %v642 = vadd.f32 %v564, %v565
        %643 = vadd.xlane.f32.xlu0 %v642
        %v644 = vpop.xlane.xlu0 %643
        %v645 = vadd.f32 %v566, %v567
        %646 = vadd.xlane.f32.xlu0 %v645
        %v647 = vpop.xlane.xlu0 %646
        %v648 = vadd.f32 %v568, %v569
        %649 = vadd.xlane.f32.xlu0 %v648
        %v650 = vpop.xlane.xlu0 %649
        %v651 = vadd.f32 %v570, %v571
        %652 = vadd.xlane.f32.xlu0 %v651
        %v653 = vpop.xlane.xlu0 %652
        %v654 = vadd.f32 %v572, %v573
        %655 = vadd.xlane.f32.xlu0 %v654
        %v656 = vpop.xlane.xlu0 %655
        %v657 = vadd.f32 %v574, %v575
        %658 = vadd.xlane.f32.xlu0 %v657
        %v659 = vpop.xlane.xlu0 %658
        %v660 = vadd.f32 %v576, %v577
        %661 = vadd.xlane.f32.xlu0 %v660
        %v662 = vpop.xlane.xlu0 %661
        %v663 = vadd.f32 %v578, %v579
        %664 = vadd.xlane.f32.xlu0 %v663
        %v665 = vpop.xlane.xlu0 %664
        %v666 = vadd.f32 %v580, %v581
        %667 = vadd.xlane.f32.xlu0 %v666
        %v668 = vpop.xlane.xlu0 %667
        %v669 = vadd.f32 %v582, %v583
        %670 = vadd.xlane.f32.xlu0 %v669
        %v671 = vpop.xlane.xlu0 %670
        %v672 = vadd.f32 %v584, %v585
        %673 = vadd.xlane.f32.xlu0 %v672
        %v674 = vpop.xlane.xlu0 %673
        %v675 = vadd.f32 %v586, %v587
        %676 = vadd.xlane.f32.xlu0 %v675
        %v677 = vpop.xlane.xlu0 %676
        %v678 = vadd.f32 %v588, %v589
        %679 = vadd.xlane.f32.xlu0 %v678
        %v680 = vpop.xlane.xlu0 %679
        %v681 = vadd.f32 %v590, %v591
        %682 = vadd.xlane.f32.xlu0 %v681
        %v683 = vpop.xlane.xlu0 %682
        %v684 = vadd.f32 %v592, %v593
        %685 = vadd.xlane.f32.xlu0 %v684
        %v686 = vpop.xlane.xlu0 %685
        %v687 = vadd.f32 %v594, %v595
        %688 = vadd.xlane.f32.xlu0 %v687
        %v689 = vpop.xlane.xlu0 %688
        %v690 = vadd.f32 %v596, %v597
        %691 = vadd.xlane.f32.xlu0 %v690
        %v692 = vpop.xlane.xlu0 %691
        %v693 = vadd.f32 %v598, %v599
        %694 = vadd.xlane.f32.xlu0 %v693
        %v695 = vpop.xlane.xlu0 %694
        %v696 = vld [vmem:[#allocation5] sm:$0xf]
        %v697 = vld [vmem:[#allocation5 + $0x4] sm:$0xf]
        %v698 = vld [vmem:[%s3] sm:$0x1]
        %v700 = vperm.slane %v698, 0
        %v734 = vunpack.c.l.b16 %v504
        %v735 = vunpack.c.l.b16 %v505
        %v736 = vunpack.c.l.b16 %v506
        %v737 = vunpack.c.l.b16 %v507
        %v738 = vunpack.c.l.b16 %v508
        %v739 = vunpack.c.l.b16 %v509
        %v740 = vunpack.c.l.b16 %v510
        %v741 = vunpack.c.l.b16 %v511
        %v742 = vunpack.c.l.b16 %v512
        %v743 = vunpack.c.l.b16 %v513
        %v744 = vunpack.c.l.b16 %v514
        %v745 = vunpack.c.l.b16 %v515
        %v746 = vunpack.c.l.b16 %v516
        %v747 = vunpack.c.l.b16 %v517
        %v748 = vunpack.c.l.b16 %v518
        %v749 = vunpack.c.l.b16 %v519
        %v750 = vunpack.c.l.b16 %v520
        %v751 = vunpack.c.l.b16 %v521
        %v752 = vunpack.c.l.b16 %v522
        %v753 = vunpack.c.l.b16 %v523
        %v754 = vunpack.c.l.b16 %v524
        %v755 = vunpack.c.l.b16 %v525
        %v756 = vunpack.c.l.b16 %v526
        %v757 = vunpack.c.l.b16 %v527
        %v758 = vunpack.c.l.b16 %v528
        %v759 = vunpack.c.l.b16 %v529
        %v760 = vunpack.c.l.b16 %v530
        %v761 = vunpack.c.l.b16 %v531
        %v762 = vunpack.c.l.b16 %v532
        %v763 = vunpack.c.l.b16 %v533
        %v764 = vunpack.c.l.b16 %v534
        %v765 = vunpack.c.l.b16 %v535
        %v766 = vpack.c.b16 %v735, %v734
        %v767 = vpack.c.b16 %v737, %v736
        %v768 = vpack.c.b16 %v739, %v738
        %v769 = vpack.c.b16 %v741, %v740
        %v770 = vpack.c.b16 %v743, %v742
        %v771 = vpack.c.b16 %v745, %v744
        %v772 = vpack.c.b16 %v747, %v746
        %v773 = vpack.c.b16 %v749, %v748
        %v774 = vpack.c.b16 %v751, %v750
        %v775 = vpack.c.b16 %v753, %v752
        %v776 = vpack.c.b16 %v755, %v754
        %v777 = vpack.c.b16 %v757, %v756
        %v778 = vpack.c.b16 %v759, %v758
        %v779 = vpack.c.b16 %v761, %v760
        %v780 = vpack.c.b16 %v763, %v762
        %v781 = vpack.c.b16 %v765, %v764
        %v784 = vunpack.c.l.b16 %v696
        %v785 = vunpack.c.l.b16 %v697
        %v786 = vpack.c.b16 %v785, %v784
        %vm788 = vcmask 130048
        %v790 = vsel %vm788, %v766, 0
        %v793 = vsel %vm788, %v767, 0
        %v796 = vsel %vm788, %v768, 0
        %v799 = vsel %vm788, %v769, 0
        %v802 = vsel %vm788, %v770, 0
        %v805 = vsel %vm788, %v771, 0
        %v808 = vsel %vm788, %v772, 0
        %v811 = vsel %vm788, %v773, 0
        %v814 = vsel %vm788, %v774, 0
        %v817 = vsel %vm788, %v775, 0
        %v820 = vsel %vm788, %v776, 0
        %v823 = vsel %vm788, %v777, 0
        %v826 = vsel %vm788, %v778, 0
        %v829 = vsel %vm788, %v779, 0
        %v832 = vsel %vm788, %v780, 0
        %v835 = vsel %vm788, %v781, 0
        %837 = vmatpush.bf16.msra.mxu0 0
        %838 = vmatpush.bf16.msra.mxu0 0
        %839 = vmatpush.bf16.msra.mxu0 0
        %840 = vmatpush.bf16.msra.mxu0 0
        %841 = vmatpush.bf16.msra.mxu0 0
        %842 = vmatpush.bf16.msra.mxu0 0
        %843 = vmatpush.bf16.msra.mxu0 0
        %844 = vmatpush.bf16.msra.mxu0 %v786
        %845 = vmatmul.bf16.gmra.mxu0 %v790
        %v846 = vpop.f32.mrf.mxu0
        %v847 = vadd.f32 %v700, %v846
        %v848 = vpop.f32.mrf.mxu0
        %v849 = vadd.f32 %v700, %v848
        %850 = vmatmul.bf16.gmra.mxu0 %v793
        %v851 = vpop.f32.mrf.mxu0
        %v852 = vadd.f32 %v700, %v851
        %v853 = vpop.f32.mrf.mxu0
        %v854 = vadd.f32 %v700, %v853
        %855 = vmatmul.bf16.gmra.mxu0 %v796
        %v856 = vpop.f32.mrf.mxu0
        %v857 = vadd.f32 %v700, %v856
        %v858 = vpop.f32.mrf.mxu0
        %v859 = vadd.f32 %v700, %v858
        %860 = vmatmul.bf16.gmra.mxu0 %v799
        %v861 = vpop.f32.mrf.mxu0
        %v862 = vadd.f32 %v700, %v861
        %v863 = vpop.f32.mrf.mxu0
        %v864 = vadd.f32 %v700, %v863
        %865 = vmatmul.bf16.gmra.mxu0 %v802
        %v866 = vpop.f32.mrf.mxu0
        %v867 = vadd.f32 %v700, %v866
        %v868 = vpop.f32.mrf.mxu0
        %v869 = vadd.f32 %v700, %v868
        %870 = vmatmul.bf16.gmra.mxu0 %v805
        %v871 = vpop.f32.mrf.mxu0
        %v872 = vadd.f32 %v700, %v871
        %v873 = vpop.f32.mrf.mxu0
        %v874 = vadd.f32 %v700, %v873
        %875 = vmatmul.bf16.gmra.mxu0 %v808
        %v876 = vpop.f32.mrf.mxu0
        %v877 = vadd.f32 %v700, %v876
        %v878 = vpop.f32.mrf.mxu0
        %v879 = vadd.f32 %v700, %v878
        %880 = vmatmul.bf16.gmra.mxu0 %v811
        %v881 = vpop.f32.mrf.mxu0
        %v882 = vadd.f32 %v700, %v881
        %v883 = vpop.f32.mrf.mxu0
        %v884 = vadd.f32 %v700, %v883
        %885 = vmatmul.bf16.gmra.mxu0 %v814
        %v886 = vpop.f32.mrf.mxu0
        %v887 = vadd.f32 %v700, %v886
        %v888 = vpop.f32.mrf.mxu0
        %v889 = vadd.f32 %v700, %v888
        %890 = vmatmul.bf16.gmra.mxu0 %v817
        %v891 = vpop.f32.mrf.mxu0
        %v892 = vadd.f32 %v700, %v891
        %v893 = vpop.f32.mrf.mxu0
        %v894 = vadd.f32 %v700, %v893
        %895 = vmatmul.bf16.gmra.mxu0 %v820
        %v896 = vpop.f32.mrf.mxu0
        %v897 = vadd.f32 %v700, %v896
        %v898 = vpop.f32.mrf.mxu0
        %v899 = vadd.f32 %v700, %v898
        %900 = vmatmul.bf16.gmra.mxu0 %v823
        %v901 = vpop.f32.mrf.mxu0
        %v902 = vadd.f32 %v700, %v901
        %v903 = vpop.f32.mrf.mxu0
        %v904 = vadd.f32 %v700, %v903
        %905 = vmatmul.bf16.gmra.mxu0 %v826
        %v906 = vpop.f32.mrf.mxu0
        %v907 = vadd.f32 %v700, %v906
        %v908 = vpop.f32.mrf.mxu0
        %v909 = vadd.f32 %v700, %v908
        %910 = vmatmul.bf16.gmra.mxu0 %v829
        %v911 = vpop.f32.mrf.mxu0
        %v912 = vadd.f32 %v700, %v911
        %v913 = vpop.f32.mrf.mxu0
        %v914 = vadd.f32 %v700, %v913
        %915 = vmatmul.bf16.gmra.mxu0 %v832
        %v916 = vpop.f32.mrf.mxu0
        %v917 = vadd.f32 %v700, %v916
        %v918 = vpop.f32.mrf.mxu0
        %v919 = vadd.f32 %v700, %v918
        %920 = vmatmul.bf16.gmra.mxu0 %v835
        %v921 = vpop.f32.mrf.mxu0
        %v922 = vadd.f32 %v700, %v921
        %v923 = vpop.f32.mrf.mxu0
        %v924 = vadd.f32 %v700, %v923
        %925 = vdwg.mxu0
        %v926 = vpack.c.bf16 %v849, %v847
        %v927 = vpack.c.bf16 %v854, %v852
        %v928 = vpack.c.bf16 %v859, %v857
        %v929 = vpack.c.bf16 %v864, %v862
        %v930 = vpack.c.bf16 %v869, %v867
        %v931 = vpack.c.bf16 %v874, %v872
        %v932 = vpack.c.bf16 %v879, %v877
        %v933 = vpack.c.bf16 %v884, %v882
        %v934 = vpack.c.bf16 %v889, %v887
        %v935 = vpack.c.bf16 %v894, %v892
        %v936 = vpack.c.bf16 %v899, %v897
        %v937 = vpack.c.bf16 %v904, %v902
        %v938 = vpack.c.bf16 %v909, %v907
        %v939 = vpack.c.bf16 %v914, %v912
        %v940 = vpack.c.bf16 %v919, %v917
        %v941 = vpack.c.bf16 %v924, %v922
        %v942 = vld [vmem:[%s4] sm:$0xff]
        %v943 = vld [vmem:[%s4 + $0x8] sm:$0xf]
        %v944 = vld [vmem:[%s4 + $0xc] sm:$0xff]
        %v945 = vld [vmem:[%s4 + $0x14] sm:$0xf]
        %v946 = vld [vmem:[%s4 + $0x18] sm:$0xff]
        %v947 = vld [vmem:[%s4 + $0x20] sm:$0xf]
        %v948 = vld [vmem:[%s4 + $0x24] sm:$0xff]
        %v949 = vld [vmem:[%s4 + $0x2c] sm:$0xf]
        %v950 = vld [vmem:[%s4 + $0x30] sm:$0xff]
        %v951 = vld [vmem:[%s4 + $0x38] sm:$0xf]
        %v952 = vld [vmem:[%s4 + $0x3c] sm:$0xff]
        %v953 = vld [vmem:[%s4 + $0x44] sm:$0xf]
        %v954 = vld [vmem:[%s4 + $0x48] sm:$0xff]
        %v955 = vld [vmem:[%s4 + $0x50] sm:$0xf]
        %v956 = vld [vmem:[%s4 + $0x54] sm:$0xff]
        %v957 = vld [vmem:[%s4 + $0x5c] sm:$0xf]
        %v958 = vld [vmem:[%s4 + $0x60] sm:$0xff]
        %v959 = vld [vmem:[%s4 + $0x68] sm:$0xf]
        %v960 = vld [vmem:[%s4 + $0x6c] sm:$0xff]
        %v961 = vld [vmem:[%s4 + $0x74] sm:$0xf]
        %v962 = vld [vmem:[%s4 + $0x78] sm:$0xff]
        %v963 = vld [vmem:[%s4 + $0x80] sm:$0xf]
        %v964 = vld [vmem:[%s4 + $0x84] sm:$0xff]
        %v965 = vld [vmem:[%s4 + $0x8c] sm:$0xf]
        %v966 = vld [vmem:[%s4 + $0x90] sm:$0xff]
        %v967 = vld [vmem:[%s4 + $0x98] sm:$0xf]
        %v968 = vld [vmem:[%s4 + $0x9c] sm:$0xff]
        %v969 = vld [vmem:[%s4 + $0xa4] sm:$0xf]
        %v970 = vld [vmem:[%s4 + $0xa8] sm:$0xff]
        %v971 = vld [vmem:[%s4 + $0xb0] sm:$0xf]
        %v972 = vld [vmem:[%s4 + $0xb4] sm:$0xff]
        %v973 = vld [vmem:[%s4 + $0xbc] sm:$0xf]
        %v974 = vld [vmem:[#allocation7] sm:$0x7]
        %v976 = vperm.slane %v974, 0
        %v977 = vperm.slane %v974, 1
        %v978 = vperm.slane %v974, 2
        %v1014 = vunpack.c.l.b16 %v942
        %v1015 = vunpack.c.h.b16 %v942
        %v1016 = vunpack.c.l.b16 %v943
        %v1017 = vunpack.c.l.b16 %v944
        %v1018 = vunpack.c.h.b16 %v944
        %v1019 = vunpack.c.l.b16 %v945
        %v1020 = vunpack.c.l.b16 %v946
        %v1021 = vunpack.c.h.b16 %v946
        %v1022 = vunpack.c.l.b16 %v947
        %v1023 = vunpack.c.l.b16 %v948
        %v1024 = vunpack.c.h.b16 %v948
        %v1025 = vunpack.c.l.b16 %v949
        %v1026 = vunpack.c.l.b16 %v950
        %v1027 = vunpack.c.h.b16 %v950
        %v1028 = vunpack.c.l.b16 %v951
        %v1029 = vunpack.c.l.b16 %v952
        %v1030 = vunpack.c.h.b16 %v952
        %v1031 = vunpack.c.l.b16 %v953
        %v1032 = vunpack.c.l.b16 %v954
        %v1033 = vunpack.c.h.b16 %v954
        %v1034 = vunpack.c.l.b16 %v955
        %v1035 = vunpack.c.l.b16 %v956
        %v1036 = vunpack.c.h.b16 %v956
        %v1037 = vunpack.c.l.b16 %v957
        %v1038 = vunpack.c.l.b16 %v958
        %v1039 = vunpack.c.h.b16 %v958
        %v1040 = vunpack.c.l.b16 %v959
        %v1041 = vunpack.c.l.b16 %v960
        %v1042 = vunpack.c.h.b16 %v960
        %v1043 = vunpack.c.l.b16 %v961
        %v1044 = vunpack.c.l.b16 %v962
        %v1045 = vunpack.c.h.b16 %v962
        %v1046 = vunpack.c.l.b16 %v963
        %v1047 = vunpack.c.l.b16 %v964
        %v1048 = vunpack.c.h.b16 %v964
        %v1049 = vunpack.c.l.b16 %v965
        %v1050 = vunpack.c.l.b16 %v966
        %v1051 = vunpack.c.h.b16 %v966
        %v1052 = vunpack.c.l.b16 %v967
        %v1053 = vunpack.c.l.b16 %v968
        %v1054 = vunpack.c.h.b16 %v968
        %v1055 = vunpack.c.l.b16 %v969
        %v1056 = vunpack.c.l.b16 %v970
        %v1057 = vunpack.c.h.b16 %v970
        %v1058 = vunpack.c.l.b16 %v971
        %v1059 = vunpack.c.l.b16 %v972
        %v1060 = vunpack.c.h.b16 %v972
        %v1061 = vunpack.c.l.b16 %v973
        %v1062 = vpack.c.b16 %v1017, %v1014
        %v1063 = vpack.c.b16 %v1018, %v1015
        %v1064 = vpack.c.b16 %v1019, %v1016
        %v1065 = vpack.c.b16 %v1023, %v1020
        %v1066 = vpack.c.b16 %v1024, %v1021
        %v1067 = vpack.c.b16 %v1025, %v1022
        %v1068 = vpack.c.b16 %v1029, %v1026
        %v1069 = vpack.c.b16 %v1030, %v1027
        %v1070 = vpack.c.b16 %v1031, %v1028
        %v1071 = vpack.c.b16 %v1035, %v1032
        %v1072 = vpack.c.b16 %v1036, %v1033
        %v1073 = vpack.c.b16 %v1037, %v1034
        %v1074 = vpack.c.b16 %v1041, %v1038
        %v1075 = vpack.c.b16 %v1042, %v1039
        %v1076 = vpack.c.b16 %v1043, %v1040
        %v1077 = vpack.c.b16 %v1047, %v1044
        %v1078 = vpack.c.b16 %v1048, %v1045
        %v1079 = vpack.c.b16 %v1049, %v1046
        %v1080 = vpack.c.b16 %v1053, %v1050
        %v1081 = vpack.c.b16 %v1054, %v1051
        %v1082 = vpack.c.b16 %v1055, %v1052
        %v1083 = vpack.c.b16 %v1059, %v1056
        %v1084 = vpack.c.b16 %v1060, %v1057
        %v1085 = vpack.c.b16 %v1061, %v1058
        %1110 = vmatpush.bf16.msra.mxu0 %v1083
        %1111 = vmatpush.bf16.msra.mxu0 %v1080
        %1112 = vmatpush.bf16.msra.mxu0 %v1077
        %1113 = vmatpush.bf16.msra.mxu0 %v1074
        %1114 = vmatpush.bf16.msra.mxu0 %v1071
        %1115 = vmatpush.bf16.msra.mxu0 %v1068
        %1116 = vmatpush.bf16.msra.mxu0 %v1065
        %1117 = vmatpush.bf16.msra.mxu0 %v1062
        %1118 = vmatmul.bf16.gmra.mxu0 %v926
        %v1119 = vpop.f32.mrf.mxu0
        %v1120 = vadd.f32 %v976, %v1119
        %v1121 = vpop.f32.mrf.mxu0
        %v1122 = vadd.f32 %v976, %v1121
        %1123 = vmatmul.bf16.gmra.mxu0 %v927
        %v1124 = vpop.f32.mrf.mxu0
        %v1125 = vadd.f32 %v976, %v1124
        %v1126 = vpop.f32.mrf.mxu0
        %v1127 = vadd.f32 %v976, %v1126
        %1128 = vmatmul.bf16.gmra.mxu0 %v928
        %v1129 = vpop.f32.mrf.mxu0
        %v1130 = vadd.f32 %v976, %v1129
        %v1131 = vpop.f32.mrf.mxu0
        %v1132 = vadd.f32 %v976, %v1131
        %1133 = vmatmul.bf16.gmra.mxu0 %v929
        %v1134 = vpop.f32.mrf.mxu0
        %v1135 = vadd.f32 %v976, %v1134
        %v1136 = vpop.f32.mrf.mxu0
        %v1137 = vadd.f32 %v976, %v1136
        %1138 = vmatmul.bf16.gmra.mxu0 %v930
        %v1139 = vpop.f32.mrf.mxu0
        %v1140 = vadd.f32 %v976, %v1139
        %v1141 = vpop.f32.mrf.mxu0
        %v1142 = vadd.f32 %v976, %v1141
        %1143 = vmatmul.bf16.gmra.mxu0 %v931
        %v1144 = vpop.f32.mrf.mxu0
        %v1145 = vadd.f32 %v976, %v1144
        %v1146 = vpop.f32.mrf.mxu0
        %v1147 = vadd.f32 %v976, %v1146
        %1148 = vmatmul.bf16.gmra.mxu0 %v932
        %v1149 = vpop.f32.mrf.mxu0
        %v1150 = vadd.f32 %v976, %v1149
        %v1151 = vpop.f32.mrf.mxu0
        %v1152 = vadd.f32 %v976, %v1151
        %1153 = vmatmul.bf16.gmra.mxu0 %v933
        %v1154 = vpop.f32.mrf.mxu0
        %v1155 = vadd.f32 %v976, %v1154
        %v1156 = vpop.f32.mrf.mxu0
        %v1157 = vadd.f32 %v976, %v1156
        %1158 = vmatmul.bf16.gmra.mxu0 %v934
        %v1159 = vpop.f32.mrf.mxu0
        %v1160 = vadd.f32 %v976, %v1159
        %v1161 = vpop.f32.mrf.mxu0
        %v1162 = vadd.f32 %v976, %v1161
        %1163 = vmatmul.bf16.gmra.mxu0 %v935
        %v1164 = vpop.f32.mrf.mxu0
        %v1165 = vadd.f32 %v976, %v1164
        %v1166 = vpop.f32.mrf.mxu0
        %v1167 = vadd.f32 %v976, %v1166
        %1168 = vmatmul.bf16.gmra.mxu0 %v936
        %v1169 = vpop.f32.mrf.mxu0
        %v1170 = vadd.f32 %v976, %v1169
        %v1171 = vpop.f32.mrf.mxu0
        %v1172 = vadd.f32 %v976, %v1171
        %1173 = vmatmul.bf16.gmra.mxu0 %v937
        %v1174 = vpop.f32.mrf.mxu0
        %v1175 = vadd.f32 %v976, %v1174
        %v1176 = vpop.f32.mrf.mxu0
        %v1177 = vadd.f32 %v976, %v1176
        %1178 = vmatmul.bf16.gmra.mxu0 %v938
        %v1179 = vpop.f32.mrf.mxu0
        %v1180 = vadd.f32 %v976, %v1179
        %v1181 = vpop.f32.mrf.mxu0
        %v1182 = vadd.f32 %v976, %v1181
        %1183 = vmatmul.bf16.gmra.mxu0 %v939
        %v1184 = vpop.f32.mrf.mxu0
        %v1185 = vadd.f32 %v976, %v1184
        %v1186 = vpop.f32.mrf.mxu0
        %v1187 = vadd.f32 %v976, %v1186
        %1188 = vmatmul.bf16.gmra.mxu0 %v940
        %v1189 = vpop.f32.mrf.mxu0
        %v1190 = vadd.f32 %v976, %v1189
        %v1191 = vpop.f32.mrf.mxu0
        %v1192 = vadd.f32 %v976, %v1191
        %1193 = vmatmul.bf16.gmra.mxu0 %v941
        %v1194 = vpop.f32.mrf.mxu0
        %v1195 = vadd.f32 %v976, %v1194
        %v1196 = vpop.f32.mrf.mxu0
        %v1197 = vadd.f32 %v976, %v1196
        %1198 = vdwg.mxu0
        %1199 = vmatpush.bf16.msra.mxu0 %v1084
        %1200 = vmatpush.bf16.msra.mxu0 %v1081
        %1201 = vmatpush.bf16.msra.mxu0 %v1078
        %1202 = vmatpush.bf16.msra.mxu0 %v1075
        %1203 = vmatpush.bf16.msra.mxu0 %v1072
        %1204 = vmatpush.bf16.msra.mxu0 %v1069
        %1205 = vmatpush.bf16.msra.mxu0 %v1066
        %1206 = vmatpush.bf16.msra.mxu0 %v1063
        %1207 = vmatmul.bf16.gmra.mxu0 %v926
        %v1208 = vpop.f32.mrf.mxu0
        %v1209 = vadd.f32 %v977, %v1208
        %v1210 = vpop.f32.mrf.mxu0
        %v1211 = vadd.f32 %v977, %v1210
        %1212 = vmatmul.bf16.gmra.mxu0 %v927
        %v1213 = vpop.f32.mrf.mxu0
        %v1214 = vadd.f32 %v977, %v1213
        %v1215 = vpop.f32.mrf.mxu0
        %v1216 = vadd.f32 %v977, %v1215
        %1217 = vmatmul.bf16.gmra.mxu0 %v928
        %v1218 = vpop.f32.mrf.mxu0
        %v1219 = vadd.f32 %v977, %v1218
        %v1220 = vpop.f32.mrf.mxu0
        %v1221 = vadd.f32 %v977, %v1220
        %1222 = vmatmul.bf16.gmra.mxu0 %v929
        %v1223 = vpop.f32.mrf.mxu0
        %v1224 = vadd.f32 %v977, %v1223
        %v1225 = vpop.f32.mrf.mxu0
        %v1226 = vadd.f32 %v977, %v1225
        %1227 = vmatmul.bf16.gmra.mxu0 %v930
        %v1228 = vpop.f32.mrf.mxu0
        %v1229 = vadd.f32 %v977, %v1228
        %v1230 = vpop.f32.mrf.mxu0
        %v1231 = vadd.f32 %v977, %v1230
        %1232 = vmatmul.bf16.gmra.mxu0 %v931
        %v1233 = vpop.f32.mrf.mxu0
        %v1234 = vadd.f32 %v977, %v1233
        %v1235 = vpop.f32.mrf.mxu0
        %v1236 = vadd.f32 %v977, %v1235
        %1237 = vmatmul.bf16.gmra.mxu0 %v932
        %v1238 = vpop.f32.mrf.mxu0
        %v1239 = vadd.f32 %v977, %v1238
        %v1240 = vpop.f32.mrf.mxu0
        %v1241 = vadd.f32 %v977, %v1240
        %1242 = vmatmul.bf16.gmra.mxu0 %v933
        %v1243 = vpop.f32.mrf.mxu0
        %v1244 = vadd.f32 %v977, %v1243
        %v1245 = vpop.f32.mrf.mxu0
        %v1246 = vadd.f32 %v977, %v1245
        %1247 = vmatmul.bf16.gmra.mxu0 %v934
        %v1248 = vpop.f32.mrf.mxu0
        %v1249 = vadd.f32 %v977, %v1248
        %v1250 = vpop.f32.mrf.mxu0
        %v1251 = vadd.f32 %v977, %v1250
        %1252 = vmatmul.bf16.gmra.mxu0 %v935
        %v1253 = vpop.f32.mrf.mxu0
        %v1254 = vadd.f32 %v977, %v1253
        %v1255 = vpop.f32.mrf.mxu0
        %v1256 = vadd.f32 %v977, %v1255
        %1257 = vmatmul.bf16.gmra.mxu0 %v936
        %v1258 = vpop.f32.mrf.mxu0
        %v1259 = vadd.f32 %v977, %v1258
        %v1260 = vpop.f32.mrf.mxu0
        %v1261 = vadd.f32 %v977, %v1260
        %1262 = vmatmul.bf16.gmra.mxu0 %v937
        %v1263 = vpop.f32.mrf.mxu0
        %v1264 = vadd.f32 %v977, %v1263
        %v1265 = vpop.f32.mrf.mxu0
        %v1266 = vadd.f32 %v977, %v1265
        %1267 = vmatmul.bf16.gmra.mxu0 %v938
        %v1268 = vpop.f32.mrf.mxu0
        %v1269 = vadd.f32 %v977, %v1268
        %v1270 = vpop.f32.mrf.mxu0
        %v1271 = vadd.f32 %v977, %v1270
        %1272 = vmatmul.bf16.gmra.mxu0 %v939
        %v1273 = vpop.f32.mrf.mxu0
        %v1274 = vadd.f32 %v977, %v1273
        %v1275 = vpop.f32.mrf.mxu0
        %v1276 = vadd.f32 %v977, %v1275
        %1277 = vmatmul.bf16.gmra.mxu0 %v940
        %v1278 = vpop.f32.mrf.mxu0
        %v1279 = vadd.f32 %v977, %v1278
        %v1280 = vpop.f32.mrf.mxu0
        %v1281 = vadd.f32 %v977, %v1280
        %1282 = vmatmul.bf16.gmra.mxu0 %v941
        %v1283 = vpop.f32.mrf.mxu0
        %v1284 = vadd.f32 %v977, %v1283
        %v1285 = vpop.f32.mrf.mxu0
        %v1286 = vadd.f32 %v977, %v1285
        %1287 = vdwg.mxu0
        %1288 = vmatpush.bf16.msra.mxu0 %v1085
        %1289 = vmatpush.bf16.msra.mxu0 %v1082
        %1290 = vmatpush.bf16.msra.mxu0 %v1079
        %1291 = vmatpush.bf16.msra.mxu0 %v1076
        %1292 = vmatpush.bf16.msra.mxu0 %v1073
        %1293 = vmatpush.bf16.msra.mxu0 %v1070
        %1294 = vmatpush.bf16.msra.mxu0 %v1067
        %1295 = vmatpush.bf16.msra.mxu0 %v1064
        %1296 = vmatmul.bf16.gmra.mxu0 %v926
        %v1297 = vpop.f32.mrf.mxu0
        %v1298 = vadd.f32 %v978, %v1297
        %v1299 = vpop.f32.mrf.mxu0
        %v1300 = vadd.f32 %v978, %v1299
        %1301 = vmatmul.bf16.gmra.mxu0 %v927
        %v1302 = vpop.f32.mrf.mxu0
        %v1303 = vadd.f32 %v978, %v1302
        %v1304 = vpop.f32.mrf.mxu0
        %v1305 = vadd.f32 %v978, %v1304
        %1306 = vmatmul.bf16.gmra.mxu0 %v928
        %v1307 = vpop.f32.mrf.mxu0
        %v1308 = vadd.f32 %v978, %v1307
        %v1309 = vpop.f32.mrf.mxu0
        %v1310 = vadd.f32 %v978, %v1309
        %1311 = vmatmul.bf16.gmra.mxu0 %v929
        %v1312 = vpop.f32.mrf.mxu0
        %v1313 = vadd.f32 %v978, %v1312
        %v1314 = vpop.f32.mrf.mxu0
        %v1315 = vadd.f32 %v978, %v1314
        %1316 = vmatmul.bf16.gmra.mxu0 %v930
        %v1317 = vpop.f32.mrf.mxu0
        %v1318 = vadd.f32 %v978, %v1317
        %v1319 = vpop.f32.mrf.mxu0
        %v1320 = vadd.f32 %v978, %v1319
        %1321 = vmatmul.bf16.gmra.mxu0 %v931
        %v1322 = vpop.f32.mrf.mxu0
        %v1323 = vadd.f32 %v978, %v1322
        %v1324 = vpop.f32.mrf.mxu0
        %v1325 = vadd.f32 %v978, %v1324
        %1326 = vmatmul.bf16.gmra.mxu0 %v932
        %v1327 = vpop.f32.mrf.mxu0
        %v1328 = vadd.f32 %v978, %v1327
        %v1329 = vpop.f32.mrf.mxu0
        %v1330 = vadd.f32 %v978, %v1329
        %1331 = vmatmul.bf16.gmra.mxu0 %v933
        %v1332 = vpop.f32.mrf.mxu0
        %v1333 = vadd.f32 %v978, %v1332
        %v1334 = vpop.f32.mrf.mxu0
        %v1335 = vadd.f32 %v978, %v1334
        %1336 = vmatmul.bf16.gmra.mxu0 %v934
        %v1337 = vpop.f32.mrf.mxu0
        %v1338 = vadd.f32 %v978, %v1337
        %v1339 = vpop.f32.mrf.mxu0
        %v1340 = vadd.f32 %v978, %v1339
        %1341 = vmatmul.bf16.gmra.mxu0 %v935
        %v1342 = vpop.f32.mrf.mxu0
        %v1343 = vadd.f32 %v978, %v1342
        %v1344 = vpop.f32.mrf.mxu0
        %v1345 = vadd.f32 %v978, %v1344
        %1346 = vmatmul.bf16.gmra.mxu0 %v936
        %v1347 = vpop.f32.mrf.mxu0
        %v1348 = vadd.f32 %v978, %v1347
        %v1349 = vpop.f32.mrf.mxu0
        %v1350 = vadd.f32 %v978, %v1349
        %1351 = vmatmul.bf16.gmra.mxu0 %v937
        %v1352 = vpop.f32.mrf.mxu0
        %v1353 = vadd.f32 %v978, %v1352
        %v1354 = vpop.f32.mrf.mxu0
        %v1355 = vadd.f32 %v978, %v1354
        %1356 = vmatmul.bf16.gmra.mxu0 %v938
        %v1357 = vpop.f32.mrf.mxu0
        %v1358 = vadd.f32 %v978, %v1357
        %v1359 = vpop.f32.mrf.mxu0
        %v1360 = vadd.f32 %v978, %v1359
        %1361 = vmatmul.bf16.gmra.mxu0 %v939
        %v1362 = vpop.f32.mrf.mxu0
        %v1363 = vadd.f32 %v978, %v1362
        %v1364 = vpop.f32.mrf.mxu0
        %v1365 = vadd.f32 %v978, %v1364
        %1366 = vmatmul.bf16.gmra.mxu0 %v940
        %v1367 = vpop.f32.mrf.mxu0
        %v1368 = vadd.f32 %v978, %v1367
        %v1369 = vpop.f32.mrf.mxu0
        %v1370 = vadd.f32 %v978, %v1369
        %1371 = vmatmul.bf16.gmra.mxu0 %v941
        %v1372 = vpop.f32.mrf.mxu0
        %v1373 = vadd.f32 %v978, %v1372
        %v1374 = vpop.f32.mrf.mxu0
        %v1375 = vadd.f32 %v978, %v1374
        %1376 = vdwg.mxu0
        %v1377 = vpack.c.bf16 %v1122, %v1120
        %v1378 = vpack.c.bf16 %v1127, %v1125
        %v1379 = vpack.c.bf16 %v1132, %v1130
        %v1380 = vpack.c.bf16 %v1137, %v1135
        %v1381 = vpack.c.bf16 %v1142, %v1140
        %v1382 = vpack.c.bf16 %v1147, %v1145
        %v1383 = vpack.c.bf16 %v1152, %v1150
        %v1384 = vpack.c.bf16 %v1157, %v1155
        %v1385 = vpack.c.bf16 %v1162, %v1160
        %v1386 = vpack.c.bf16 %v1167, %v1165
        %v1387 = vpack.c.bf16 %v1172, %v1170
        %v1388 = vpack.c.bf16 %v1177, %v1175
        %v1389 = vpack.c.bf16 %v1182, %v1180
        %v1390 = vpack.c.bf16 %v1187, %v1185
        %v1391 = vpack.c.bf16 %v1192, %v1190
        %v1392 = vpack.c.bf16 %v1197, %v1195
        %v1425 = vunpack.c.l.b16 %v472
        %v1426 = vunpack.c.h.b16 %v472
        %v1427 = vunpack.c.l.b16 %v473
        %v1428 = vunpack.c.h.b16 %v473
        %v1429 = vunpack.c.l.b16 %v474
        %v1430 = vunpack.c.h.b16 %v474
        %v1431 = vunpack.c.l.b16 %v475
        %v1432 = vunpack.c.h.b16 %v475
        %v1433 = vunpack.c.l.b16 %v476
        %v1434 = vunpack.c.h.b16 %v476
        %v1435 = vunpack.c.l.b16 %v477
        %v1436 = vunpack.c.h.b16 %v477
        %v1437 = vunpack.c.l.b16 %v478
        %v1438 = vunpack.c.h.b16 %v478
        %v1439 = vunpack.c.l.b16 %v479
        %v1440 = vunpack.c.h.b16 %v479
        %v1441 = vunpack.c.l.b16 %v480
        %v1442 = vunpack.c.h.b16 %v480
        %v1443 = vunpack.c.l.b16 %v481
        %v1444 = vunpack.c.h.b16 %v481
        %v1445 = vunpack.c.l.b16 %v482
        %v1446 = vunpack.c.h.b16 %v482
        %v1447 = vunpack.c.l.b16 %v483
        %v1448 = vunpack.c.h.b16 %v483
        %v1449 = vunpack.c.l.b16 %v484
        %v1450 = vunpack.c.h.b16 %v484
        %v1451 = vunpack.c.l.b16 %v485
        %v1452 = vunpack.c.h.b16 %v485
        %v1453 = vunpack.c.l.b16 %v486
        %v1454 = vunpack.c.h.b16 %v486
        %v1455 = vunpack.c.l.b16 %v487
        %v1456 = vunpack.c.h.b16 %v487
        %v1457 = vunpack.c.l.b16 %v488
        %v1458 = vunpack.c.h.b16 %v488
        %v1459 = vunpack.c.l.b16 %v489
        %v1460 = vunpack.c.h.b16 %v489
        %v1461 = vunpack.c.l.b16 %v490
        %v1462 = vunpack.c.h.b16 %v490
        %v1463 = vunpack.c.l.b16 %v491
        %v1464 = vunpack.c.h.b16 %v491
        %v1465 = vunpack.c.l.b16 %v492
        %v1466 = vunpack.c.h.b16 %v492
        %v1467 = vunpack.c.l.b16 %v493
        %v1468 = vunpack.c.h.b16 %v493
        %v1469 = vunpack.c.l.b16 %v494
        %v1470 = vunpack.c.h.b16 %v494
        %v1471 = vunpack.c.l.b16 %v495
        %v1472 = vunpack.c.h.b16 %v495
        %v1473 = vunpack.c.l.b16 %v496
        %v1474 = vunpack.c.h.b16 %v496
        %v1475 = vunpack.c.l.b16 %v497
        %v1476 = vunpack.c.h.b16 %v497
        %v1477 = vunpack.c.l.b16 %v498
        %v1478 = vunpack.c.h.b16 %v498
        %v1479 = vunpack.c.l.b16 %v499
        %v1480 = vunpack.c.h.b16 %v499
        %v1481 = vunpack.c.l.b16 %v500
        %v1482 = vunpack.c.h.b16 %v500
        %v1483 = vunpack.c.l.b16 %v501
        %v1484 = vunpack.c.h.b16 %v501
        %v1485 = vunpack.c.l.b16 %v502
        %v1486 = vunpack.c.h.b16 %v502
        %v1487 = vunpack.c.l.b16 %v503
        %v1488 = vunpack.c.h.b16 %v503
        %v1489 = vpack.c.b16 %v1427, %v1425
        %v1490 = vpack.c.b16 %v1428, %v1426
        %v1491 = vpack.c.b16 %v1431, %v1429
        %v1492 = vpack.c.b16 %v1432, %v1430
        %v1493 = vpack.c.b16 %v1435, %v1433
        %v1494 = vpack.c.b16 %v1436, %v1434
        %v1495 = vpack.c.b16 %v1439, %v1437
        %v1496 = vpack.c.b16 %v1440, %v1438
        %v1497 = vpack.c.b16 %v1443, %v1441
        %v1498 = vpack.c.b16 %v1444, %v1442
        %v1499 = vpack.c.b16 %v1447, %v1445
        %v1500 = vpack.c.b16 %v1448, %v1446
        %v1501 = vpack.c.b16 %v1451, %v1449
        %v1502 = vpack.c.b16 %v1452, %v1450
        %v1503 = vpack.c.b16 %v1455, %v1453
        %v1504 = vpack.c.b16 %v1456, %v1454
        %v1505 = vpack.c.b16 %v1459, %v1457
        %v1506 = vpack.c.b16 %v1460, %v1458
        %v1507 = vpack.c.b16 %v1463, %v1461
        %v1508 = vpack.c.b16 %v1464, %v1462
        %v1509 = vpack.c.b16 %v1467, %v1465
        %v1510 = vpack.c.b16 %v1468, %v1466
        %v1511 = vpack.c.b16 %v1471, %v1469
        %v1512 = vpack.c.b16 %v1472, %v1470
        %v1513 = vpack.c.b16 %v1475, %v1473
        %v1514 = vpack.c.b16 %v1476, %v1474
        %v1515 = vpack.c.b16 %v1479, %v1477
        %v1516 = vpack.c.b16 %v1480, %v1478
        %v1517 = vpack.c.b16 %v1483, %v1481
        %v1518 = vpack.c.b16 %v1484, %v1482
        %v1519 = vpack.c.b16 %v1487, %v1485
        %v1520 = vpack.c.b16 %v1488, %v1486
        %1553 = vmatpush.bf16.msra.mxu0 %v1384
        %1554 = vmatpush.bf16.msra.mxu0 %v1383
        %1555 = vmatpush.bf16.msra.mxu0 %v1382
        %1556 = vmatpush.bf16.msra.mxu0 %v1381
        %1557 = vmatpush.bf16.msra.mxu0 %v1380
        %1558 = vmatpush.bf16.msra.mxu0 %v1379
        %1559 = vmatpush.bf16.msra.mxu0 %v1378
        %1560 = vmatpush.bf16.msra.mxu0 %v1377
        %1561 = vmatmul.bf16.gmra.mxu0 %v1489
        %v1562 = vpop.f32.mrf.mxu0
        %v1563 = vadd.f32 0.0, %v1562
        %v1564 = vpop.f32.mrf.mxu0
        %v1565 = vadd.f32 0.0, %v1564
        %1566 = vmatmul.bf16.gmra.mxu0 %v1491
        %v1567 = vpop.f32.mrf.mxu0
        %v1568 = vadd.f32 0.0, %v1567
        %v1569 = vpop.f32.mrf.mxu0
        %v1570 = vadd.f32 0.0, %v1569
        %1571 = vmatmul.bf16.gmra.mxu0 %v1493
        %v1572 = vpop.f32.mrf.mxu0
        %v1573 = vadd.f32 0.0, %v1572
        %v1574 = vpop.f32.mrf.mxu0
        %v1575 = vadd.f32 0.0, %v1574
        %1576 = vmatmul.bf16.gmra.mxu0 %v1495
        %v1577 = vpop.f32.mrf.mxu0
        %v1578 = vadd.f32 0.0, %v1577
        %v1579 = vpop.f32.mrf.mxu0
        %v1580 = vadd.f32 0.0, %v1579
        %1581 = vmatmul.bf16.gmra.mxu0 %v1497
        %v1582 = vpop.f32.mrf.mxu0
        %v1583 = vadd.f32 0.0, %v1582
        %v1584 = vpop.f32.mrf.mxu0
        %v1585 = vadd.f32 0.0, %v1584
        %1586 = vmatmul.bf16.gmra.mxu0 %v1499
        %v1587 = vpop.f32.mrf.mxu0
        %v1588 = vadd.f32 0.0, %v1587
        %v1589 = vpop.f32.mrf.mxu0
        %v1590 = vadd.f32 0.0, %v1589
        %1591 = vmatmul.bf16.gmra.mxu0 %v1501
        %v1592 = vpop.f32.mrf.mxu0
        %v1593 = vadd.f32 0.0, %v1592
        %v1594 = vpop.f32.mrf.mxu0
        %v1595 = vadd.f32 0.0, %v1594
        %1596 = vmatmul.bf16.gmra.mxu0 %v1503
        %v1597 = vpop.f32.mrf.mxu0
        %v1598 = vadd.f32 0.0, %v1597
        %v1599 = vpop.f32.mrf.mxu0
        %v1600 = vadd.f32 0.0, %v1599
        %1601 = vmatmul.bf16.gmra.mxu0 %v1505
        %v1602 = vpop.f32.mrf.mxu0
        %v1603 = vadd.f32 0.0, %v1602
        %v1604 = vpop.f32.mrf.mxu0
        %v1605 = vadd.f32 0.0, %v1604
        %1606 = vmatmul.bf16.gmra.mxu0 %v1507
        %v1607 = vpop.f32.mrf.mxu0
        %v1608 = vadd.f32 0.0, %v1607
        %v1609 = vpop.f32.mrf.mxu0
        %v1610 = vadd.f32 0.0, %v1609
        %1611 = vmatmul.bf16.gmra.mxu0 %v1509
        %v1612 = vpop.f32.mrf.mxu0
        %v1613 = vadd.f32 0.0, %v1612
        %v1614 = vpop.f32.mrf.mxu0
        %v1615 = vadd.f32 0.0, %v1614
        %1616 = vmatmul.bf16.gmra.mxu0 %v1511
        %v1617 = vpop.f32.mrf.mxu0
        %v1618 = vadd.f32 0.0, %v1617
        %v1619 = vpop.f32.mrf.mxu0
        %v1620 = vadd.f32 0.0, %v1619
        %1621 = vmatmul.bf16.gmra.mxu0 %v1513
        %v1622 = vpop.f32.mrf.mxu0
        %v1623 = vadd.f32 0.0, %v1622
        %v1624 = vpop.f32.mrf.mxu0
        %v1625 = vadd.f32 0.0, %v1624
        %1626 = vmatmul.bf16.gmra.mxu0 %v1515
        %v1627 = vpop.f32.mrf.mxu0
        %v1628 = vadd.f32 0.0, %v1627
        %v1629 = vpop.f32.mrf.mxu0
        %v1630 = vadd.f32 0.0, %v1629
        %1631 = vmatmul.bf16.gmra.mxu0 %v1517
        %v1632 = vpop.f32.mrf.mxu0
        %v1633 = vadd.f32 0.0, %v1632
        %v1634 = vpop.f32.mrf.mxu0
        %v1635 = vadd.f32 0.0, %v1634
        %1636 = vmatmul.bf16.gmra.mxu0 %v1519
        %v1637 = vpop.f32.mrf.mxu0
        %v1638 = vadd.f32 0.0, %v1637
        %v1639 = vpop.f32.mrf.mxu0
        %v1640 = vadd.f32 0.0, %v1639
        %1641 = vdwg.mxu0
        %1642 = vmatpush.bf16.msra.mxu0 %v1392
        %1643 = vmatpush.bf16.msra.mxu0 %v1391
        %1644 = vmatpush.bf16.msra.mxu0 %v1390
        %1645 = vmatpush.bf16.msra.mxu0 %v1389
        %1646 = vmatpush.bf16.msra.mxu0 %v1388
        %1647 = vmatpush.bf16.msra.mxu0 %v1387
        %1648 = vmatpush.bf16.msra.mxu0 %v1386
        %1649 = vmatpush.bf16.msra.mxu0 %v1385
        %1650 = vmatmul.bf16.gmra.mxu0 %v1490
        %v1651 = vpop.f32.mrf.mxu0
        %v1652 = vadd.f32 %v1563, %v1651
        %v1653 = vpop.f32.mrf.mxu0
        %v1654 = vadd.f32 %v1565, %v1653
        %1655 = vmatmul.bf16.gmra.mxu0 %v1492
        %v1656 = vpop.f32.mrf.mxu0
        %v1657 = vadd.f32 %v1568, %v1656
        %v1658 = vpop.f32.mrf.mxu0
        %v1659 = vadd.f32 %v1570, %v1658
        %1660 = vmatmul.bf16.gmra.mxu0 %v1494
        %v1661 = vpop.f32.mrf.mxu0
        %v1662 = vadd.f32 %v1573, %v1661
        %v1663 = vpop.f32.mrf.mxu0
        %v1664 = vadd.f32 %v1575, %v1663
        %1665 = vmatmul.bf16.gmra.mxu0 %v1496
        %v1666 = vpop.f32.mrf.mxu0
        %v1667 = vadd.f32 %v1578, %v1666
        %v1668 = vpop.f32.mrf.mxu0
        %v1669 = vadd.f32 %v1580, %v1668
        %1670 = vmatmul.bf16.gmra.mxu0 %v1498
        %v1671 = vpop.f32.mrf.mxu0
        %v1672 = vadd.f32 %v1583, %v1671
        %v1673 = vpop.f32.mrf.mxu0
        %v1674 = vadd.f32 %v1585, %v1673
        %1675 = vmatmul.bf16.gmra.mxu0 %v1500
        %v1676 = vpop.f32.mrf.mxu0
        %v1677 = vadd.f32 %v1588, %v1676
        %v1678 = vpop.f32.mrf.mxu0
        %v1679 = vadd.f32 %v1590, %v1678
        %1680 = vmatmul.bf16.gmra.mxu0 %v1502
        %v1681 = vpop.f32.mrf.mxu0
        %v1682 = vadd.f32 %v1593, %v1681
        %v1683 = vpop.f32.mrf.mxu0
        %v1684 = vadd.f32 %v1595, %v1683
        %1685 = vmatmul.bf16.gmra.mxu0 %v1504
        %v1686 = vpop.f32.mrf.mxu0
        %v1687 = vadd.f32 %v1598, %v1686
        %v1688 = vpop.f32.mrf.mxu0
        %v1689 = vadd.f32 %v1600, %v1688
        %1690 = vmatmul.bf16.gmra.mxu0 %v1506
        %v1691 = vpop.f32.mrf.mxu0
        %v1692 = vadd.f32 %v1603, %v1691
        %v1693 = vpop.f32.mrf.mxu0
        %v1694 = vadd.f32 %v1605, %v1693
        %1695 = vmatmul.bf16.gmra.mxu0 %v1508
        %v1696 = vpop.f32.mrf.mxu0
        %v1697 = vadd.f32 %v1608, %v1696
        %v1698 = vpop.f32.mrf.mxu0
        %v1699 = vadd.f32 %v1610, %v1698
        %1700 = vmatmul.bf16.gmra.mxu0 %v1510
        %v1701 = vpop.f32.mrf.mxu0
        %v1702 = vadd.f32 %v1613, %v1701
        %v1703 = vpop.f32.mrf.mxu0
        %v1704 = vadd.f32 %v1615, %v1703
        %1705 = vmatmul.bf16.gmra.mxu0 %v1512
        %v1706 = vpop.f32.mrf.mxu0
        %v1707 = vadd.f32 %v1618, %v1706
        %v1708 = vpop.f32.mrf.mxu0
        %v1709 = vadd.f32 %v1620, %v1708
        %1710 = vmatmul.bf16.gmra.mxu0 %v1514
        %v1711 = vpop.f32.mrf.mxu0
        %v1712 = vadd.f32 %v1623, %v1711
        %v1713 = vpop.f32.mrf.mxu0
        %v1714 = vadd.f32 %v1625, %v1713
        %1715 = vmatmul.bf16.gmra.mxu0 %v1516
        %v1716 = vpop.f32.mrf.mxu0
        %v1717 = vadd.f32 %v1628, %v1716
        %v1718 = vpop.f32.mrf.mxu0
        %v1719 = vadd.f32 %v1630, %v1718
        %1720 = vmatmul.bf16.gmra.mxu0 %v1518
        %v1721 = vpop.f32.mrf.mxu0
        %v1722 = vadd.f32 %v1633, %v1721
        %v1723 = vpop.f32.mrf.mxu0
        %v1724 = vadd.f32 %v1635, %v1723
        %1725 = vmatmul.bf16.gmra.mxu0 %v1520
        %v1726 = vpop.f32.mrf.mxu0
        %v1727 = vadd.f32 %v1638, %v1726
        %v1728 = vpop.f32.mrf.mxu0
        %v1729 = vadd.f32 %v1640, %v1728
        %1730 = vdwg.mxu0
        %v1731 = vmul.f32 %v602, %v1209
        %v1732 = vmul.f32 %v605, %v1211
        %v1733 = vmul.f32 %v608, %v1214
        %v1734 = vmul.f32 %v611, %v1216
        %v1735 = vmul.f32 %v614, %v1219
        %v1736 = vmul.f32 %v617, %v1221
        %v1737 = vmul.f32 %v620, %v1224
        %v1738 = vmul.f32 %v623, %v1226
        %v1739 = vmul.f32 %v626, %v1229
        %v1740 = vmul.f32 %v629, %v1231
        %v1741 = vmul.f32 %v632, %v1234
        %v1742 = vmul.f32 %v635, %v1236
        %v1743 = vmul.f32 %v638, %v1239
        %v1744 = vmul.f32 %v641, %v1241
        %v1745 = vmul.f32 %v644, %v1244
        %v1746 = vmul.f32 %v647, %v1246
        %v1747 = vmul.f32 %v650, %v1249
        %v1748 = vmul.f32 %v653, %v1251
        %v1749 = vmul.f32 %v656, %v1254
        %v1750 = vmul.f32 %v659, %v1256
        %v1751 = vmul.f32 %v662, %v1259
        %v1752 = vmul.f32 %v665, %v1261
        %v1753 = vmul.f32 %v668, %v1264
        %v1754 = vmul.f32 %v671, %v1266
        %v1755 = vmul.f32 %v674, %v1269
        %v1756 = vmul.f32 %v677, %v1271
        %v1757 = vmul.f32 %v680, %v1274
        %v1758 = vmul.f32 %v683, %v1276
        %v1759 = vmul.f32 %v686, %v1279
        %v1760 = vmul.f32 %v689, %v1281
        %v1761 = vmul.f32 %v692, %v1284
        %v1762 = vmul.f32 %v695, %v1286
        %v1763 = vsub.f32 %v1652, %v1731
        %v1764 = vsub.f32 %v1654, %v1732
        %v1765 = vsub.f32 %v1657, %v1733
        %v1766 = vsub.f32 %v1659, %v1734
        %v1767 = vsub.f32 %v1662, %v1735
        %v1768 = vsub.f32 %v1664, %v1736
        %v1769 = vsub.f32 %v1667, %v1737
        %v1770 = vsub.f32 %v1669, %v1738
        %v1771 = vsub.f32 %v1672, %v1739
        %v1772 = vsub.f32 %v1674, %v1740
        %v1773 = vsub.f32 %v1677, %v1741
        %v1774 = vsub.f32 %v1679, %v1742
        %v1775 = vsub.f32 %v1682, %v1743
        %v1776 = vsub.f32 %v1684, %v1744
        %v1777 = vsub.f32 %v1687, %v1745
        %v1778 = vsub.f32 %v1689, %v1746
        %v1779 = vsub.f32 %v1692, %v1747
        %v1780 = vsub.f32 %v1694, %v1748
        %v1781 = vsub.f32 %v1697, %v1749
        %v1782 = vsub.f32 %v1699, %v1750
        %v1783 = vsub.f32 %v1702, %v1751
        %v1784 = vsub.f32 %v1704, %v1752
        %v1785 = vsub.f32 %v1707, %v1753
        %v1786 = vsub.f32 %v1709, %v1754
        %v1787 = vsub.f32 %v1712, %v1755
        %v1788 = vsub.f32 %v1714, %v1756
        %v1789 = vsub.f32 %v1717, %v1757
        %v1790 = vsub.f32 %v1719, %v1758
        %v1791 = vsub.f32 %v1722, %v1759
        %v1792 = vsub.f32 %v1724, %v1760
        %v1793 = vsub.f32 %v1727, %v1761
        %v1794 = vsub.f32 %v1729, %v1762
        %v1795 = vadd.f32 %v1763, %v1298
        %v1796 = vadd.f32 %v1764, %v1300
        %v1797 = vadd.f32 %v1765, %v1303
        %v1798 = vadd.f32 %v1766, %v1305
        %v1799 = vadd.f32 %v1767, %v1308
        %v1800 = vadd.f32 %v1768, %v1310
        %v1801 = vadd.f32 %v1769, %v1313
        %v1802 = vadd.f32 %v1770, %v1315
        %v1803 = vadd.f32 %v1771, %v1318
        %v1804 = vadd.f32 %v1772, %v1320
        %v1805 = vadd.f32 %v1773, %v1323
        %v1806 = vadd.f32 %v1774, %v1325
        %v1807 = vadd.f32 %v1775, %v1328
        %v1808 = vadd.f32 %v1776, %v1330
        %v1809 = vadd.f32 %v1777, %v1333
        %v1810 = vadd.f32 %v1778, %v1335
        %v1811 = vadd.f32 %v1779, %v1338
        %v1812 = vadd.f32 %v1780, %v1340
        %v1813 = vadd.f32 %v1781, %v1343
        %v1814 = vadd.f32 %v1782, %v1345
        %v1815 = vadd.f32 %v1783, %v1348
        %v1816 = vadd.f32 %v1784, %v1350
        %v1817 = vadd.f32 %v1785, %v1353
        %v1818 = vadd.f32 %v1786, %v1355
        %v1819 = vadd.f32 %v1787, %v1358
        %v1820 = vadd.f32 %v1788, %v1360
        %v1821 = vadd.f32 %v1789, %v1363
        %v1822 = vadd.f32 %v1790, %v1365
        %v1823 = vadd.f32 %v1791, %v1368
        %v1824 = vadd.f32 %v1792, %v1370
        %v1825 = vadd.f32 %v1793, %v1373
        %v1826 = vadd.f32 %v1794, %v1375
        %v1827 = vmax.f32 %v1795, 0.0
        %v1828 = vmax.f32 %v1796, 0.0
        %v1829 = vmax.f32 %v1797, 0.0
        %v1830 = vmax.f32 %v1798, 0.0
        %v1831 = vmax.f32 %v1799, 0.0
        %v1832 = vmax.f32 %v1800, 0.0
        %v1833 = vmax.f32 %v1801, 0.0
        %v1834 = vmax.f32 %v1802, 0.0
        %v1835 = vmax.f32 %v1803, 0.0
        %v1836 = vmax.f32 %v1804, 0.0
        %v1837 = vmax.f32 %v1805, 0.0
        %v1838 = vmax.f32 %v1806, 0.0
        %v1839 = vmax.f32 %v1807, 0.0
        %v1840 = vmax.f32 %v1808, 0.0
        %v1841 = vmax.f32 %v1809, 0.0
        %v1842 = vmax.f32 %v1810, 0.0
        %v1843 = vmax.f32 %v1811, 0.0
        %v1844 = vmax.f32 %v1812, 0.0
        %v1845 = vmax.f32 %v1813, 0.0
        %v1846 = vmax.f32 %v1814, 0.0
        %v1847 = vmax.f32 %v1815, 0.0
        %v1848 = vmax.f32 %v1816, 0.0
        %v1849 = vmax.f32 %v1817, 0.0
        %v1850 = vmax.f32 %v1818, 0.0
        %v1851 = vmax.f32 %v1819, 0.0
        %v1852 = vmax.f32 %v1820, 0.0
        %v1853 = vmax.f32 %v1821, 0.0
        %v1854 = vmax.f32 %v1822, 0.0
        %v1855 = vmax.f32 %v1823, 0.0
        %v1856 = vmax.f32 %v1824, 0.0
        %v1857 = vmax.f32 %v1825, 0.0
        %v1858 = vmax.f32 %v1826, 0.0
        %v1859 = vpack.c.bf16 %v1828, %v1827
        %v1860 = vpack.c.bf16 %v1830, %v1829
        %v1861 = vpack.c.bf16 %v1832, %v1831
        %v1862 = vpack.c.bf16 %v1834, %v1833
        %v1863 = vpack.c.bf16 %v1836, %v1835
        %v1864 = vpack.c.bf16 %v1838, %v1837
        %v1865 = vpack.c.bf16 %v1840, %v1839
        %v1866 = vpack.c.bf16 %v1842, %v1841
        %v1867 = vpack.c.bf16 %v1844, %v1843
        %v1868 = vpack.c.bf16 %v1846, %v1845
        %v1869 = vpack.c.bf16 %v1848, %v1847
        %v1870 = vpack.c.bf16 %v1850, %v1849
        %v1871 = vpack.c.bf16 %v1852, %v1851
        %v1872 = vpack.c.bf16 %v1854, %v1853
        %v1873 = vpack.c.bf16 %v1856, %v1855
        %v1874 = vpack.c.bf16 %v1858, %v1857
        %s1875 = scalar_lea.vmem %s4, 192
        %v1876 = vld [vmem:[%s1875] sm:$0xff]
        %v1877 = vld [vmem:[%s1875 + $0x8] sm:$0xf]
        %v1878 = vld [vmem:[%s1875 + $0xc] sm:$0xff]
        %v1879 = vld [vmem:[%s1875 + $0x14] sm:$0xf]
        %v1880 = vld [vmem:[%s1875 + $0x18] sm:$0xff]
        %v1881 = vld [vmem:[%s1875 + $0x20] sm:$0xf]
        %v1882 = vld [vmem:[%s1875 + $0x24] sm:$0xff]
        %v1883 = vld [vmem:[%s1875 + $0x2c] sm:$0xf]
        %v1884 = vld [vmem:[%s1875 + $0x30] sm:$0xff]
        %v1885 = vld [vmem:[%s1875 + $0x38] sm:$0xf]
        %v1886 = vld [vmem:[%s1875 + $0x3c] sm:$0xff]
        %v1887 = vld [vmem:[%s1875 + $0x44] sm:$0xf]
        %v1888 = vld [vmem:[%s1875 + $0x48] sm:$0xff]
        %v1889 = vld [vmem:[%s1875 + $0x50] sm:$0xf]
        %v1890 = vld [vmem:[%s1875 + $0x54] sm:$0xff]
        %v1891 = vld [vmem:[%s1875 + $0x5c] sm:$0xf]
        %v1892 = vld [vmem:[%s1875 + $0x60] sm:$0xff]
        %v1893 = vld [vmem:[%s1875 + $0x68] sm:$0xf]
        %v1894 = vld [vmem:[%s1875 + $0x6c] sm:$0xff]
        %v1895 = vld [vmem:[%s1875 + $0x74] sm:$0xf]
        %v1896 = vld [vmem:[%s1875 + $0x78] sm:$0xff]
        %v1897 = vld [vmem:[%s1875 + $0x80] sm:$0xf]
        %v1898 = vld [vmem:[%s1875 + $0x84] sm:$0xff]
        %v1899 = vld [vmem:[%s1875 + $0x8c] sm:$0xf]
        %v1900 = vld [vmem:[%s1875 + $0x90] sm:$0xff]
        %v1901 = vld [vmem:[%s1875 + $0x98] sm:$0xf]
        %v1902 = vld [vmem:[%s1875 + $0x9c] sm:$0xff]
        %v1903 = vld [vmem:[%s1875 + $0xa4] sm:$0xf]
        %v1904 = vld [vmem:[%s1875 + $0xa8] sm:$0xff]
        %v1905 = vld [vmem:[%s1875 + $0xb0] sm:$0xf]
        %v1906 = vld [vmem:[%s1875 + $0xb4] sm:$0xff]
        %v1907 = vld [vmem:[%s1875 + $0xbc] sm:$0xf]
        %s1908 = scalar_lea.vmem [#allocation7], 3
        %v1909 = vld [vmem:[%s1908] sm:$0x7]
        %v1911 = vperm.slane %v1909, 0
        %v1912 = vperm.slane %v1909, 1
        %v1913 = vperm.slane %v1909, 2
        %v1949 = vunpack.c.l.b16 %v1876
        %v1950 = vunpack.c.h.b16 %v1876
        %v1951 = vunpack.c.l.b16 %v1877
        %v1952 = vunpack.c.l.b16 %v1878
        %v1953 = vunpack.c.h.b16 %v1878
        %v1954 = vunpack.c.l.b16 %v1879
        %v1955 = vunpack.c.l.b16 %v1880
        %v1956 = vunpack.c.h.b16 %v1880
        %v1957 = vunpack.c.l.b16 %v1881
        %v1958 = vunpack.c.l.b16 %v1882
        %v1959 = vunpack.c.h.b16 %v1882
        %v1960 = vunpack.c.l.b16 %v1883
        %v1961 = vunpack.c.l.b16 %v1884
        %v1962 = vunpack.c.h.b16 %v1884
        %v1963 = vunpack.c.l.b16 %v1885
        %v1964 = vunpack.c.l.b16 %v1886
        %v1965 = vunpack.c.h.b16 %v1886
        %v1966 = vunpack.c.l.b16 %v1887
        %v1967 = vunpack.c.l.b16 %v1888
        %v1968 = vunpack.c.h.b16 %v1888
        %v1969 = vunpack.c.l.b16 %v1889
        %v1970 = vunpack.c.l.b16 %v1890
        %v1971 = vunpack.c.h.b16 %v1890
        %v1972 = vunpack.c.l.b16 %v1891
        %v1973 = vunpack.c.l.b16 %v1892
        %v1974 = vunpack.c.h.b16 %v1892
        %v1975 = vunpack.c.l.b16 %v1893
        %v1976 = vunpack.c.l.b16 %v1894
        %v1977 = vunpack.c.h.b16 %v1894
        %v1978 = vunpack.c.l.b16 %v1895
        %v1979 = vunpack.c.l.b16 %v1896
        %v1980 = vunpack.c.h.b16 %v1896
        %v1981 = vunpack.c.l.b16 %v1897
        %v1982 = vunpack.c.l.b16 %v1898
        %v1983 = vunpack.c.h.b16 %v1898
        %v1984 = vunpack.c.l.b16 %v1899
        %v1985 = vunpack.c.l.b16 %v1900
        %v1986 = vunpack.c.h.b16 %v1900
        %v1987 = vunpack.c.l.b16 %v1901
        %v1988 = vunpack.c.l.b16 %v1902
        %v1989 = vunpack.c.h.b16 %v1902
        %v1990 = vunpack.c.l.b16 %v1903
        %v1991 = vunpack.c.l.b16 %v1904
        %v1992 = vunpack.c.h.b16 %v1904
        %v1993 = vunpack.c.l.b16 %v1905
        %v1994 = vunpack.c.l.b16 %v1906
        %v1995 = vunpack.c.h.b16 %v1906
        %v1996 = vunpack.c.l.b16 %v1907
        %v1997 = vpack.c.b16 %v1952, %v1949
        %v1998 = vpack.c.b16 %v1953, %v1950
        %v1999 = vpack.c.b16 %v1954, %v1951
        %v2000 = vpack.c.b16 %v1958, %v1955
        %v2001 = vpack.c.b16 %v1959, %v1956
        %v2002 = vpack.c.b16 %v1960, %v1957
        %v2003 = vpack.c.b16 %v1964, %v1961
        %v2004 = vpack.c.b16 %v1965, %v1962
        %v2005 = vpack.c.b16 %v1966, %v1963
        %v2006 = vpack.c.b16 %v1970, %v1967
        %v2007 = vpack.c.b16 %v1971, %v1968
        %v2008 = vpack.c.b16 %v1972, %v1969
        %v2009 = vpack.c.b16 %v1976, %v1973
        %v2010 = vpack.c.b16 %v1977, %v1974
        %v2011 = vpack.c.b16 %v1978, %v1975
        %v2012 = vpack.c.b16 %v1982, %v1979
        %v2013 = vpack.c.b16 %v1983, %v1980
        %v2014 = vpack.c.b16 %v1984, %v1981
        %v2015 = vpack.c.b16 %v1988, %v1985
        %v2016 = vpack.c.b16 %v1989, %v1986
        %v2017 = vpack.c.b16 %v1990, %v1987
        %v2018 = vpack.c.b16 %v1994, %v1991
        %v2019 = vpack.c.b16 %v1995, %v1992
        %v2020 = vpack.c.b16 %v1996, %v1993
        %2045 = vmatpush.bf16.msra.mxu0 %v2018
        %2046 = vmatpush.bf16.msra.mxu0 %v2015
        %2047 = vmatpush.bf16.msra.mxu0 %v2012
        %2048 = vmatpush.bf16.msra.mxu0 %v2009
        %2049 = vmatpush.bf16.msra.mxu0 %v2006
        %2050 = vmatpush.bf16.msra.mxu0 %v2003
        %2051 = vmatpush.bf16.msra.mxu0 %v2000
        %2052 = vmatpush.bf16.msra.mxu0 %v1997
        %2053 = vmatmul.bf16.gmra.mxu0 %v1859
        %v2054 = vpop.f32.mrf.mxu0
        %v2055 = vadd.f32 %v1911, %v2054
        %v2056 = vpop.f32.mrf.mxu0
        %v2057 = vadd.f32 %v1911, %v2056
        %2058 = vmatmul.bf16.gmra.mxu0 %v1860
        %v2059 = vpop.f32.mrf.mxu0
        %v2060 = vadd.f32 %v1911, %v2059
        %v2061 = vpop.f32.mrf.mxu0
        %v2062 = vadd.f32 %v1911, %v2061
        %2063 = vmatmul.bf16.gmra.mxu0 %v1861
        %v2064 = vpop.f32.mrf.mxu0
        %v2065 = vadd.f32 %v1911, %v2064
        %v2066 = vpop.f32.mrf.mxu0
        %v2067 = vadd.f32 %v1911, %v2066
        %2068 = vmatmul.bf16.gmra.mxu0 %v1862
        %v2069 = vpop.f32.mrf.mxu0
        %v2070 = vadd.f32 %v1911, %v2069
        %v2071 = vpop.f32.mrf.mxu0
        %v2072 = vadd.f32 %v1911, %v2071
        %2073 = vmatmul.bf16.gmra.mxu0 %v1863
        %v2074 = vpop.f32.mrf.mxu0
        %v2075 = vadd.f32 %v1911, %v2074
        %v2076 = vpop.f32.mrf.mxu0
        %v2077 = vadd.f32 %v1911, %v2076
        %2078 = vmatmul.bf16.gmra.mxu0 %v1864
        %v2079 = vpop.f32.mrf.mxu0
        %v2080 = vadd.f32 %v1911, %v2079
        %v2081 = vpop.f32.mrf.mxu0
        %v2082 = vadd.f32 %v1911, %v2081
        %2083 = vmatmul.bf16.gmra.mxu0 %v1865
        %v2084 = vpop.f32.mrf.mxu0
        %v2085 = vadd.f32 %v1911, %v2084
        %v2086 = vpop.f32.mrf.mxu0
        %v2087 = vadd.f32 %v1911, %v2086
        %2088 = vmatmul.bf16.gmra.mxu0 %v1866
        %v2089 = vpop.f32.mrf.mxu0
        %v2090 = vadd.f32 %v1911, %v2089
        %v2091 = vpop.f32.mrf.mxu0
        %v2092 = vadd.f32 %v1911, %v2091
        %2093 = vmatmul.bf16.gmra.mxu0 %v1867
        %v2094 = vpop.f32.mrf.mxu0
        %v2095 = vadd.f32 %v1911, %v2094
        %v2096 = vpop.f32.mrf.mxu0
        %v2097 = vadd.f32 %v1911, %v2096
        %2098 = vmatmul.bf16.gmra.mxu0 %v1868
        %v2099 = vpop.f32.mrf.mxu0
        %v2100 = vadd.f32 %v1911, %v2099
        %v2101 = vpop.f32.mrf.mxu0
        %v2102 = vadd.f32 %v1911, %v2101
        %2103 = vmatmul.bf16.gmra.mxu0 %v1869
        %v2104 = vpop.f32.mrf.mxu0
        %v2105 = vadd.f32 %v1911, %v2104
        %v2106 = vpop.f32.mrf.mxu0
        %v2107 = vadd.f32 %v1911, %v2106
        %2108 = vmatmul.bf16.gmra.mxu0 %v1870
        %v2109 = vpop.f32.mrf.mxu0
        %v2110 = vadd.f32 %v1911, %v2109
        %v2111 = vpop.f32.mrf.mxu0
        %v2112 = vadd.f32 %v1911, %v2111
        %2113 = vmatmul.bf16.gmra.mxu0 %v1871
        %v2114 = vpop.f32.mrf.mxu0
        %v2115 = vadd.f32 %v1911, %v2114
        %v2116 = vpop.f32.mrf.mxu0
        %v2117 = vadd.f32 %v1911, %v2116
        %2118 = vmatmul.bf16.gmra.mxu0 %v1872
        %v2119 = vpop.f32.mrf.mxu0
        %v2120 = vadd.f32 %v1911, %v2119
        %v2121 = vpop.f32.mrf.mxu0
        %v2122 = vadd.f32 %v1911, %v2121
        %2123 = vmatmul.bf16.gmra.mxu0 %v1873
        %v2124 = vpop.f32.mrf.mxu0
        %v2125 = vadd.f32 %v1911, %v2124
        %v2126 = vpop.f32.mrf.mxu0
        %v2127 = vadd.f32 %v1911, %v2126
        %2128 = vmatmul.bf16.gmra.mxu0 %v1874
        %v2129 = vpop.f32.mrf.mxu0
        %v2130 = vadd.f32 %v1911, %v2129
        %v2131 = vpop.f32.mrf.mxu0
        %v2132 = vadd.f32 %v1911, %v2131
        %2133 = vdwg.mxu0
        %2134 = vmatpush.bf16.msra.mxu0 %v2019
        %2135 = vmatpush.bf16.msra.mxu0 %v2016
        %2136 = vmatpush.bf16.msra.mxu0 %v2013
        %2137 = vmatpush.bf16.msra.mxu0 %v2010
        %2138 = vmatpush.bf16.msra.mxu0 %v2007
        %2139 = vmatpush.bf16.msra.mxu0 %v2004
        %2140 = vmatpush.bf16.msra.mxu0 %v2001
        %2141 = vmatpush.bf16.msra.mxu0 %v1998
        %2142 = vmatmul.bf16.gmra.mxu0 %v1859
        %v2143 = vpop.f32.mrf.mxu0
        %v2144 = vadd.f32 %v1912, %v2143
        %v2145 = vpop.f32.mrf.mxu0
        %v2146 = vadd.f32 %v1912, %v2145
        %2147 = vmatmul.bf16.gmra.mxu0 %v1860
        %v2148 = vpop.f32.mrf.mxu0
        %v2149 = vadd.f32 %v1912, %v2148
        %v2150 = vpop.f32.mrf.mxu0
        %v2151 = vadd.f32 %v1912, %v2150
        %2152 = vmatmul.bf16.gmra.mxu0 %v1861
        %v2153 = vpop.f32.mrf.mxu0
        %v2154 = vadd.f32 %v1912, %v2153
        %v2155 = vpop.f32.mrf.mxu0
        %v2156 = vadd.f32 %v1912, %v2155
        %2157 = vmatmul.bf16.gmra.mxu0 %v1862
        %v2158 = vpop.f32.mrf.mxu0
        %v2159 = vadd.f32 %v1912, %v2158
        %v2160 = vpop.f32.mrf.mxu0
        %v2161 = vadd.f32 %v1912, %v2160
        %2162 = vmatmul.bf16.gmra.mxu0 %v1863
        %v2163 = vpop.f32.mrf.mxu0
        %v2164 = vadd.f32 %v1912, %v2163
        %v2165 = vpop.f32.mrf.mxu0
        %v2166 = vadd.f32 %v1912, %v2165
        %2167 = vmatmul.bf16.gmra.mxu0 %v1864
        %v2168 = vpop.f32.mrf.mxu0
        %v2169 = vadd.f32 %v1912, %v2168
        %v2170 = vpop.f32.mrf.mxu0
        %v2171 = vadd.f32 %v1912, %v2170
        %2172 = vmatmul.bf16.gmra.mxu0 %v1865
        %v2173 = vpop.f32.mrf.mxu0
        %v2174 = vadd.f32 %v1912, %v2173
        %v2175 = vpop.f32.mrf.mxu0
        %v2176 = vadd.f32 %v1912, %v2175
        %2177 = vmatmul.bf16.gmra.mxu0 %v1866
        %v2178 = vpop.f32.mrf.mxu0
        %v2179 = vadd.f32 %v1912, %v2178
        %v2180 = vpop.f32.mrf.mxu0
        %v2181 = vadd.f32 %v1912, %v2180
        %2182 = vmatmul.bf16.gmra.mxu0 %v1867
        %v2183 = vpop.f32.mrf.mxu0
        %v2184 = vadd.f32 %v1912, %v2183
        %v2185 = vpop.f32.mrf.mxu0
        %v2186 = vadd.f32 %v1912, %v2185
        %2187 = vmatmul.bf16.gmra.mxu0 %v1868
        %v2188 = vpop.f32.mrf.mxu0
        %v2189 = vadd.f32 %v1912, %v2188
        %v2190 = vpop.f32.mrf.mxu0
        %v2191 = vadd.f32 %v1912, %v2190
        %2192 = vmatmul.bf16.gmra.mxu0 %v1869
        %v2193 = vpop.f32.mrf.mxu0
        %v2194 = vadd.f32 %v1912, %v2193
        %v2195 = vpop.f32.mrf.mxu0
        %v2196 = vadd.f32 %v1912, %v2195
        %2197 = vmatmul.bf16.gmra.mxu0 %v1870
        %v2198 = vpop.f32.mrf.mxu0
        %v2199 = vadd.f32 %v1912, %v2198
        %v2200 = vpop.f32.mrf.mxu0
        %v2201 = vadd.f32 %v1912, %v2200
        %2202 = vmatmul.bf16.gmra.mxu0 %v1871
        %v2203 = vpop.f32.mrf.mxu0
        %v2204 = vadd.f32 %v1912, %v2203
        %v2205 = vpop.f32.mrf.mxu0
        %v2206 = vadd.f32 %v1912, %v2205
        %2207 = vmatmul.bf16.gmra.mxu0 %v1872
        %v2208 = vpop.f32.mrf.mxu0
        %v2209 = vadd.f32 %v1912, %v2208
        %v2210 = vpop.f32.mrf.mxu0
        %v2211 = vadd.f32 %v1912, %v2210
        %2212 = vmatmul.bf16.gmra.mxu0 %v1873
        %v2213 = vpop.f32.mrf.mxu0
        %v2214 = vadd.f32 %v1912, %v2213
        %v2215 = vpop.f32.mrf.mxu0
        %v2216 = vadd.f32 %v1912, %v2215
        %2217 = vmatmul.bf16.gmra.mxu0 %v1874
        %v2218 = vpop.f32.mrf.mxu0
        %v2219 = vadd.f32 %v1912, %v2218
        %v2220 = vpop.f32.mrf.mxu0
        %v2221 = vadd.f32 %v1912, %v2220
        %2222 = vdwg.mxu0
        %2223 = vmatpush.bf16.msra.mxu0 %v2020
        %2224 = vmatpush.bf16.msra.mxu0 %v2017
        %2225 = vmatpush.bf16.msra.mxu0 %v2014
        %2226 = vmatpush.bf16.msra.mxu0 %v2011
        %2227 = vmatpush.bf16.msra.mxu0 %v2008
        %2228 = vmatpush.bf16.msra.mxu0 %v2005
        %2229 = vmatpush.bf16.msra.mxu0 %v2002
        %2230 = vmatpush.bf16.msra.mxu0 %v1999
        %2231 = vmatmul.bf16.gmra.mxu0 %v1859
        %v2232 = vpop.f32.mrf.mxu0
        %v2233 = vadd.f32 %v1913, %v2232
        %v2234 = vpop.f32.mrf.mxu0
        %v2235 = vadd.f32 %v1913, %v2234
        %2236 = vmatmul.bf16.gmra.mxu0 %v1860
        %v2237 = vpop.f32.mrf.mxu0
        %v2238 = vadd.f32 %v1913, %v2237
        %v2239 = vpop.f32.mrf.mxu0
        %v2240 = vadd.f32 %v1913, %v2239
        %2241 = vmatmul.bf16.gmra.mxu0 %v1861
        %v2242 = vpop.f32.mrf.mxu0
        %v2243 = vadd.f32 %v1913, %v2242
        %v2244 = vpop.f32.mrf.mxu0
        %v2245 = vadd.f32 %v1913, %v2244
        %2246 = vmatmul.bf16.gmra.mxu0 %v1862
        %v2247 = vpop.f32.mrf.mxu0
        %v2248 = vadd.f32 %v1913, %v2247
        %v2249 = vpop.f32.mrf.mxu0
        %v2250 = vadd.f32 %v1913, %v2249
        %2251 = vmatmul.bf16.gmra.mxu0 %v1863
        %v2252 = vpop.f32.mrf.mxu0
        %v2253 = vadd.f32 %v1913, %v2252
        %v2254 = vpop.f32.mrf.mxu0
        %v2255 = vadd.f32 %v1913, %v2254
        %2256 = vmatmul.bf16.gmra.mxu0 %v1864
        %v2257 = vpop.f32.mrf.mxu0
        %v2258 = vadd.f32 %v1913, %v2257
        %v2259 = vpop.f32.mrf.mxu0
        %v2260 = vadd.f32 %v1913, %v2259
        %2261 = vmatmul.bf16.gmra.mxu0 %v1865
        %v2262 = vpop.f32.mrf.mxu0
        %v2263 = vadd.f32 %v1913, %v2262
        %v2264 = vpop.f32.mrf.mxu0
        %v2265 = vadd.f32 %v1913, %v2264
        %2266 = vmatmul.bf16.gmra.mxu0 %v1866
        %v2267 = vpop.f32.mrf.mxu0
        %v2268 = vadd.f32 %v1913, %v2267
        %v2269 = vpop.f32.mrf.mxu0
        %v2270 = vadd.f32 %v1913, %v2269
        %2271 = vmatmul.bf16.gmra.mxu0 %v1867
        %v2272 = vpop.f32.mrf.mxu0
        %v2273 = vadd.f32 %v1913, %v2272
        %v2274 = vpop.f32.mrf.mxu0
        %v2275 = vadd.f32 %v1913, %v2274
        %2276 = vmatmul.bf16.gmra.mxu0 %v1868
        %v2277 = vpop.f32.mrf.mxu0
        %v2278 = vadd.f32 %v1913, %v2277
        %v2279 = vpop.f32.mrf.mxu0
        %v2280 = vadd.f32 %v1913, %v2279
        %2281 = vmatmul.bf16.gmra.mxu0 %v1869
        %v2282 = vpop.f32.mrf.mxu0
        %v2283 = vadd.f32 %v1913, %v2282
        %v2284 = vpop.f32.mrf.mxu0
        %v2285 = vadd.f32 %v1913, %v2284
        %2286 = vmatmul.bf16.gmra.mxu0 %v1870
        %v2287 = vpop.f32.mrf.mxu0
        %v2288 = vadd.f32 %v1913, %v2287
        %v2289 = vpop.f32.mrf.mxu0
        %v2290 = vadd.f32 %v1913, %v2289
        %2291 = vmatmul.bf16.gmra.mxu0 %v1871
        %v2292 = vpop.f32.mrf.mxu0
        %v2293 = vadd.f32 %v1913, %v2292
        %v2294 = vpop.f32.mrf.mxu0
        %v2295 = vadd.f32 %v1913, %v2294
        %2296 = vmatmul.bf16.gmra.mxu0 %v1872
        %v2297 = vpop.f32.mrf.mxu0
        %v2298 = vadd.f32 %v1913, %v2297
        %v2299 = vpop.f32.mrf.mxu0
        %v2300 = vadd.f32 %v1913, %v2299
        %2301 = vmatmul.bf16.gmra.mxu0 %v1873
        %v2302 = vpop.f32.mrf.mxu0
        %v2303 = vadd.f32 %v1913, %v2302
        %v2304 = vpop.f32.mrf.mxu0
        %v2305 = vadd.f32 %v1913, %v2304
        %2306 = vmatmul.bf16.gmra.mxu0 %v1874
        %v2307 = vpop.f32.mrf.mxu0
        %v2308 = vadd.f32 %v1913, %v2307
        %v2309 = vpop.f32.mrf.mxu0
        %v2310 = vadd.f32 %v1913, %v2309
        %2311 = vdwg.mxu0
        %v2312 = vpack.c.bf16 %v2057, %v2055
        %v2313 = vpack.c.bf16 %v2062, %v2060
        %v2314 = vpack.c.bf16 %v2067, %v2065
        %v2315 = vpack.c.bf16 %v2072, %v2070
        %v2316 = vpack.c.bf16 %v2077, %v2075
        %v2317 = vpack.c.bf16 %v2082, %v2080
        %v2318 = vpack.c.bf16 %v2087, %v2085
        %v2319 = vpack.c.bf16 %v2092, %v2090
        %v2320 = vpack.c.bf16 %v2097, %v2095
        %v2321 = vpack.c.bf16 %v2102, %v2100
        %v2322 = vpack.c.bf16 %v2107, %v2105
        %v2323 = vpack.c.bf16 %v2112, %v2110
        %v2324 = vpack.c.bf16 %v2117, %v2115
        %v2325 = vpack.c.bf16 %v2122, %v2120
        %v2326 = vpack.c.bf16 %v2127, %v2125
        %v2327 = vpack.c.bf16 %v2132, %v2130
        %2328 = vmatpush.bf16.msra.mxu0 %v2319
        %2329 = vmatpush.bf16.msra.mxu0 %v2318
        %2330 = vmatpush.bf16.msra.mxu0 %v2317
        %2331 = vmatpush.bf16.msra.mxu0 %v2316
        %2332 = vmatpush.bf16.msra.mxu0 %v2315
        %2333 = vmatpush.bf16.msra.mxu0 %v2314
        %2334 = vmatpush.bf16.msra.mxu0 %v2313
        %2335 = vmatpush.bf16.msra.mxu0 %v2312
        %2336 = vmatmul.bf16.gmra.mxu0 %v1489
        %v2337 = vpop.f32.mrf.mxu0
        %v2338 = vadd.f32 0.0, %v2337
        %v2339 = vpop.f32.mrf.mxu0
        %v2340 = vadd.f32 0.0, %v2339
        %2341 = vmatmul.bf16.gmra.mxu0 %v1491
        %v2342 = vpop.f32.mrf.mxu0
        %v2343 = vadd.f32 0.0, %v2342
        %v2344 = vpop.f32.mrf.mxu0
        %v2345 = vadd.f32 0.0, %v2344
        %2346 = vmatmul.bf16.gmra.mxu0 %v1493
        %v2347 = vpop.f32.mrf.mxu0
        %v2348 = vadd.f32 0.0, %v2347
        %v2349 = vpop.f32.mrf.mxu0
        %v2350 = vadd.f32 0.0, %v2349
        %2351 = vmatmul.bf16.gmra.mxu0 %v1495
        %v2352 = vpop.f32.mrf.mxu0
        %v2353 = vadd.f32 0.0, %v2352
        %v2354 = vpop.f32.mrf.mxu0
        %v2355 = vadd.f32 0.0, %v2354
        %2356 = vmatmul.bf16.gmra.mxu0 %v1497
        %v2357 = vpop.f32.mrf.mxu0
        %v2358 = vadd.f32 0.0, %v2357
        %v2359 = vpop.f32.mrf.mxu0
        %v2360 = vadd.f32 0.0, %v2359
        %2361 = vmatmul.bf16.gmra.mxu0 %v1499
        %v2362 = vpop.f32.mrf.mxu0
        %v2363 = vadd.f32 0.0, %v2362
        %v2364 = vpop.f32.mrf.mxu0
        %v2365 = vadd.f32 0.0, %v2364
        %2366 = vmatmul.bf16.gmra.mxu0 %v1501
        %v2367 = vpop.f32.mrf.mxu0
        %v2368 = vadd.f32 0.0, %v2367
        %v2369 = vpop.f32.mrf.mxu0
        %v2370 = vadd.f32 0.0, %v2369
        %2371 = vmatmul.bf16.gmra.mxu0 %v1503
        %v2372 = vpop.f32.mrf.mxu0
        %v2373 = vadd.f32 0.0, %v2372
        %v2374 = vpop.f32.mrf.mxu0
        %v2375 = vadd.f32 0.0, %v2374
        %2376 = vmatmul.bf16.gmra.mxu0 %v1505
        %v2377 = vpop.f32.mrf.mxu0
        %v2378 = vadd.f32 0.0, %v2377
        %v2379 = vpop.f32.mrf.mxu0
        %v2380 = vadd.f32 0.0, %v2379
        %2381 = vmatmul.bf16.gmra.mxu0 %v1507
        %v2382 = vpop.f32.mrf.mxu0
        %v2383 = vadd.f32 0.0, %v2382
        %v2384 = vpop.f32.mrf.mxu0
        %v2385 = vadd.f32 0.0, %v2384
        %2386 = vmatmul.bf16.gmra.mxu0 %v1509
        %v2387 = vpop.f32.mrf.mxu0
        %v2388 = vadd.f32 0.0, %v2387
        %v2389 = vpop.f32.mrf.mxu0
        %v2390 = vadd.f32 0.0, %v2389
        %2391 = vmatmul.bf16.gmra.mxu0 %v1511
        %v2392 = vpop.f32.mrf.mxu0
        %v2393 = vadd.f32 0.0, %v2392
        %v2394 = vpop.f32.mrf.mxu0
        %v2395 = vadd.f32 0.0, %v2394
        %2396 = vmatmul.bf16.gmra.mxu0 %v1513
        %v2397 = vpop.f32.mrf.mxu0
        %v2398 = vadd.f32 0.0, %v2397
        %v2399 = vpop.f32.mrf.mxu0
        %v2400 = vadd.f32 0.0, %v2399
        %2401 = vmatmul.bf16.gmra.mxu0 %v1515
        %v2402 = vpop.f32.mrf.mxu0
        %v2403 = vadd.f32 0.0, %v2402
        %v2404 = vpop.f32.mrf.mxu0
        %v2405 = vadd.f32 0.0, %v2404
        %2406 = vmatmul.bf16.gmra.mxu0 %v1517
        %v2407 = vpop.f32.mrf.mxu0
        %v2408 = vadd.f32 0.0, %v2407
        %v2409 = vpop.f32.mrf.mxu0
        %v2410 = vadd.f32 0.0, %v2409
        %2411 = vmatmul.bf16.gmra.mxu0 %v1519
        %v2412 = vpop.f32.mrf.mxu0
        %v2413 = vadd.f32 0.0, %v2412
        %v2414 = vpop.f32.mrf.mxu0
        %v2415 = vadd.f32 0.0, %v2414
        %2416 = vdwg.mxu0
        %2417 = vmatpush.bf16.msra.mxu0 %v2327
        %2418 = vmatpush.bf16.msra.mxu0 %v2326
        %2419 = vmatpush.bf16.msra.mxu0 %v2325
        %2420 = vmatpush.bf16.msra.mxu0 %v2324
        %2421 = vmatpush.bf16.msra.mxu0 %v2323
        %2422 = vmatpush.bf16.msra.mxu0 %v2322
        %2423 = vmatpush.bf16.msra.mxu0 %v2321
        %2424 = vmatpush.bf16.msra.mxu0 %v2320
        %2425 = vmatmul.bf16.gmra.mxu0 %v1490
        %v2426 = vpop.f32.mrf.mxu0
        %v2427 = vadd.f32 %v2338, %v2426
        %v2428 = vpop.f32.mrf.mxu0
        %v2429 = vadd.f32 %v2340, %v2428
        %2430 = vmatmul.bf16.gmra.mxu0 %v1492
        %v2431 = vpop.f32.mrf.mxu0
        %v2432 = vadd.f32 %v2343, %v2431
        %v2433 = vpop.f32.mrf.mxu0
        %v2434 = vadd.f32 %v2345, %v2433
        %2435 = vmatmul.bf16.gmra.mxu0 %v1494
        %v2436 = vpop.f32.mrf.mxu0
        %v2437 = vadd.f32 %v2348, %v2436
        %v2438 = vpop.f32.mrf.mxu0
        %v2439 = vadd.f32 %v2350, %v2438
        %2440 = vmatmul.bf16.gmra.mxu0 %v1496
        %v2441 = vpop.f32.mrf.mxu0
        %v2442 = vadd.f32 %v2353, %v2441
        %v2443 = vpop.f32.mrf.mxu0
        %v2444 = vadd.f32 %v2355, %v2443
        %2445 = vmatmul.bf16.gmra.mxu0 %v1498
        %v2446 = vpop.f32.mrf.mxu0
        %v2447 = vadd.f32 %v2358, %v2446
        %v2448 = vpop.f32.mrf.mxu0
        %v2449 = vadd.f32 %v2360, %v2448
        %2450 = vmatmul.bf16.gmra.mxu0 %v1500
        %v2451 = vpop.f32.mrf.mxu0
        %v2452 = vadd.f32 %v2363, %v2451
        %v2453 = vpop.f32.mrf.mxu0
        %v2454 = vadd.f32 %v2365, %v2453
        %2455 = vmatmul.bf16.gmra.mxu0 %v1502
        %v2456 = vpop.f32.mrf.mxu0
        %v2457 = vadd.f32 %v2368, %v2456
        %v2458 = vpop.f32.mrf.mxu0
        %v2459 = vadd.f32 %v2370, %v2458
        %2460 = vmatmul.bf16.gmra.mxu0 %v1504
        %v2461 = vpop.f32.mrf.mxu0
        %v2462 = vadd.f32 %v2373, %v2461
        %v2463 = vpop.f32.mrf.mxu0
        %v2464 = vadd.f32 %v2375, %v2463
        %2465 = vmatmul.bf16.gmra.mxu0 %v1506
        %v2466 = vpop.f32.mrf.mxu0
        %v2467 = vadd.f32 %v2378, %v2466
        %v2468 = vpop.f32.mrf.mxu0
        %v2469 = vadd.f32 %v2380, %v2468
        %2470 = vmatmul.bf16.gmra.mxu0 %v1508
        %v2471 = vpop.f32.mrf.mxu0
        %v2472 = vadd.f32 %v2383, %v2471
        %v2473 = vpop.f32.mrf.mxu0
        %v2474 = vadd.f32 %v2385, %v2473
        %2475 = vmatmul.bf16.gmra.mxu0 %v1510
        %v2476 = vpop.f32.mrf.mxu0
        %v2477 = vadd.f32 %v2388, %v2476
        %v2478 = vpop.f32.mrf.mxu0
        %v2479 = vadd.f32 %v2390, %v2478
        %2480 = vmatmul.bf16.gmra.mxu0 %v1512
        %v2481 = vpop.f32.mrf.mxu0
        %v2482 = vadd.f32 %v2393, %v2481
        %v2483 = vpop.f32.mrf.mxu0
        %v2484 = vadd.f32 %v2395, %v2483
        %2485 = vmatmul.bf16.gmra.mxu0 %v1514
        %v2486 = vpop.f32.mrf.mxu0
        %v2487 = vadd.f32 %v2398, %v2486
        %v2488 = vpop.f32.mrf.mxu0
        %v2489 = vadd.f32 %v2400, %v2488
        %2490 = vmatmul.bf16.gmra.mxu0 %v1516
        %v2491 = vpop.f32.mrf.mxu0
        %v2492 = vadd.f32 %v2403, %v2491
        %v2493 = vpop.f32.mrf.mxu0
        %v2494 = vadd.f32 %v2405, %v2493
        %2495 = vmatmul.bf16.gmra.mxu0 %v1518
        %v2496 = vpop.f32.mrf.mxu0
        %v2497 = vadd.f32 %v2408, %v2496
        %v2498 = vpop.f32.mrf.mxu0
        %v2499 = vadd.f32 %v2410, %v2498
        %2500 = vmatmul.bf16.gmra.mxu0 %v1520
        %v2501 = vpop.f32.mrf.mxu0
        %v2502 = vadd.f32 %v2413, %v2501
        %v2503 = vpop.f32.mrf.mxu0
        %v2504 = vadd.f32 %v2415, %v2503
        %2505 = vdwg.mxu0
        %v2506 = vmul.f32 %v602, %v2144
        %v2507 = vmul.f32 %v605, %v2146
        %v2508 = vmul.f32 %v608, %v2149
        %v2509 = vmul.f32 %v611, %v2151
        %v2510 = vmul.f32 %v614, %v2154
        %v2511 = vmul.f32 %v617, %v2156
        %v2512 = vmul.f32 %v620, %v2159
        %v2513 = vmul.f32 %v623, %v2161
        %v2514 = vmul.f32 %v626, %v2164
        %v2515 = vmul.f32 %v629, %v2166
        %v2516 = vmul.f32 %v632, %v2169
        %v2517 = vmul.f32 %v635, %v2171
        %v2518 = vmul.f32 %v638, %v2174
        %v2519 = vmul.f32 %v641, %v2176
        %v2520 = vmul.f32 %v644, %v2179
        %v2521 = vmul.f32 %v647, %v2181
        %v2522 = vmul.f32 %v650, %v2184
        %v2523 = vmul.f32 %v653, %v2186
        %v2524 = vmul.f32 %v656, %v2189
        %v2525 = vmul.f32 %v659, %v2191
        %v2526 = vmul.f32 %v662, %v2194
        %v2527 = vmul.f32 %v665, %v2196
        %v2528 = vmul.f32 %v668, %v2199
        %v2529 = vmul.f32 %v671, %v2201
        %v2530 = vmul.f32 %v674, %v2204
        %v2531 = vmul.f32 %v677, %v2206
        %v2532 = vmul.f32 %v680, %v2209
        %v2533 = vmul.f32 %v683, %v2211
        %v2534 = vmul.f32 %v686, %v2214
        %v2535 = vmul.f32 %v689, %v2216
        %v2536 = vmul.f32 %v692, %v2219
        %v2537 = vmul.f32 %v695, %v2221
        %v2538 = vsub.f32 %v2427, %v2506
        %v2539 = vsub.f32 %v2429, %v2507
        %v2540 = vsub.f32 %v2432, %v2508
        %v2541 = vsub.f32 %v2434, %v2509
        %v2542 = vsub.f32 %v2437, %v2510
        %v2543 = vsub.f32 %v2439, %v2511
        %v2544 = vsub.f32 %v2442, %v2512
        %v2545 = vsub.f32 %v2444, %v2513
        %v2546 = vsub.f32 %v2447, %v2514
        %v2547 = vsub.f32 %v2449, %v2515
        %v2548 = vsub.f32 %v2452, %v2516
        %v2549 = vsub.f32 %v2454, %v2517
        %v2550 = vsub.f32 %v2457, %v2518
        %v2551 = vsub.f32 %v2459, %v2519
        %v2552 = vsub.f32 %v2462, %v2520
        %v2553 = vsub.f32 %v2464, %v2521
        %v2554 = vsub.f32 %v2467, %v2522
        %v2555 = vsub.f32 %v2469, %v2523
        %v2556 = vsub.f32 %v2472, %v2524
        %v2557 = vsub.f32 %v2474, %v2525
        %v2558 = vsub.f32 %v2477, %v2526
        %v2559 = vsub.f32 %v2479, %v2527
        %v2560 = vsub.f32 %v2482, %v2528
        %v2561 = vsub.f32 %v2484, %v2529
        %v2562 = vsub.f32 %v2487, %v2530
        %v2563 = vsub.f32 %v2489, %v2531
        %v2564 = vsub.f32 %v2492, %v2532
        %v2565 = vsub.f32 %v2494, %v2533
        %v2566 = vsub.f32 %v2497, %v2534
        %v2567 = vsub.f32 %v2499, %v2535
        %v2568 = vsub.f32 %v2502, %v2536
        %v2569 = vsub.f32 %v2504, %v2537
        %v2570 = vadd.f32 %v2538, %v2233
        %v2571 = vadd.f32 %v2539, %v2235
        %v2572 = vadd.f32 %v2540, %v2238
        %v2573 = vadd.f32 %v2541, %v2240
        %v2574 = vadd.f32 %v2542, %v2243
        %v2575 = vadd.f32 %v2543, %v2245
        %v2576 = vadd.f32 %v2544, %v2248
        %v2577 = vadd.f32 %v2545, %v2250
        %v2578 = vadd.f32 %v2546, %v2253
        %v2579 = vadd.f32 %v2547, %v2255
        %v2580 = vadd.f32 %v2548, %v2258
        %v2581 = vadd.f32 %v2549, %v2260
        %v2582 = vadd.f32 %v2550, %v2263
        %v2583 = vadd.f32 %v2551, %v2265
        %v2584 = vadd.f32 %v2552, %v2268
        %v2585 = vadd.f32 %v2553, %v2270
        %v2586 = vadd.f32 %v2554, %v2273
        %v2587 = vadd.f32 %v2555, %v2275
        %v2588 = vadd.f32 %v2556, %v2278
        %v2589 = vadd.f32 %v2557, %v2280
        %v2590 = vadd.f32 %v2558, %v2283
        %v2591 = vadd.f32 %v2559, %v2285
        %v2592 = vadd.f32 %v2560, %v2288
        %v2593 = vadd.f32 %v2561, %v2290
        %v2594 = vadd.f32 %v2562, %v2293
        %v2595 = vadd.f32 %v2563, %v2295
        %v2596 = vadd.f32 %v2564, %v2298
        %v2597 = vadd.f32 %v2565, %v2300
        %v2598 = vadd.f32 %v2566, %v2303
        %v2599 = vadd.f32 %v2567, %v2305
        %v2600 = vadd.f32 %v2568, %v2308
        %v2601 = vadd.f32 %v2569, %v2310
        %v2602 = vmax.f32 %v2570, 0.0
        %v2603 = vmax.f32 %v2571, 0.0
        %v2604 = vmax.f32 %v2572, 0.0
        %v2605 = vmax.f32 %v2573, 0.0
        %v2606 = vmax.f32 %v2574, 0.0
        %v2607 = vmax.f32 %v2575, 0.0
        %v2608 = vmax.f32 %v2576, 0.0
        %v2609 = vmax.f32 %v2577, 0.0
        %v2610 = vmax.f32 %v2578, 0.0
        %v2611 = vmax.f32 %v2579, 0.0
        %v2612 = vmax.f32 %v2580, 0.0
        %v2613 = vmax.f32 %v2581, 0.0
        %v2614 = vmax.f32 %v2582, 0.0
        %v2615 = vmax.f32 %v2583, 0.0
        %v2616 = vmax.f32 %v2584, 0.0
        %v2617 = vmax.f32 %v2585, 0.0
        %v2618 = vmax.f32 %v2586, 0.0
        %v2619 = vmax.f32 %v2587, 0.0
        %v2620 = vmax.f32 %v2588, 0.0
        %v2621 = vmax.f32 %v2589, 0.0
        %v2622 = vmax.f32 %v2590, 0.0
        %v2623 = vmax.f32 %v2591, 0.0
        %v2624 = vmax.f32 %v2592, 0.0
        %v2625 = vmax.f32 %v2593, 0.0
        %v2626 = vmax.f32 %v2594, 0.0
        %v2627 = vmax.f32 %v2595, 0.0
        %v2628 = vmax.f32 %v2596, 0.0
        %v2629 = vmax.f32 %v2597, 0.0
        %v2630 = vmax.f32 %v2598, 0.0
        %v2631 = vmax.f32 %v2599, 0.0
        %v2632 = vmax.f32 %v2600, 0.0
        %v2633 = vmax.f32 %v2601, 0.0
        %v2634 = vpack.c.bf16 %v2603, %v2602
        %v2635 = vpack.c.bf16 %v2605, %v2604
        %v2636 = vpack.c.bf16 %v2607, %v2606
        %v2637 = vpack.c.bf16 %v2609, %v2608
        %v2638 = vpack.c.bf16 %v2611, %v2610
        %v2639 = vpack.c.bf16 %v2613, %v2612
        %v2640 = vpack.c.bf16 %v2615, %v2614
        %v2641 = vpack.c.bf16 %v2617, %v2616
        %v2642 = vpack.c.bf16 %v2619, %v2618
        %v2643 = vpack.c.bf16 %v2621, %v2620
        %v2644 = vpack.c.bf16 %v2623, %v2622
        %v2645 = vpack.c.bf16 %v2625, %v2624
        %v2646 = vpack.c.bf16 %v2627, %v2626
        %v2647 = vpack.c.bf16 %v2629, %v2628
        %v2648 = vpack.c.bf16 %v2631, %v2630
        %v2649 = vpack.c.bf16 %v2633, %v2632
        %s2650 = scalar_lea.vmem %s4, 384
        %v2651 = vld [vmem:[%s2650] sm:$0xff]
        %v2652 = vld [vmem:[%s2650 + $0x8] sm:$0xf]
        %v2653 = vld [vmem:[%s2650 + $0xc] sm:$0xff]
        %v2654 = vld [vmem:[%s2650 + $0x14] sm:$0xf]
        %v2655 = vld [vmem:[%s2650 + $0x18] sm:$0xff]
        %v2656 = vld [vmem:[%s2650 + $0x20] sm:$0xf]
        %v2657 = vld [vmem:[%s2650 + $0x24] sm:$0xff]
        %v2658 = vld [vmem:[%s2650 + $0x2c] sm:$0xf]
        %v2659 = vld [vmem:[%s2650 + $0x30] sm:$0xff]
        %v2660 = vld [vmem:[%s2650 + $0x38] sm:$0xf]
        %v2661 = vld [vmem:[%s2650 + $0x3c] sm:$0xff]
        %v2662 = vld [vmem:[%s2650 + $0x44] sm:$0xf]
        %v2663 = vld [vmem:[%s2650 + $0x48] sm:$0xff]
        %v2664 = vld [vmem:[%s2650 + $0x50] sm:$0xf]
        %v2665 = vld [vmem:[%s2650 + $0x54] sm:$0xff]
        %v2666 = vld [vmem:[%s2650 + $0x5c] sm:$0xf]
        %v2667 = vld [vmem:[%s2650 + $0x60] sm:$0xff]
        %v2668 = vld [vmem:[%s2650 + $0x68] sm:$0xf]
        %v2669 = vld [vmem:[%s2650 + $0x6c] sm:$0xff]
        %v2670 = vld [vmem:[%s2650 + $0x74] sm:$0xf]
        %v2671 = vld [vmem:[%s2650 + $0x78] sm:$0xff]
        %v2672 = vld [vmem:[%s2650 + $0x80] sm:$0xf]
        %v2673 = vld [vmem:[%s2650 + $0x84] sm:$0xff]
        %v2674 = vld [vmem:[%s2650 + $0x8c] sm:$0xf]
        %v2675 = vld [vmem:[%s2650 + $0x90] sm:$0xff]
        %v2676 = vld [vmem:[%s2650 + $0x98] sm:$0xf]
        %v2677 = vld [vmem:[%s2650 + $0x9c] sm:$0xff]
        %v2678 = vld [vmem:[%s2650 + $0xa4] sm:$0xf]
        %v2679 = vld [vmem:[%s2650 + $0xa8] sm:$0xff]
        %v2680 = vld [vmem:[%s2650 + $0xb0] sm:$0xf]
        %v2681 = vld [vmem:[%s2650 + $0xb4] sm:$0xff]
        %v2682 = vld [vmem:[%s2650 + $0xbc] sm:$0xf]
        %s2683 = scalar_lea.vmem [#allocation7], 6
        %v2684 = vld [vmem:[%s2683] sm:$0x7]
        %v2686 = vperm.slane %v2684, 0
        %v2687 = vperm.slane %v2684, 1
        %v2688 = vperm.slane %v2684, 2
        %v2724 = vunpack.c.l.b16 %v2651
        %v2725 = vunpack.c.h.b16 %v2651
        %v2726 = vunpack.c.l.b16 %v2652
        %v2727 = vunpack.c.l.b16 %v2653
        %v2728 = vunpack.c.h.b16 %v2653
        %v2729 = vunpack.c.l.b16 %v2654
        %v2730 = vunpack.c.l.b16 %v2655
        %v2731 = vunpack.c.h.b16 %v2655
        %v2732 = vunpack.c.l.b16 %v2656
        %v2733 = vunpack.c.l.b16 %v2657
        %v2734 = vunpack.c.h.b16 %v2657
        %v2735 = vunpack.c.l.b16 %v2658
        %v2736 = vunpack.c.l.b16 %v2659
        %v2737 = vunpack.c.h.b16 %v2659
        %v2738 = vunpack.c.l.b16 %v2660
        %v2739 = vunpack.c.l.b16 %v2661
        %v2740 = vunpack.c.h.b16 %v2661
        %v2741 = vunpack.c.l.b16 %v2662
        %v2742 = vunpack.c.l.b16 %v2663
        %v2743 = vunpack.c.h.b16 %v2663
        %v2744 = vunpack.c.l.b16 %v2664
        %v2745 = vunpack.c.l.b16 %v2665
        %v2746 = vunpack.c.h.b16 %v2665
        %v2747 = vunpack.c.l.b16 %v2666
        %v2748 = vunpack.c.l.b16 %v2667
        %v2749 = vunpack.c.h.b16 %v2667
        %v2750 = vunpack.c.l.b16 %v2668
        %v2751 = vunpack.c.l.b16 %v2669
        %v2752 = vunpack.c.h.b16 %v2669
        %v2753 = vunpack.c.l.b16 %v2670
        %v2754 = vunpack.c.l.b16 %v2671
        %v2755 = vunpack.c.h.b16 %v2671
        %v2756 = vunpack.c.l.b16 %v2672
        %v2757 = vunpack.c.l.b16 %v2673
        %v2758 = vunpack.c.h.b16 %v2673
        %v2759 = vunpack.c.l.b16 %v2674
        %v2760 = vunpack.c.l.b16 %v2675
        %v2761 = vunpack.c.h.b16 %v2675
        %v2762 = vunpack.c.l.b16 %v2676
        %v2763 = vunpack.c.l.b16 %v2677
        %v2764 = vunpack.c.h.b16 %v2677
        %v2765 = vunpack.c.l.b16 %v2678
        %v2766 = vunpack.c.l.b16 %v2679
        %v2767 = vunpack.c.h.b16 %v2679
        %v2768 = vunpack.c.l.b16 %v2680
        %v2769 = vunpack.c.l.b16 %v2681
        %v2770 = vunpack.c.h.b16 %v2681
        %v2771 = vunpack.c.l.b16 %v2682
        %v2772 = vpack.c.b16 %v2727, %v2724
        %v2773 = vpack.c.b16 %v2728, %v2725
        %v2774 = vpack.c.b16 %v2729, %v2726
        %v2775 = vpack.c.b16 %v2733, %v2730
        %v2776 = vpack.c.b16 %v2734, %v2731
        %v2777 = vpack.c.b16 %v2735, %v2732
        %v2778 = vpack.c.b16 %v2739, %v2736
        %v2779 = vpack.c.b16 %v2740, %v2737
        %v2780 = vpack.c.b16 %v2741, %v2738
        %v2781 = vpack.c.b16 %v2745, %v2742
        %v2782 = vpack.c.b16 %v2746, %v2743
        %v2783 = vpack.c.b16 %v2747, %v2744
        %v2784 = vpack.c.b16 %v2751, %v2748
        %v2785 = vpack.c.b16 %v2752, %v2749
        %v2786 = vpack.c.b16 %v2753, %v2750
        %v2787 = vpack.c.b16 %v2757, %v2754
        %v2788 = vpack.c.b16 %v2758, %v2755
        %v2789 = vpack.c.b16 %v2759, %v2756
        %v2790 = vpack.c.b16 %v2763, %v2760
        %v2791 = vpack.c.b16 %v2764, %v2761
        %v2792 = vpack.c.b16 %v2765, %v2762
        %v2793 = vpack.c.b16 %v2769, %v2766
        %v2794 = vpack.c.b16 %v2770, %v2767
        %v2795 = vpack.c.b16 %v2771, %v2768
        %2820 = vmatpush.bf16.msra.mxu0 %v2793
        %2821 = vmatpush.bf16.msra.mxu0 %v2790
        %2822 = vmatpush.bf16.msra.mxu0 %v2787
        %2823 = vmatpush.bf16.msra.mxu0 %v2784
        %2824 = vmatpush.bf16.msra.mxu0 %v2781
        %2825 = vmatpush.bf16.msra.mxu0 %v2778
        %2826 = vmatpush.bf16.msra.mxu0 %v2775
        %2827 = vmatpush.bf16.msra.mxu0 %v2772
        %2828 = vmatmul.bf16.gmra.mxu0 %v2634
        %v2829 = vpop.f32.mrf.mxu0
        %v2830 = vadd.f32 %v2686, %v2829
        %v2831 = vpop.f32.mrf.mxu0
        %v2832 = vadd.f32 %v2686, %v2831
        %2833 = vmatmul.bf16.gmra.mxu0 %v2635
        %v2834 = vpop.f32.mrf.mxu0
        %v2835 = vadd.f32 %v2686, %v2834
        %v2836 = vpop.f32.mrf.mxu0
        %v2837 = vadd.f32 %v2686, %v2836
        %2838 = vmatmul.bf16.gmra.mxu0 %v2636
        %v2839 = vpop.f32.mrf.mxu0
        %v2840 = vadd.f32 %v2686, %v2839
        %v2841 = vpop.f32.mrf.mxu0
        %v2842 = vadd.f32 %v2686, %v2841
        %2843 = vmatmul.bf16.gmra.mxu0 %v2637
        %v2844 = vpop.f32.mrf.mxu0
        %v2845 = vadd.f32 %v2686, %v2844
        %v2846 = vpop.f32.mrf.mxu0
        %v2847 = vadd.f32 %v2686, %v2846
        %2848 = vmatmul.bf16.gmra.mxu0 %v2638
        %v2849 = vpop.f32.mrf.mxu0
        %v2850 = vadd.f32 %v2686, %v2849
        %v2851 = vpop.f32.mrf.mxu0
        %v2852 = vadd.f32 %v2686, %v2851
        %2853 = vmatmul.bf16.gmra.mxu0 %v2639
        %v2854 = vpop.f32.mrf.mxu0
        %v2855 = vadd.f32 %v2686, %v2854
        %v2856 = vpop.f32.mrf.mxu0
        %v2857 = vadd.f32 %v2686, %v2856
        %2858 = vmatmul.bf16.gmra.mxu0 %v2640
        %v2859 = vpop.f32.mrf.mxu0
        %v2860 = vadd.f32 %v2686, %v2859
        %v2861 = vpop.f32.mrf.mxu0
        %v2862 = vadd.f32 %v2686, %v2861
        %2863 = vmatmul.bf16.gmra.mxu0 %v2641
        %v2864 = vpop.f32.mrf.mxu0
        %v2865 = vadd.f32 %v2686, %v2864
        %v2866 = vpop.f32.mrf.mxu0
        %v2867 = vadd.f32 %v2686, %v2866
        %2868 = vmatmul.bf16.gmra.mxu0 %v2642
        %v2869 = vpop.f32.mrf.mxu0
        %v2870 = vadd.f32 %v2686, %v2869
        %v2871 = vpop.f32.mrf.mxu0
        %v2872 = vadd.f32 %v2686, %v2871
        %2873 = vmatmul.bf16.gmra.mxu0 %v2643
        %v2874 = vpop.f32.mrf.mxu0
        %v2875 = vadd.f32 %v2686, %v2874
        %v2876 = vpop.f32.mrf.mxu0
        %v2877 = vadd.f32 %v2686, %v2876
        %2878 = vmatmul.bf16.gmra.mxu0 %v2644
        %v2879 = vpop.f32.mrf.mxu0
        %v2880 = vadd.f32 %v2686, %v2879
        %v2881 = vpop.f32.mrf.mxu0
        %v2882 = vadd.f32 %v2686, %v2881
        %2883 = vmatmul.bf16.gmra.mxu0 %v2645
        %v2884 = vpop.f32.mrf.mxu0
        %v2885 = vadd.f32 %v2686, %v2884
        %v2886 = vpop.f32.mrf.mxu0
        %v2887 = vadd.f32 %v2686, %v2886
        %2888 = vmatmul.bf16.gmra.mxu0 %v2646
        %v2889 = vpop.f32.mrf.mxu0
        %v2890 = vadd.f32 %v2686, %v2889
        %v2891 = vpop.f32.mrf.mxu0
        %v2892 = vadd.f32 %v2686, %v2891
        %2893 = vmatmul.bf16.gmra.mxu0 %v2647
        %v2894 = vpop.f32.mrf.mxu0
        %v2895 = vadd.f32 %v2686, %v2894
        %v2896 = vpop.f32.mrf.mxu0
        %v2897 = vadd.f32 %v2686, %v2896
        %2898 = vmatmul.bf16.gmra.mxu0 %v2648
        %v2899 = vpop.f32.mrf.mxu0
        %v2900 = vadd.f32 %v2686, %v2899
        %v2901 = vpop.f32.mrf.mxu0
        %v2902 = vadd.f32 %v2686, %v2901
        %2903 = vmatmul.bf16.gmra.mxu0 %v2649
        %v2904 = vpop.f32.mrf.mxu0
        %v2905 = vadd.f32 %v2686, %v2904
        %v2906 = vpop.f32.mrf.mxu0
        %v2907 = vadd.f32 %v2686, %v2906
        %2908 = vdwg.mxu0
        %2909 = vmatpush.bf16.msra.mxu0 %v2794
        %2910 = vmatpush.bf16.msra.mxu0 %v2791
        %2911 = vmatpush.bf16.msra.mxu0 %v2788
        %2912 = vmatpush.bf16.msra.mxu0 %v2785
        %2913 = vmatpush.bf16.msra.mxu0 %v2782
        %2914 = vmatpush.bf16.msra.mxu0 %v2779
        %2915 = vmatpush.bf16.msra.mxu0 %v2776
        %2916 = vmatpush.bf16.msra.mxu0 %v2773
        %2917 = vmatmul.bf16.gmra.mxu0 %v2634
        %v2918 = vpop.f32.mrf.mxu0
        %v2919 = vadd.f32 %v2687, %v2918
        %v2920 = vpop.f32.mrf.mxu0
        %v2921 = vadd.f32 %v2687, %v2920
        %2922 = vmatmul.bf16.gmra.mxu0 %v2635
        %v2923 = vpop.f32.mrf.mxu0
        %v2924 = vadd.f32 %v2687, %v2923
        %v2925 = vpop.f32.mrf.mxu0
        %v2926 = vadd.f32 %v2687, %v2925
        %2927 = vmatmul.bf16.gmra.mxu0 %v2636
        %v2928 = vpop.f32.mrf.mxu0
        %v2929 = vadd.f32 %v2687, %v2928
        %v2930 = vpop.f32.mrf.mxu0
        %v2931 = vadd.f32 %v2687, %v2930
        %2932 = vmatmul.bf16.gmra.mxu0 %v2637
        %v2933 = vpop.f32.mrf.mxu0
        %v2934 = vadd.f32 %v2687, %v2933
        %v2935 = vpop.f32.mrf.mxu0
        %v2936 = vadd.f32 %v2687, %v2935
        %2937 = vmatmul.bf16.gmra.mxu0 %v2638
        %v2938 = vpop.f32.mrf.mxu0
        %v2939 = vadd.f32 %v2687, %v2938
        %v2940 = vpop.f32.mrf.mxu0
        %v2941 = vadd.f32 %v2687, %v2940
        %2942 = vmatmul.bf16.gmra.mxu0 %v2639
        %v2943 = vpop.f32.mrf.mxu0
        %v2944 = vadd.f32 %v2687, %v2943
        %v2945 = vpop.f32.mrf.mxu0
        %v2946 = vadd.f32 %v2687, %v2945
        %2947 = vmatmul.bf16.gmra.mxu0 %v2640
        %v2948 = vpop.f32.mrf.mxu0
        %v2949 = vadd.f32 %v2687, %v2948
        %v2950 = vpop.f32.mrf.mxu0
        %v2951 = vadd.f32 %v2687, %v2950
        %2952 = vmatmul.bf16.gmra.mxu0 %v2641
        %v2953 = vpop.f32.mrf.mxu0
        %v2954 = vadd.f32 %v2687, %v2953
        %v2955 = vpop.f32.mrf.mxu0
        %v2956 = vadd.f32 %v2687, %v2955
        %2957 = vmatmul.bf16.gmra.mxu0 %v2642
        %v2958 = vpop.f32.mrf.mxu0
        %v2959 = vadd.f32 %v2687, %v2958
        %v2960 = vpop.f32.mrf.mxu0
        %v2961 = vadd.f32 %v2687, %v2960
        %2962 = vmatmul.bf16.gmra.mxu0 %v2643
        %v2963 = vpop.f32.mrf.mxu0
        %v2964 = vadd.f32 %v2687, %v2963
        %v2965 = vpop.f32.mrf.mxu0
        %v2966 = vadd.f32 %v2687, %v2965
        %2967 = vmatmul.bf16.gmra.mxu0 %v2644
        %v2968 = vpop.f32.mrf.mxu0
        %v2969 = vadd.f32 %v2687, %v2968
        %v2970 = vpop.f32.mrf.mxu0
        %v2971 = vadd.f32 %v2687, %v2970
        %2972 = vmatmul.bf16.gmra.mxu0 %v2645
        %v2973 = vpop.f32.mrf.mxu0
        %v2974 = vadd.f32 %v2687, %v2973
        %v2975 = vpop.f32.mrf.mxu0
        %v2976 = vadd.f32 %v2687, %v2975
        %2977 = vmatmul.bf16.gmra.mxu0 %v2646
        %v2978 = vpop.f32.mrf.mxu0
        %v2979 = vadd.f32 %v2687, %v2978
        %v2980 = vpop.f32.mrf.mxu0
        %v2981 = vadd.f32 %v2687, %v2980
        %2982 = vmatmul.bf16.gmra.mxu0 %v2647
        %v2983 = vpop.f32.mrf.mxu0
        %v2984 = vadd.f32 %v2687, %v2983
        %v2985 = vpop.f32.mrf.mxu0
        %v2986 = vadd.f32 %v2687, %v2985
        %2987 = vmatmul.bf16.gmra.mxu0 %v2648
        %v2988 = vpop.f32.mrf.mxu0
        %v2989 = vadd.f32 %v2687, %v2988
        %v2990 = vpop.f32.mrf.mxu0
        %v2991 = vadd.f32 %v2687, %v2990
        %2992 = vmatmul.bf16.gmra.mxu0 %v2649
        %v2993 = vpop.f32.mrf.mxu0
        %v2994 = vadd.f32 %v2687, %v2993
        %v2995 = vpop.f32.mrf.mxu0
        %v2996 = vadd.f32 %v2687, %v2995
        %2997 = vdwg.mxu0
        %2998 = vmatpush.bf16.msra.mxu0 %v2795
        %2999 = vmatpush.bf16.msra.mxu0 %v2792
        %3000 = vmatpush.bf16.msra.mxu0 %v2789
        %3001 = vmatpush.bf16.msra.mxu0 %v2786
        %3002 = vmatpush.bf16.msra.mxu0 %v2783
        %3003 = vmatpush.bf16.msra.mxu0 %v2780
        %3004 = vmatpush.bf16.msra.mxu0 %v2777
        %3005 = vmatpush.bf16.msra.mxu0 %v2774
        %3006 = vmatmul.bf16.gmra.mxu0 %v2634
        %v3007 = vpop.f32.mrf.mxu0
        %v3008 = vadd.f32 %v2688, %v3007
        %v3009 = vpop.f32.mrf.mxu0
        %v3010 = vadd.f32 %v2688, %v3009
        %3011 = vmatmul.bf16.gmra.mxu0 %v2635
        %v3012 = vpop.f32.mrf.mxu0
        %v3013 = vadd.f32 %v2688, %v3012
        %v3014 = vpop.f32.mrf.mxu0
        %v3015 = vadd.f32 %v2688, %v3014
        %3016 = vmatmul.bf16.gmra.mxu0 %v2636
        %v3017 = vpop.f32.mrf.mxu0
        %v3018 = vadd.f32 %v2688, %v3017
        %v3019 = vpop.f32.mrf.mxu0
        %v3020 = vadd.f32 %v2688, %v3019
        %3021 = vmatmul.bf16.gmra.mxu0 %v2637
        %v3022 = vpop.f32.mrf.mxu0
        %v3023 = vadd.f32 %v2688, %v3022
        %v3024 = vpop.f32.mrf.mxu0
        %v3025 = vadd.f32 %v2688, %v3024
        %3026 = vmatmul.bf16.gmra.mxu0 %v2638
        %v3027 = vpop.f32.mrf.mxu0
        %v3028 = vadd.f32 %v2688, %v3027
        %v3029 = vpop.f32.mrf.mxu0
        %v3030 = vadd.f32 %v2688, %v3029
        %3031 = vmatmul.bf16.gmra.mxu0 %v2639
        %v3032 = vpop.f32.mrf.mxu0
        %v3033 = vadd.f32 %v2688, %v3032
        %v3034 = vpop.f32.mrf.mxu0
        %v3035 = vadd.f32 %v2688, %v3034
        %3036 = vmatmul.bf16.gmra.mxu0 %v2640
        %v3037 = vpop.f32.mrf.mxu0
        %v3038 = vadd.f32 %v2688, %v3037
        %v3039 = vpop.f32.mrf.mxu0
        %v3040 = vadd.f32 %v2688, %v3039
        %3041 = vmatmul.bf16.gmra.mxu0 %v2641
        %v3042 = vpop.f32.mrf.mxu0
        %v3043 = vadd.f32 %v2688, %v3042
        %v3044 = vpop.f32.mrf.mxu0
        %v3045 = vadd.f32 %v2688, %v3044
        %3046 = vmatmul.bf16.gmra.mxu0 %v2642
        %v3047 = vpop.f32.mrf.mxu0
        %v3048 = vadd.f32 %v2688, %v3047
        %v3049 = vpop.f32.mrf.mxu0
        %v3050 = vadd.f32 %v2688, %v3049
        %3051 = vmatmul.bf16.gmra.mxu0 %v2643
        %v3052 = vpop.f32.mrf.mxu0
        %v3053 = vadd.f32 %v2688, %v3052
        %v3054 = vpop.f32.mrf.mxu0
        %v3055 = vadd.f32 %v2688, %v3054
        %3056 = vmatmul.bf16.gmra.mxu0 %v2644
        %v3057 = vpop.f32.mrf.mxu0
        %v3058 = vadd.f32 %v2688, %v3057
        %v3059 = vpop.f32.mrf.mxu0
        %v3060 = vadd.f32 %v2688, %v3059
        %3061 = vmatmul.bf16.gmra.mxu0 %v2645
        %v3062 = vpop.f32.mrf.mxu0
        %v3063 = vadd.f32 %v2688, %v3062
        %v3064 = vpop.f32.mrf.mxu0
        %v3065 = vadd.f32 %v2688, %v3064
        %3066 = vmatmul.bf16.gmra.mxu0 %v2646
        %v3067 = vpop.f32.mrf.mxu0
        %v3068 = vadd.f32 %v2688, %v3067
        %v3069 = vpop.f32.mrf.mxu0
        %v3070 = vadd.f32 %v2688, %v3069
        %3071 = vmatmul.bf16.gmra.mxu0 %v2647
        %v3072 = vpop.f32.mrf.mxu0
        %v3073 = vadd.f32 %v2688, %v3072
        %v3074 = vpop.f32.mrf.mxu0
        %v3075 = vadd.f32 %v2688, %v3074
        %3076 = vmatmul.bf16.gmra.mxu0 %v2648
        %v3077 = vpop.f32.mrf.mxu0
        %v3078 = vadd.f32 %v2688, %v3077
        %v3079 = vpop.f32.mrf.mxu0
        %v3080 = vadd.f32 %v2688, %v3079
        %3081 = vmatmul.bf16.gmra.mxu0 %v2649
        %v3082 = vpop.f32.mrf.mxu0
        %v3083 = vadd.f32 %v2688, %v3082
        %v3084 = vpop.f32.mrf.mxu0
        %v3085 = vadd.f32 %v2688, %v3084
        %3086 = vdwg.mxu0
        %v3087 = vpack.c.bf16 %v2832, %v2830
        %v3088 = vpack.c.bf16 %v2837, %v2835
        %v3089 = vpack.c.bf16 %v2842, %v2840
        %v3090 = vpack.c.bf16 %v2847, %v2845
        %v3091 = vpack.c.bf16 %v2852, %v2850
        %v3092 = vpack.c.bf16 %v2857, %v2855
        %v3093 = vpack.c.bf16 %v2862, %v2860
        %v3094 = vpack.c.bf16 %v2867, %v2865
        %v3095 = vpack.c.bf16 %v2872, %v2870
        %v3096 = vpack.c.bf16 %v2877, %v2875
        %v3097 = vpack.c.bf16 %v2882, %v2880
        %v3098 = vpack.c.bf16 %v2887, %v2885
        %v3099 = vpack.c.bf16 %v2892, %v2890
        %v3100 = vpack.c.bf16 %v2897, %v2895
        %v3101 = vpack.c.bf16 %v2902, %v2900
        %v3102 = vpack.c.bf16 %v2907, %v2905
        %3103 = vmatpush.bf16.msra.mxu0 %v3094
        %3104 = vmatpush.bf16.msra.mxu0 %v3093
        %3105 = vmatpush.bf16.msra.mxu0 %v3092
        %3106 = vmatpush.bf16.msra.mxu0 %v3091
        %3107 = vmatpush.bf16.msra.mxu0 %v3090
        %3108 = vmatpush.bf16.msra.mxu0 %v3089
        %3109 = vmatpush.bf16.msra.mxu0 %v3088
        %3110 = vmatpush.bf16.msra.mxu0 %v3087
        %3111 = vmatmul.bf16.gmra.mxu0 %v1489
        %v3112 = vpop.f32.mrf.mxu0
        %v3113 = vadd.f32 0.0, %v3112
        %v3114 = vpop.f32.mrf.mxu0
        %v3115 = vadd.f32 0.0, %v3114
        %3116 = vmatmul.bf16.gmra.mxu0 %v1491
        %v3117 = vpop.f32.mrf.mxu0
        %v3118 = vadd.f32 0.0, %v3117
        %v3119 = vpop.f32.mrf.mxu0
        %v3120 = vadd.f32 0.0, %v3119
        %3121 = vmatmul.bf16.gmra.mxu0 %v1493
        %v3122 = vpop.f32.mrf.mxu0
        %v3123 = vadd.f32 0.0, %v3122
        %v3124 = vpop.f32.mrf.mxu0
        %v3125 = vadd.f32 0.0, %v3124
        %3126 = vmatmul.bf16.gmra.mxu0 %v1495
        %v3127 = vpop.f32.mrf.mxu0
        %v3128 = vadd.f32 0.0, %v3127
        %v3129 = vpop.f32.mrf.mxu0
        %v3130 = vadd.f32 0.0, %v3129
        %3131 = vmatmul.bf16.gmra.mxu0 %v1497
        %v3132 = vpop.f32.mrf.mxu0
        %v3133 = vadd.f32 0.0, %v3132
        %v3134 = vpop.f32.mrf.mxu0
        %v3135 = vadd.f32 0.0, %v3134
        %3136 = vmatmul.bf16.gmra.mxu0 %v1499
        %v3137 = vpop.f32.mrf.mxu0
        %v3138 = vadd.f32 0.0, %v3137
        %v3139 = vpop.f32.mrf.mxu0
        %v3140 = vadd.f32 0.0, %v3139
        %3141 = vmatmul.bf16.gmra.mxu0 %v1501
        %v3142 = vpop.f32.mrf.mxu0
        %v3143 = vadd.f32 0.0, %v3142
        %v3144 = vpop.f32.mrf.mxu0
        %v3145 = vadd.f32 0.0, %v3144
        %3146 = vmatmul.bf16.gmra.mxu0 %v1503
        %v3147 = vpop.f32.mrf.mxu0
        %v3148 = vadd.f32 0.0, %v3147
        %v3149 = vpop.f32.mrf.mxu0
        %v3150 = vadd.f32 0.0, %v3149
        %3151 = vmatmul.bf16.gmra.mxu0 %v1505
        %v3152 = vpop.f32.mrf.mxu0
        %v3153 = vadd.f32 0.0, %v3152
        %v3154 = vpop.f32.mrf.mxu0
        %v3155 = vadd.f32 0.0, %v3154
        %3156 = vmatmul.bf16.gmra.mxu0 %v1507
        %v3157 = vpop.f32.mrf.mxu0
        %v3158 = vadd.f32 0.0, %v3157
        %v3159 = vpop.f32.mrf.mxu0
        %v3160 = vadd.f32 0.0, %v3159
        %3161 = vmatmul.bf16.gmra.mxu0 %v1509
        %v3162 = vpop.f32.mrf.mxu0
        %v3163 = vadd.f32 0.0, %v3162
        %v3164 = vpop.f32.mrf.mxu0
        %v3165 = vadd.f32 0.0, %v3164
        %3166 = vmatmul.bf16.gmra.mxu0 %v1511
        %v3167 = vpop.f32.mrf.mxu0
        %v3168 = vadd.f32 0.0, %v3167
        %v3169 = vpop.f32.mrf.mxu0
        %v3170 = vadd.f32 0.0, %v3169
        %3171 = vmatmul.bf16.gmra.mxu0 %v1513
        %v3172 = vpop.f32.mrf.mxu0
        %v3173 = vadd.f32 0.0, %v3172
        %v3174 = vpop.f32.mrf.mxu0
        %v3175 = vadd.f32 0.0, %v3174
        %3176 = vmatmul.bf16.gmra.mxu0 %v1515
        %v3177 = vpop.f32.mrf.mxu0
        %v3178 = vadd.f32 0.0, %v3177
        %v3179 = vpop.f32.mrf.mxu0
        %v3180 = vadd.f32 0.0, %v3179
        %3181 = vmatmul.bf16.gmra.mxu0 %v1517
        %v3182 = vpop.f32.mrf.mxu0
        %v3183 = vadd.f32 0.0, %v3182
        %v3184 = vpop.f32.mrf.mxu0
        %v3185 = vadd.f32 0.0, %v3184
        %3186 = vmatmul.bf16.gmra.mxu0 %v1519
        %v3187 = vpop.f32.mrf.mxu0
        %v3188 = vadd.f32 0.0, %v3187
        %v3189 = vpop.f32.mrf.mxu0
        %v3190 = vadd.f32 0.0, %v3189
        %3191 = vdwg.mxu0
        %3192 = vmatpush.bf16.msra.mxu0 %v3102
        %3193 = vmatpush.bf16.msra.mxu0 %v3101
        %3194 = vmatpush.bf16.msra.mxu0 %v3100
        %3195 = vmatpush.bf16.msra.mxu0 %v3099
        %3196 = vmatpush.bf16.msra.mxu0 %v3098
        %3197 = vmatpush.bf16.msra.mxu0 %v3097
        %3198 = vmatpush.bf16.msra.mxu0 %v3096
        %3199 = vmatpush.bf16.msra.mxu0 %v3095
        %3200 = vmatmul.bf16.gmra.mxu0 %v1490
        %v3201 = vpop.f32.mrf.mxu0
        %v3202 = vadd.f32 %v3113, %v3201
        %v3203 = vpop.f32.mrf.mxu0
        %v3204 = vadd.f32 %v3115, %v3203
        %3205 = vmatmul.bf16.gmra.mxu0 %v1492
        %v3206 = vpop.f32.mrf.mxu0
        %v3207 = vadd.f32 %v3118, %v3206
        %v3208 = vpop.f32.mrf.mxu0
        %v3209 = vadd.f32 %v3120, %v3208
        %3210 = vmatmul.bf16.gmra.mxu0 %v1494
        %v3211 = vpop.f32.mrf.mxu0
        %v3212 = vadd.f32 %v3123, %v3211
        %v3213 = vpop.f32.mrf.mxu0
        %v3214 = vadd.f32 %v3125, %v3213
        %3215 = vmatmul.bf16.gmra.mxu0 %v1496
        %v3216 = vpop.f32.mrf.mxu0
        %v3217 = vadd.f32 %v3128, %v3216
        %v3218 = vpop.f32.mrf.mxu0
        %v3219 = vadd.f32 %v3130, %v3218
        %3220 = vmatmul.bf16.gmra.mxu0 %v1498
        %v3221 = vpop.f32.mrf.mxu0
        %v3222 = vadd.f32 %v3133, %v3221
        %v3223 = vpop.f32.mrf.mxu0
        %v3224 = vadd.f32 %v3135, %v3223
        %3225 = vmatmul.bf16.gmra.mxu0 %v1500
        %v3226 = vpop.f32.mrf.mxu0
        %v3227 = vadd.f32 %v3138, %v3226
        %v3228 = vpop.f32.mrf.mxu0
        %v3229 = vadd.f32 %v3140, %v3228
        %3230 = vmatmul.bf16.gmra.mxu0 %v1502
        %v3231 = vpop.f32.mrf.mxu0
        %v3232 = vadd.f32 %v3143, %v3231
        %v3233 = vpop.f32.mrf.mxu0
        %v3234 = vadd.f32 %v3145, %v3233
        %3235 = vmatmul.bf16.gmra.mxu0 %v1504
        %v3236 = vpop.f32.mrf.mxu0
        %v3237 = vadd.f32 %v3148, %v3236
        %v3238 = vpop.f32.mrf.mxu0
        %v3239 = vadd.f32 %v3150, %v3238
        %3240 = vmatmul.bf16.gmra.mxu0 %v1506
        %v3241 = vpop.f32.mrf.mxu0
        %v3242 = vadd.f32 %v3153, %v3241
        %v3243 = vpop.f32.mrf.mxu0
        %v3244 = vadd.f32 %v3155, %v3243
        %3245 = vmatmul.bf16.gmra.mxu0 %v1508
        %v3246 = vpop.f32.mrf.mxu0
        %v3247 = vadd.f32 %v3158, %v3246
        %v3248 = vpop.f32.mrf.mxu0
        %v3249 = vadd.f32 %v3160, %v3248
        %3250 = vmatmul.bf16.gmra.mxu0 %v1510
        %v3251 = vpop.f32.mrf.mxu0
        %v3252 = vadd.f32 %v3163, %v3251
        %v3253 = vpop.f32.mrf.mxu0
        %v3254 = vadd.f32 %v3165, %v3253
        %3255 = vmatmul.bf16.gmra.mxu0 %v1512
        %v3256 = vpop.f32.mrf.mxu0
        %v3257 = vadd.f32 %v3168, %v3256
        %v3258 = vpop.f32.mrf.mxu0
        %v3259 = vadd.f32 %v3170, %v3258
        %3260 = vmatmul.bf16.gmra.mxu0 %v1514
        %v3261 = vpop.f32.mrf.mxu0
        %v3262 = vadd.f32 %v3173, %v3261
        %v3263 = vpop.f32.mrf.mxu0
        %v3264 = vadd.f32 %v3175, %v3263
        %3265 = vmatmul.bf16.gmra.mxu0 %v1516
        %v3266 = vpop.f32.mrf.mxu0
        %v3267 = vadd.f32 %v3178, %v3266
        %v3268 = vpop.f32.mrf.mxu0
        %v3269 = vadd.f32 %v3180, %v3268
        %3270 = vmatmul.bf16.gmra.mxu0 %v1518
        %v3271 = vpop.f32.mrf.mxu0
        %v3272 = vadd.f32 %v3183, %v3271
        %v3273 = vpop.f32.mrf.mxu0
        %v3274 = vadd.f32 %v3185, %v3273
        %3275 = vmatmul.bf16.gmra.mxu0 %v1520
        %v3276 = vpop.f32.mrf.mxu0
        %v3277 = vadd.f32 %v3188, %v3276
        %v3278 = vpop.f32.mrf.mxu0
        %v3279 = vadd.f32 %v3190, %v3278
        %3280 = vdwg.mxu0
        %v3281 = vmul.f32 %v602, %v2919
        %v3282 = vmul.f32 %v605, %v2921
        %v3283 = vmul.f32 %v608, %v2924
        %v3284 = vmul.f32 %v611, %v2926
        %v3285 = vmul.f32 %v614, %v2929
        %v3286 = vmul.f32 %v617, %v2931
        %v3287 = vmul.f32 %v620, %v2934
        %v3288 = vmul.f32 %v623, %v2936
        %v3289 = vmul.f32 %v626, %v2939
        %v3290 = vmul.f32 %v629, %v2941
        %v3291 = vmul.f32 %v632, %v2944
        %v3292 = vmul.f32 %v635, %v2946
        %v3293 = vmul.f32 %v638, %v2949
        %v3294 = vmul.f32 %v641, %v2951
        %v3295 = vmul.f32 %v644, %v2954
        %v3296 = vmul.f32 %v647, %v2956
        %v3297 = vmul.f32 %v650, %v2959
        %v3298 = vmul.f32 %v653, %v2961
        %v3299 = vmul.f32 %v656, %v2964
        %v3300 = vmul.f32 %v659, %v2966
        %v3301 = vmul.f32 %v662, %v2969
        %v3302 = vmul.f32 %v665, %v2971
        %v3303 = vmul.f32 %v668, %v2974
        %v3304 = vmul.f32 %v671, %v2976
        %v3305 = vmul.f32 %v674, %v2979
        %v3306 = vmul.f32 %v677, %v2981
        %v3307 = vmul.f32 %v680, %v2984
        %v3308 = vmul.f32 %v683, %v2986
        %v3309 = vmul.f32 %v686, %v2989
        %v3310 = vmul.f32 %v689, %v2991
        %v3311 = vmul.f32 %v692, %v2994
        %v3312 = vmul.f32 %v695, %v2996
        %v3313 = vsub.f32 %v3202, %v3281
        %v3314 = vsub.f32 %v3204, %v3282
        %v3315 = vsub.f32 %v3207, %v3283
        %v3316 = vsub.f32 %v3209, %v3284
        %v3317 = vsub.f32 %v3212, %v3285
        %v3318 = vsub.f32 %v3214, %v3286
        %v3319 = vsub.f32 %v3217, %v3287
        %v3320 = vsub.f32 %v3219, %v3288
        %v3321 = vsub.f32 %v3222, %v3289
        %v3322 = vsub.f32 %v3224, %v3290
        %v3323 = vsub.f32 %v3227, %v3291
        %v3324 = vsub.f32 %v3229, %v3292
        %v3325 = vsub.f32 %v3232, %v3293
        %v3326 = vsub.f32 %v3234, %v3294
        %v3327 = vsub.f32 %v3237, %v3295
        %v3328 = vsub.f32 %v3239, %v3296
        %v3329 = vsub.f32 %v3242, %v3297
        %v3330 = vsub.f32 %v3244, %v3298
        %v3331 = vsub.f32 %v3247, %v3299
        %v3332 = vsub.f32 %v3249, %v3300
        %v3333 = vsub.f32 %v3252, %v3301
        %v3334 = vsub.f32 %v3254, %v3302
        %v3335 = vsub.f32 %v3257, %v3303
        %v3336 = vsub.f32 %v3259, %v3304
        %v3337 = vsub.f32 %v3262, %v3305
        %v3338 = vsub.f32 %v3264, %v3306
        %v3339 = vsub.f32 %v3267, %v3307
        %v3340 = vsub.f32 %v3269, %v3308
        %v3341 = vsub.f32 %v3272, %v3309
        %v3342 = vsub.f32 %v3274, %v3310
        %v3343 = vsub.f32 %v3277, %v3311
        %v3344 = vsub.f32 %v3279, %v3312
        %v3345 = vadd.f32 %v3313, %v3008
        %v3346 = vadd.f32 %v3314, %v3010
        %v3347 = vadd.f32 %v3315, %v3013
        %v3348 = vadd.f32 %v3316, %v3015
        %v3349 = vadd.f32 %v3317, %v3018
        %v3350 = vadd.f32 %v3318, %v3020
        %v3351 = vadd.f32 %v3319, %v3023
        %v3352 = vadd.f32 %v3320, %v3025
        %v3353 = vadd.f32 %v3321, %v3028
        %v3354 = vadd.f32 %v3322, %v3030
        %v3355 = vadd.f32 %v3323, %v3033
        %v3356 = vadd.f32 %v3324, %v3035
        %v3357 = vadd.f32 %v3325, %v3038
        %v3358 = vadd.f32 %v3326, %v3040
        %v3359 = vadd.f32 %v3327, %v3043
        %v3360 = vadd.f32 %v3328, %v3045
        %v3361 = vadd.f32 %v3329, %v3048
        %v3362 = vadd.f32 %v3330, %v3050
        %v3363 = vadd.f32 %v3331, %v3053
        %v3364 = vadd.f32 %v3332, %v3055
        %v3365 = vadd.f32 %v3333, %v3058
        %v3366 = vadd.f32 %v3334, %v3060
        %v3367 = vadd.f32 %v3335, %v3063
        %v3368 = vadd.f32 %v3336, %v3065
        %v3369 = vadd.f32 %v3337, %v3068
        %v3370 = vadd.f32 %v3338, %v3070
        %v3371 = vadd.f32 %v3339, %v3073
        %v3372 = vadd.f32 %v3340, %v3075
        %v3373 = vadd.f32 %v3341, %v3078
        %v3374 = vadd.f32 %v3342, %v3080
        %v3375 = vadd.f32 %v3343, %v3083
        %v3376 = vadd.f32 %v3344, %v3085
        %v3377 = vmax.f32 %v3345, 0.0
        %v3378 = vmax.f32 %v3346, 0.0
        %v3379 = vmax.f32 %v3347, 0.0
        %v3380 = vmax.f32 %v3348, 0.0
        %v3381 = vmax.f32 %v3349, 0.0
        %v3382 = vmax.f32 %v3350, 0.0
        %v3383 = vmax.f32 %v3351, 0.0
        %v3384 = vmax.f32 %v3352, 0.0
        %v3385 = vmax.f32 %v3353, 0.0
        %v3386 = vmax.f32 %v3354, 0.0
        %v3387 = vmax.f32 %v3355, 0.0
        %v3388 = vmax.f32 %v3356, 0.0
        %v3389 = vmax.f32 %v3357, 0.0
        %v3390 = vmax.f32 %v3358, 0.0
        %v3391 = vmax.f32 %v3359, 0.0
        %v3392 = vmax.f32 %v3360, 0.0
        %v3393 = vmax.f32 %v3361, 0.0
        %v3394 = vmax.f32 %v3362, 0.0
        %v3395 = vmax.f32 %v3363, 0.0
        %v3396 = vmax.f32 %v3364, 0.0
        %v3397 = vmax.f32 %v3365, 0.0
        %v3398 = vmax.f32 %v3366, 0.0
        %v3399 = vmax.f32 %v3367, 0.0
        %v3400 = vmax.f32 %v3368, 0.0
        %v3401 = vmax.f32 %v3369, 0.0
        %v3402 = vmax.f32 %v3370, 0.0
        %v3403 = vmax.f32 %v3371, 0.0
        %v3404 = vmax.f32 %v3372, 0.0
        %v3405 = vmax.f32 %v3373, 0.0
        %v3406 = vmax.f32 %v3374, 0.0
        %v3407 = vmax.f32 %v3375, 0.0
        %v3408 = vmax.f32 %v3376, 0.0
        %v3409 = vadd.f32 %v3377, %v3378
        %v3410 = vrot.slane %v3409, 4
        %v3411 = vadd.f32 %v3409, %v3410
        %v3412 = vrot.slane %v3411, 2
        %v3413 = vadd.f32 %v3411, %v3412
        %v3414 = vrot.slane %v3413, 1
        %v3415 = vadd.f32 %v3413, %v3414
        %v3416 = vadd.f32 %v3379, %v3380
        %v3417 = vrot.slane %v3416, 4
        %v3418 = vadd.f32 %v3416, %v3417
        %v3419 = vrot.slane %v3418, 2
        %v3420 = vadd.f32 %v3418, %v3419
        %v3421 = vrot.slane %v3420, 1
        %v3422 = vadd.f32 %v3420, %v3421
        %v3423 = vadd.f32 %v3381, %v3382
        %v3424 = vrot.slane %v3423, 4
        %v3425 = vadd.f32 %v3423, %v3424
        %v3426 = vrot.slane %v3425, 2
        %v3427 = vadd.f32 %v3425, %v3426
        %v3428 = vrot.slane %v3427, 1
        %v3429 = vadd.f32 %v3427, %v3428
        %v3430 = vadd.f32 %v3383, %v3384
        %v3431 = vrot.slane %v3430, 4
        %v3432 = vadd.f32 %v3430, %v3431
        %v3433 = vrot.slane %v3432, 2
        %v3434 = vadd.f32 %v3432, %v3433
        %v3435 = vrot.slane %v3434, 1
        %v3436 = vadd.f32 %v3434, %v3435
        %v3437 = vadd.f32 %v3385, %v3386
        %v3438 = vrot.slane %v3437, 4
        %v3439 = vadd.f32 %v3437, %v3438
        %v3440 = vrot.slane %v3439, 2
        %v3441 = vadd.f32 %v3439, %v3440
        %v3442 = vrot.slane %v3441, 1
        %v3443 = vadd.f32 %v3441, %v3442
        %v3444 = vadd.f32 %v3387, %v3388
        %v3445 = vrot.slane %v3444, 4
        %v3446 = vadd.f32 %v3444, %v3445
        %v3447 = vrot.slane %v3446, 2
        %v3448 = vadd.f32 %v3446, %v3447
        %v3449 = vrot.slane %v3448, 1
        %v3450 = vadd.f32 %v3448, %v3449
        %v3451 = vadd.f32 %v3389, %v3390
        %v3452 = vrot.slane %v3451, 4
        %v3453 = vadd.f32 %v3451, %v3452
        %v3454 = vrot.slane %v3453, 2
        %v3455 = vadd.f32 %v3453, %v3454
        %v3456 = vrot.slane %v3455, 1
        %v3457 = vadd.f32 %v3455, %v3456
        %v3458 = vadd.f32 %v3391, %v3392
        %v3459 = vrot.slane %v3458, 4
        %v3460 = vadd.f32 %v3458, %v3459
        %v3461 = vrot.slane %v3460, 2
        %v3462 = vadd.f32 %v3460, %v3461
        %v3463 = vrot.slane %v3462, 1
        %v3464 = vadd.f32 %v3462, %v3463
        %v3465 = vadd.f32 %v3393, %v3394
        %v3466 = vrot.slane %v3465, 4
        %v3467 = vadd.f32 %v3465, %v3466
        %v3468 = vrot.slane %v3467, 2
        %v3469 = vadd.f32 %v3467, %v3468
        %v3470 = vrot.slane %v3469, 1
        %v3471 = vadd.f32 %v3469, %v3470
        %v3472 = vadd.f32 %v3395, %v3396
        %v3473 = vrot.slane %v3472, 4
        %v3474 = vadd.f32 %v3472, %v3473
        %v3475 = vrot.slane %v3474, 2
        %v3476 = vadd.f32 %v3474, %v3475
        %v3477 = vrot.slane %v3476, 1
        %v3478 = vadd.f32 %v3476, %v3477
        %v3479 = vadd.f32 %v3397, %v3398
        %v3480 = vrot.slane %v3479, 4
        %v3481 = vadd.f32 %v3479, %v3480
        %v3482 = vrot.slane %v3481, 2
        %v3483 = vadd.f32 %v3481, %v3482
        %v3484 = vrot.slane %v3483, 1
        %v3485 = vadd.f32 %v3483, %v3484
        %v3486 = vadd.f32 %v3399, %v3400
        %v3487 = vrot.slane %v3486, 4
        %v3488 = vadd.f32 %v3486, %v3487
        %v3489 = vrot.slane %v3488, 2
        %v3490 = vadd.f32 %v3488, %v3489
        %v3491 = vrot.slane %v3490, 1
        %v3492 = vadd.f32 %v3490, %v3491
        %v3493 = vadd.f32 %v3401, %v3402
        %v3494 = vrot.slane %v3493, 4
        %v3495 = vadd.f32 %v3493, %v3494
        %v3496 = vrot.slane %v3495, 2
        %v3497 = vadd.f32 %v3495, %v3496
        %v3498 = vrot.slane %v3497, 1
        %v3499 = vadd.f32 %v3497, %v3498
        %v3500 = vadd.f32 %v3403, %v3404
        %v3501 = vrot.slane %v3500, 4
        %v3502 = vadd.f32 %v3500, %v3501
        %v3503 = vrot.slane %v3502, 2
        %v3504 = vadd.f32 %v3502, %v3503
        %v3505 = vrot.slane %v3504, 1
        %v3506 = vadd.f32 %v3504, %v3505
        %v3507 = vadd.f32 %v3405, %v3406
        %v3508 = vrot.slane %v3507, 4
        %v3509 = vadd.f32 %v3507, %v3508
        %v3510 = vrot.slane %v3509, 2
        %v3511 = vadd.f32 %v3509, %v3510
        %v3512 = vrot.slane %v3511, 1
        %v3513 = vadd.f32 %v3511, %v3512
        %v3514 = vadd.f32 %v3407, %v3408
        %v3515 = vrot.slane %v3514, 4
        %v3516 = vadd.f32 %v3514, %v3515
        %v3517 = vrot.slane %v3516, 2
        %v3518 = vadd.f32 %v3516, %v3517
        %v3519 = vrot.slane %v3518, 1
        %v3520 = vadd.f32 %v3518, %v3519
        %v3521 = vmul.f32 %v3415, 0.0625
        %v3522 = vmul.f32 %v3422, 0.0625
        %v3523 = vmul.f32 %v3429, 0.0625
        %v3524 = vmul.f32 %v3436, 0.0625
        %v3525 = vmul.f32 %v3443, 0.0625
        %v3526 = vmul.f32 %v3450, 0.0625
        %v3527 = vmul.f32 %v3457, 0.0625
        %v3528 = vmul.f32 %v3464, 0.0625
        %v3529 = vmul.f32 %v3471, 0.0625
        %v3530 = vmul.f32 %v3478, 0.0625
        %v3531 = vmul.f32 %v3485, 0.0625
        %v3532 = vmul.f32 %v3492, 0.0625
        %v3533 = vmul.f32 %v3499, 0.0625
        %v3534 = vmul.f32 %v3506, 0.0625
        %v3535 = vmul.f32 %v3513, 0.0625
        %v3536 = vmul.f32 %v3520, 0.0625
        %v3537 = vpack.c.bf16 %v3521, %v3521
        %v3538 = vpack.c.bf16 %v3522, %v3522
        %v3539 = vpack.c.bf16 %v3523, %v3523
        %v3540 = vpack.c.bf16 %v3524, %v3524
        %v3541 = vpack.c.bf16 %v3525, %v3525
        %v3542 = vpack.c.bf16 %v3526, %v3526
        %v3543 = vpack.c.bf16 %v3527, %v3527
        %v3544 = vpack.c.bf16 %v3528, %v3528
        %v3545 = vpack.c.bf16 %v3529, %v3529
        %v3546 = vpack.c.bf16 %v3530, %v3530
        %v3547 = vpack.c.bf16 %v3531, %v3531
        %v3548 = vpack.c.bf16 %v3532, %v3532
        %v3549 = vpack.c.bf16 %v3533, %v3533
        %v3550 = vpack.c.bf16 %v3534, %v3534
        %v3551 = vpack.c.bf16 %v3535, %v3535
        %v3552 = vpack.c.bf16 %v3536, %v3536
        %v3553 = vld [vmem:[#allocation8] sm:$0xf]
        %v3554 = vld [vmem:[#allocation8 + $0x4] sm:$0xf]
        %v3555 = vld [vmem:[#allocation8 + $0x8] sm:$0xf]
        %v3556 = vld [vmem:[#allocation8 + $0xc] sm:$0xf]
        %v3557 = vld [vmem:[#allocation8 + $0x10] sm:$0xf]
        %v3558 = vld [vmem:[#allocation8 + $0x14] sm:$0xf]
        %v3559 = vld [vmem:[#allocation8 + $0x18] sm:$0xf]
        %v3560 = vld [vmem:[#allocation8 + $0x1c] sm:$0xf]
        %v3561 = vld [vmem:[#allocation8 + $0x20] sm:$0xf]
        %v3562 = vld [vmem:[#allocation8 + $0x24] sm:$0xf]
        %v3563 = vld [vmem:[#allocation8 + $0x28] sm:$0xf]
        %v3564 = vld [vmem:[#allocation8 + $0x2c] sm:$0xf]
        %v3565 = vld [vmem:[#allocation8 + $0x30] sm:$0xf]
        %v3566 = vld [vmem:[#allocation8 + $0x34] sm:$0xf]
        %v3567 = vld [vmem:[#allocation8 + $0x38] sm:$0xf]
        %v3568 = vld [vmem:[#allocation8 + $0x3c] sm:$0xf]
        %v3569 = vld [vmem:[%s7] sm:$0x1]
        %v3571 = vperm.slane %v3569, 0
        %v3589 = vunpack.c.l.b16 %v3537
        %v3590 = vunpack.c.l.b16 %v3538
        %v3591 = vunpack.c.l.b16 %v3539
        %v3592 = vunpack.c.l.b16 %v3540
        %v3593 = vunpack.c.l.b16 %v3541
        %v3594 = vunpack.c.l.b16 %v3542
        %v3595 = vunpack.c.l.b16 %v3543
        %v3596 = vunpack.c.l.b16 %v3544
        %v3597 = vunpack.c.l.b16 %v3545
        %v3598 = vunpack.c.l.b16 %v3546
        %v3599 = vunpack.c.l.b16 %v3547
        %v3600 = vunpack.c.l.b16 %v3548
        %v3601 = vunpack.c.l.b16 %v3549
        %v3602 = vunpack.c.l.b16 %v3550
        %v3603 = vunpack.c.l.b16 %v3551
        %v3604 = vunpack.c.l.b16 %v3552
        %vm3605 = vcmask 1041409
        %v3606 = vsel %vm3605, %v3590, %v3589
        %vm3607 = vcmask 1042434
        %v3608 = vsel %vm3607, %v3591, %v3606
        %vm3609 = vcmask 1043459
        %v3610 = vsel %vm3609, %v3592, %v3608
        %vm3611 = vcmask 1044484
        %v3612 = vsel %vm3611, %v3593, %v3610
        %vm3613 = vcmask 1045509
        %v3614 = vsel %vm3613, %v3594, %v3612
        %vm3615 = vcmask 1046534
        %v3616 = vsel %vm3615, %v3595, %v3614
        %vm3617 = vcmask 1047559
        %v3618 = vsel %vm3617, %v3596, %v3616
        %v3619 = vsel %vm3605, %v3598, %v3597
        %v3620 = vsel %vm3607, %v3599, %v3619
        %v3621 = vsel %vm3609, %v3600, %v3620
        %v3622 = vsel %vm3611, %v3601, %v3621
        %v3623 = vsel %vm3613, %v3602, %v3622
        %v3624 = vsel %vm3615, %v3603, %v3623
        %v3625 = vsel %vm3617, %v3604, %v3624
        %v3626 = vpack.c.b16 %v3625, %v3618
        %v3644 = vunpack.c.l.b16 %v3553
        %v3645 = vunpack.c.l.b16 %v3554
        %v3646 = vunpack.c.l.b16 %v3555
        %v3647 = vunpack.c.l.b16 %v3556
        %v3648 = vunpack.c.l.b16 %v3557
        %v3649 = vunpack.c.l.b16 %v3558
        %v3650 = vunpack.c.l.b16 %v3559
        %v3651 = vunpack.c.l.b16 %v3560
        %v3652 = vunpack.c.l.b16 %v3561
        %v3653 = vunpack.c.l.b16 %v3562
        %v3654 = vunpack.c.l.b16 %v3563
        %v3655 = vunpack.c.l.b16 %v3564
        %v3656 = vunpack.c.l.b16 %v3565
        %v3657 = vunpack.c.l.b16 %v3566
        %v3658 = vunpack.c.l.b16 %v3567
        %v3659 = vunpack.c.l.b16 %v3568
        %v3660 = vpack.c.b16 %v3645, %v3644
        %v3661 = vpack.c.b16 %v3647, %v3646
        %v3662 = vpack.c.b16 %v3649, %v3648
        %v3663 = vpack.c.b16 %v3651, %v3650
        %v3664 = vpack.c.b16 %v3653, %v3652
        %v3665 = vpack.c.b16 %v3655, %v3654
        %v3666 = vpack.c.b16 %v3657, %v3656
        %v3667 = vpack.c.b16 %v3659, %v3658
        %3676 = vmatpush.bf16.msra.mxu0 %v3667
        %3677 = vmatpush.bf16.msra.mxu0 %v3666
        %3678 = vmatpush.bf16.msra.mxu0 %v3665
        %3679 = vmatpush.bf16.msra.mxu0 %v3664
        %3680 = vmatpush.bf16.msra.mxu0 %v3663
        %3681 = vmatpush.bf16.msra.mxu0 %v3662
        %3682 = vmatpush.bf16.msra.mxu0 %v3661
        %3683 = vmatpush.bf16.msra.mxu0 %v3660
        %3684 = vmatmul.bf16.gmra.mxu0 %v3626
        %v3685 = vpop.f32.mrf.mxu0
        %v3686 = vadd.f32 %v3571, %v3685
        %v3687 = vpop.f32.mrf.mxu0
        %v3688 = vadd.f32 %v3571, %v3687
        %3689 = vdwg.mxu0
        %v3690 = vmax.f32 %v3686, 0.0
        %v3691 = vmax.f32 %v3688, 0.0
        %v3692 = vpack.c.bf16 %v3691, %v3690
        %v3693 = vld [vmem:[#allocation10] sm:$0xf]
        %v3694 = vld [vmem:[#allocation10 + $0x4] sm:$0xf]
        %v3695 = vld [vmem:[#allocation10 + $0x8] sm:$0xf]
        %v3696 = vld [vmem:[#allocation10 + $0xc] sm:$0xf]
        %v3697 = vld [vmem:[#allocation10 + $0x10] sm:$0xf]
        %v3698 = vld [vmem:[#allocation10 + $0x14] sm:$0xf]
        %v3699 = vld [vmem:[#allocation10 + $0x18] sm:$0xf]
        %v3700 = vld [vmem:[#allocation10 + $0x1c] sm:$0xf]
        %v3701 = vld [vmem:[#allocation10 + $0x20] sm:$0xf]
        %v3702 = vld [vmem:[#allocation10 + $0x24] sm:$0xf]
        %v3703 = vld [vmem:[#allocation10 + $0x28] sm:$0xf]
        %v3704 = vld [vmem:[#allocation10 + $0x2c] sm:$0xf]
        %v3705 = vld [vmem:[#allocation10 + $0x30] sm:$0xf]
        %v3706 = vld [vmem:[#allocation10 + $0x34] sm:$0xf]
        %v3707 = vld [vmem:[#allocation10 + $0x38] sm:$0xf]
        %v3708 = vld [vmem:[#allocation10 + $0x3c] sm:$0xf]
        %v3709 = vld [vmem:[%s9] sm:$0x1]
        %v3711 = vperm.slane %v3709, 0
        %v3729 = vunpack.c.l.b16 %v3693
        %v3730 = vunpack.c.l.b16 %v3694
        %v3731 = vunpack.c.l.b16 %v3695
        %v3732 = vunpack.c.l.b16 %v3696
        %v3733 = vunpack.c.l.b16 %v3697
        %v3734 = vunpack.c.l.b16 %v3698
        %v3735 = vunpack.c.l.b16 %v3699
        %v3736 = vunpack.c.l.b16 %v3700
        %v3737 = vunpack.c.l.b16 %v3701
        %v3738 = vunpack.c.l.b16 %v3702
        %v3739 = vunpack.c.l.b16 %v3703
        %v3740 = vunpack.c.l.b16 %v3704
        %v3741 = vunpack.c.l.b16 %v3705
        %v3742 = vunpack.c.l.b16 %v3706
        %v3743 = vunpack.c.l.b16 %v3707
        %v3744 = vunpack.c.l.b16 %v3708
        %v3745 = vpack.c.b16 %v3730, %v3729
        %v3746 = vpack.c.b16 %v3732, %v3731
        %v3747 = vpack.c.b16 %v3734, %v3733
        %v3748 = vpack.c.b16 %v3736, %v3735
        %v3749 = vpack.c.b16 %v3738, %v3737
        %v3750 = vpack.c.b16 %v3740, %v3739
        %v3751 = vpack.c.b16 %v3742, %v3741
        %v3752 = vpack.c.b16 %v3744, %v3743
        %3761 = vmatpush.bf16.msra.mxu0 %v3752
        %3762 = vmatpush.bf16.msra.mxu0 %v3751
        %3763 = vmatpush.bf16.msra.mxu0 %v3750
        %3764 = vmatpush.bf16.msra.mxu0 %v3749
        %3765 = vmatpush.bf16.msra.mxu0 %v3748
        %3766 = vmatpush.bf16.msra.mxu0 %v3747
        %3767 = vmatpush.bf16.msra.mxu0 %v3746
        %3768 = vmatpush.bf16.msra.mxu0 %v3745
        %3769 = vmatmul.bf16.gmra.mxu0 %v3692
        %v3770 = vpop.f32.mrf.mxu0
        %v3771 = vadd.f32 %v3711, %v3770
        %v3772 = vpop.f32.mrf.mxu0
        %v3773 = vadd.f32 %v3711, %v3772
        %3774 = vdwg.mxu0
        %v3775 = vlaneseq
        %v3776 = vand.u32 %v3775, 127
        %vm3777 = vcmp.lt.s32.totalorder %v3776, 3
        %v3778 = vsel %vm3777, %v3771, -1e+30
        %v3779 = vsel %vm3777, %v3773, -1e+30
        %3780 = vmax.xlane.f32.xlu0 %v3778
        %v3781 = vpop.xlane.xlu0 %3780
        %3782 = vmax.xlane.f32.xlu0 %v3779
        %v3783 = vpop.xlane.xlu0 %3782
        %v3784 = vsub.f32 %v3778, %v3781
        %v3785 = vsub.f32 %v3779, %v3783
        %v3786 = vmul.f32 %v3784, 1.442695
        %v3787 = vpow.pop %v3786
        %v3788 = vmul.f32 %v3785, 1.442695
        %v3789 = vpow.pop %v3788
        %v3790 = vsel %vm3777, %v3787, 0.0
        %v3791 = vsel %vm3777, %v3789, 0.0
        %3792 = vadd.xlane.f32.xlu0 %v3790
        %v3793 = vpop.xlane.xlu0 %3792
        %3794 = vadd.xlane.f32.xlu0 %v3791
        %v3795 = vpop.xlane.xlu0 %3794
        %v3796 = vrcp.pop %v3793
        %v3797 = vmul.f32 %v3793, %v3796
        %v3798 = vsub.f32 1.0, %v3797
        %v3799 = vmul.f32 %v3796, %v3798
        %v3800 = vadd.f32 %v3796, %v3799
        %vm3801 = vweird.f32 %v3793
        %vm3802 = vweird.f32 %v3796
        %vm3803 = vmor %vm3801, %vm3802
        %v3804 = vsel %vm3803, %v3796, %v3800
        %v3805 = vand.u32 2147483647, %v3793
        %vm3806 = vcmp.eq.f32.partialorder %v3805, 8.507059e+37
        %v3807 = vand.u32 %v3793, 2147483648
        %v3808 = vor.u32 1.1754944e-38, %v3807
        %v3809 = vsel %vm3806, %v3808, %v3804
        %v3810 = vrcp.pop %v3795
        %v3811 = vmul.f32 %v3795, %v3810
        %v3812 = vsub.f32 1.0, %v3811
        %v3813 = vmul.f32 %v3810, %v3812
        %v3814 = vadd.f32 %v3810, %v3813
        %vm3815 = vweird.f32 %v3795
        %vm3816 = vweird.f32 %v3810
        %vm3817 = vmor %vm3815, %vm3816
        %v3818 = vsel %vm3817, %v3810, %v3814
        %v3819 = vand.u32 2147483647, %v3795
        %vm3820 = vcmp.eq.f32.partialorder %v3819, 8.507059e+37
        %v3821 = vand.u32 %v3795, 2147483648
        %v3822 = vor.u32 1.1754944e-38, %v3821
        %v3823 = vsel %vm3820, %v3822, %v3818
        %v3824 = vmul.f32 %v3790, %v3809
        %v3825 = vmul.f32 %v3791, %v3823
        %3826 = vst [vmem:[%s462] sm:$0xff] %v3824
        %3827 = vst [vmem:[%s462 + $0x8] sm:$0xff] %v3825
        %s3828 = sand.u32 %s257, 1
        %s3829 = scalar_lea.sflag [#allocation4], %s3828
        %s3830 = sand.u32 %s257, 1
        %s3831 = smul.addr %s3830, 16
        %s3832 = scalar_lea.vmem [#allocation11], %s3831
        // Predicated region
        $region81: #{tpu_custom_call.1} parent=59 // pred_check
          %p3833 = pneg %p267
        $region82: #{tpu_custom_call.1} parent=59 // pred_check_branch
          %3835 = sbr.rel (%p3833) target = $region84
        $region83: #{tpu_custom_call.1} parent=59 // pred_region
          %s3836 = smul.u32 2, %s29
          %3838 = vsyncadd %s3829, 0
          %s3839 = smul.addr %s3836, 8
          %s3840 = scalar_lea.hbm %s10, %s3839
          %s3841 = sshll.u32 %s3832, 4
          %s3842 = int_to_ptr.vmem [resolvable:$true] %s3841
          %s3843 = sshll.u32 %s3840, 4
          %s3844 = int_to_ptr.hbm [resolvable:$true] %s3843
          %3849 = dma.vmem_to_hbm [thread:$0]  %s3842, 256, %s3844, %s3829, 128, 128, 8
        $region84: #{tpu_custom_call.1} parent=59 // pred_fallthru
          _
      $region60: #{tpu_custom_call.1} parent=5 // pred_fallthru
        _
      %p3850 = scmp.le.s32.totalorder 2, %s24
      // Predicated region
      $region85: #{tpu_custom_call.1} parent=5 // pred_check
        %p3851 = pneg %p3850
      $region86: #{tpu_custom_call.1} parent=5 // pred_check_branch
        %3853 = sbr.rel (%p3851) target = $region88
      $region87: #{tpu_custom_call.1} parent=5 // pred_region
        %s3854 = ssub.s32 %s24, 2
        // Predicated region
        $region89: #{tpu_custom_call.1} parent=87 // pred_check
          %p3855 = pneg %p273
        $region90: #{tpu_custom_call.1} parent=87 // pred_check_branch
          %3857 = sbr.rel (%p3855) target = $region92
        $region91: #{tpu_custom_call.1} parent=87 // pred_region
          %s3858 = sand.u32 %s258, 1
          %s3859 = scalar_lea.sflag [#allocation4], %s3858
          %s3860 = sand.u32 %s258, 1
          %s3861 = smul.addr %s3860, 16
          %s3862 = scalar_lea.vmem [#allocation11], %s3861
          %3864 = dma.done %s3859, 256
        $region92: #{tpu_custom_call.1} parent=87 // pred_fallthru
          _
      $region88: #{tpu_custom_call.1} parent=5 // pred_fallthru
        _
    $region6: #{tpu_custom_call.1} parent=1 // loop_footer
      %s28 = sadd.s32 1, %s24
    $region7: #{tpu_custom_call.1} parent=1 // loop_footer_branch
      %23 = sbr.rel target = $region3
    $region8: #{tpu_custom_call.1} parent=1 // loop_exit
      _
    %3865 = vsyncpa [#allocation3], 1
    %s3866 = scalar_lea.sflag [#allocation3], 1
    %3867 = vsyncpa %s3866, 1
    %3868 = vsyncpa [#allocation6], 1
    %3869 = vsyncpa [#allocation9], 1
    %3870 = vsyncpa [#allocation4], 1
    %s3871 = scalar_lea.sflag [#allocation4], 1
    %3872 = vsyncpa %s3871, 1

</llo_original>
